<compile_context>
chip_gen: v7x
topology: tpu7x:2x2x1
jax: 0.10.0
libtpu: 0.0.40
codegen_flags: <defaults>
</compile_context>

<pallas_src>
import math

import jax
import jax.numpy as jnp
from jax.experimental import pallas as pl
from jax.experimental.pallas import tpu as pltpu


# ----------------------------------------------------------------------------
# helpers
# ----------------------------------------------------------------------------

def _cdiv(a, b):
    return -(-a // b)


def _round_up(a, b):
    return _cdiv(a, b) * b


def _choose_spatial_tiling(hw, batch, lane_width, itemsize, target_block_bytes):
    """Pick the spatial (sublane) tile T, grid length n_t and padded HW extent.

    T is a multiple of 8 (sublane alignment); the lane axis is always the full
    channel width, so stores stay lane-dense for any H*W.
    """
    row_bytes = max(1, lane_width * itemsize)
    t_budget = (target_block_bytes // row_bytes) // 8 * 8
    t = max(8, min(_round_up(hw, 8), t_budget))
    n_t = _cdiv(hw, t)
    # v7x has 2 TensorCores sharing HBM BW: make sure the parallel grid has >= 2
    # steps (splitting only ever halves the already-in-budget block).
    if batch * n_t < 2 and hw > 8:
        n_t = 2
        t = _round_up(_cdiv(hw, 2), 8)
    return t, n_t, t * n_t


def _sine_consts(num_pos_feats, temperature):
    """Packed lane-major (3, 2P) constants: [y-mult | x-mult | phase] per channel."""
    P = num_pos_feats
    d = jnp.arange(P, dtype=jnp.float32)
    dim_t = jnp.asarray(temperature, jnp.float32) ** (2.0 * jnp.floor(d / 2.0) / P)
    inv = (1.0 / dim_t).astype(jnp.float32)
    zeros = jnp.zeros((P,), jnp.float32)
    # cos(z) == sin(z + pi/2): odd channels carry a pi/2 phase -> single sin.
    ph_half = jnp.where((jnp.arange(P) % 2) == 1,
                        jnp.float32(math.pi / 2), jnp.float32(0.0))
    return jnp.stack([jnp.concatenate([inv, zeros]),        # multiplies y, ch [0, P)
                      jnp.concatenate([zeros, inv]),        # multiplies x, ch [P, 2P)
                      jnp.concatenate([ph_half, ph_half])], axis=0)


# ----------------------------------------------------------------------------
# Kernel 1: PositionEmbeddingSine (channel-last output)
# ----------------------------------------------------------------------------

def _pos_sine_kernel(yx_ref, cst_ref, out_ref):
    """One (batch, spatial-tile) block per grid step.

    yx_ref  : (1, T, 2) f32   per-position (y_embed, x_embed)
    cst_ref : (3, C)    f32   per-channel [y-mult, x-mult, phase]
    out_ref : (1, T, C)       channel-last output block (C on the lane axis)
    """
    yx = yx_ref[0]                       # (T, 2)
    y = yx[:, 0:1]                       # (T, 1)
    x = yx[:, 1:2]                       # (T, 1)
    a = cst_ref[0:1, :]                  # (1, C)
    b = cst_ref[1:2, :]                  # (1, C)
    ph = cst_ref[2:3, :]                 # (1, C)
    # rank-1 broadcasts -> (T, C); single transcendental per element.
    out_ref[0] = jnp.sin(y * a + x * b + ph).astype(out_ref.dtype)


def position_embedding_sine(x, mask=None, *, num_pos_feats=64, temperature=10000,
                            normalize=False, scale=None, out_dtype=jnp.float32,
                            channels_last=True, target_block_bytes=4 << 20):
    """Pallas equivalent of PositionEmbeddingSine.forward.  x: (B, Cin, H, W).

    Returns (B, H, W, 2P) if channels_last (the consumer layout, emitted
    directly by the kernel) or the PyTorch-compatible (B, 2P, H, W) otherwise.
    """
    if scale is not None and normalize is False:
        raise ValueError('normalize should be True if scale is passed')
    if scale is None:
        scale = 2 * math.pi

    B, _, H, W = x.shape
    P = num_pos_feats
    C = 2 * P
    HW = H * W
    eps = 1e-6

    # ---- per-position (y, x) embeds: tiny (B, HW, 2) input -----------------
    if mask is None:
        # mask-free path: closed form of the (h, w) index -> no cumsum pass.
        idx = jnp.arange(HW, dtype=jnp.int32)
        r = idx // W
        c = idx - r * W
        y_embed = (r + 1).astype(jnp.float32)
        x_embed = (c + 1).astype(jnp.float32)
        if normalize:
            y_embed = y_embed / (H + eps) * scale
            x_embed = x_embed / (W + eps) * scale
        yx = jnp.stack([y_embed, x_embed], axis=-1)            # (HW, 2)
        yx = jnp.broadcast_to(yx[None], (B, HW, 2))
    else:
        not_mask = (~mask).astype(jnp.float32)
        y_embed = jnp.cumsum(not_mask, axis=1)
        x_embed = jnp.cumsum(not_mask, axis=2)
        if normalize:
            y_embed = y_embed / (y_embed[:, -1:, :] + eps) * scale
            x_embed = x_embed / (x_embed[:, :, -1:] + eps) * scale
        yx = jnp.stack([y_embed.reshape(B, HW), x_embed.reshape(B, HW)], axis=-1)

    consts = _sine_consts(P, temperature)                      # (3, C)

    itemsize = int(jnp.dtype(out_dtype).itemsize)
    T, n_t, HW_pad = _choose_spatial_tiling(HW, B, C, itemsize, target_block_bytes)
    if HW_pad != HW:
        yx = jnp.pad(yx, ((0, 0), (0, HW_pad - HW), (0, 0)))

    total = B * HW_pad * C
    cost = pl.CostEstimate(
        flops=int(4 * total),
        transcendentals=int(total),
        bytes_accessed=int(itemsize * total + 4 * (B * HW_pad * 2 + 3 * C)),
    )

    out = pl.pallas_call(
        _pos_sine_kernel,
        out_shape=jax.ShapeDtypeStruct((B, HW_pad, C), out_dtype),
        grid_spec=pltpu.PrefetchScalarGridSpec(
            num_scalar_prefetch=0,
            grid=(B, n_t),
            in_specs=[
                pl.BlockSpec((1, T, 2), lambda b, t: (b, t, 0)),
                pl.BlockSpec((3, C), lambda b, t: (0, 0)),
            ],
            out_specs=pl.BlockSpec((1, T, C), lambda b, t: (b, t, 0)),
        ),
        compiler_params=pltpu.CompilerParams(
            dimension_semantics=("parallel", "parallel")),
        cost_estimate=cost,
    )(yx, consts)

    out = out[:, :HW, :].reshape(B, H, W, C)   # contiguous split, metadata-only
    if channels_last:
        return out
    # module-compatible NCHW (explicit transpose; prefer channels_last=True and
    # let the consumer read the lane-dense layout directly).
    return jnp.transpose(out, (0, 3, 1, 2))


# ----------------------------------------------------------------------------
# Kernel 2: fused decoder pos path  (mask2pos -> pos2posemb2d -> adapt_pos2d
#           MLP -> + level_embed), i.e. get_vis_token_pos_embed + level add.
# ----------------------------------------------------------------------------

def _vis_pos_mlp_kernel(yx_ref, cst_ref, w1_ref, b1_ref, w2_ref, b2_ref, out_ref):
    """yx:(T,2)  cst:(3,D)  w1,w2:(D,D)  b1,b2:(1,D)  out:(1,T,D)."""
    yx = yx_ref[...]                      # (T, 2)
    y = yx[:, 0:1]
    x = yx[:, 1:2]
    a = cst_ref[0:1, :]
    b = cst_ref[1:2, :]
    ph = cst_ref[2:3, :]
    emb = jnp.sin(y * a + x * b + ph)     # (T, D) sine embedding, f32 (EUP)
    h = jnp.dot(emb, w1_ref[...], preferred_element_type=jnp.float32) + b1_ref[...]
    h = jnp.maximum(h, 0.0)
    o = jnp.dot(h, w2_ref[...], preferred_element_type=jnp.float32) + b2_ref[...]
    out_ref[0] = o.astype(out_ref.dtype)


def vis_token_pos_embed(shape, batch, w1, b1, w2, b2, level_emb, *,
                        temperature=10000, out_dtype=jnp.float32,
                        target_block_bytes=2 << 20):
    """Fused TransformerDecoderLevel positional path for one feature level.

    Computes adapt_pos2d(pos2posemb2d(mask2pos(zeros(batch, H, W)))) + level_emb
    in a single Pallas kernel, emitting the consumer's channel-last layout
    (batch, H*W, hidden).  Linear weights use (in, out) layout: y = x @ w + b.
    """
    H, W = shape
    D = w1.shape[0]
    assert w1.shape == (D, D) and w2.shape == (D, D)
    P = D // 2
    HW = H * W
    two_pi = 2.0 * math.pi

    # mask2pos(zeros) positions, pre-scaled by pos2posemb2d's 2*pi.
    idx = jnp.arange(HW, dtype=jnp.int32)
    r = idx // W
    c = idx - r * W
    y = (r.astype(jnp.float32) + 0.5) / H * two_pi
    x = (c.astype(jnp.float32) + 0.5) / W * two_pi
    yx = jnp.stack([y, x], axis=-1)                            # (HW, 2)

    consts = _sine_consts(P, temperature)                      # (3, D)

    itemsize = int(jnp.dtype(out_dtype).itemsize)
    T, n_t, HW_pad = _choose_spatial_tiling(HW, batch, D, itemsize, target_block_bytes)
    if HW_pad != HW:
        yx = jnp.pad(yx, ((0, HW_pad - HW), (0, 0)))

    b1r = b1.reshape(1, D).astype(jnp.float32)
    b2r = (b2 + level_emb).reshape(1, D).astype(jnp.float32)   # fold level embed

    total = batch * HW_pad
    cost = pl.CostEstimate(
        flops=int(total * (4 * D * D + 8 * D)),
        transcendentals=int(total * D),
        bytes_accessed=int(itemsize * total * D + 4 * (2 * D * D + HW_pad * 2 + 5 * D)),
    )

    out = pl.pallas_call(
        _vis_pos_mlp_kernel,
        out_shape=jax.ShapeDtypeStruct((batch, HW_pad, D), out_dtype),
        grid_spec=pltpu.PrefetchScalarGridSpec(
            num_scalar_prefetch=0,
            grid=(batch, n_t),
            in_specs=[
                pl.BlockSpec((T, 2), lambda b, t: (t, 0)),     # positions
                pl.BlockSpec((3, D), lambda b, t: (0, 0)),     # sine constants
                pl.BlockSpec((D, D), lambda b, t: (0, 0)),     # w1
                pl.BlockSpec((1, D), lambda b, t: (0, 0)),     # b1
                pl.BlockSpec((D, D), lambda b, t: (0, 0)),     # w2
                pl.BlockSpec((1, D), lambda b, t: (0, 0)),     # b2 + level_emb
            ],
            out_specs=pl.BlockSpec((1, T, D), lambda b, t: (b, t, 0)),
        ),
        compiler_params=pltpu.CompilerParams(
            dimension_semantics=("parallel", "parallel")),
        cost_estimate=cost,
    )(yx, consts, w1.astype(jnp.float32), b1r, w2.astype(jnp.float32), b2r)

    return out[:, :HW, :]                                      # (batch, HW, D)


# ----------------------------------------------------------------------------
# Pure-JAX references (checks only)
# ----------------------------------------------------------------------------

def _reference_position_embedding_sine(x, mask=None, num_pos_feats=64,
                                       temperature=10000, normalize=False, scale=None):
    if scale is None:
        scale = 2 * math.pi
    B, _, H, W = x.shape
    if mask is None:
        mask = jnp.zeros((B, H, W), dtype=bool)
    not_mask = ~mask
    y_embed = jnp.cumsum(not_mask.astype(jnp.float32), axis=1)
    x_embed = jnp.cumsum(not_mask.astype(jnp.float32), axis=2)
    if normalize:
        eps = 1e-6
        y_embed = y_embed / (y_embed[:, -1:, :] + eps) * scale
        x_embed = x_embed / (x_embed[:, :, -1:] + eps) * scale
    dim_t = jnp.arange(num_pos_feats, dtype=jnp.float32)
    dim_t = jnp.asarray(temperature, jnp.float32) ** (2 * jnp.floor(dim_t / 2) / num_pos_feats)
    pos_x = x_embed[:, :, :, None] / dim_t
    pos_y = y_embed[:, :, :, None] / dim_t
    pos_x = jnp.stack((jnp.sin(pos_x[:, :, :, 0::2]), jnp.cos(pos_x[:, :, :, 1::2])),
                      axis=4).reshape(B, H, W, -1)
    pos_y = jnp.stack((jnp.sin(pos_y[:, :, :, 0::2]), jnp.cos(pos_y[:, :, :, 1::2])),
                      axis=4).reshape(B, H, W, -1)
    return jnp.concatenate((pos_y, pos_x), axis=3).transpose(0, 3, 1, 2)


def _pos2posemb2d_ref(pos, num_pos_feats=128, temperature=10000):
    scale = 2 * math.pi
    pos = pos * scale
    dim_t = jnp.arange(num_pos_feats, dtype=jnp.float32)
    dim_t = jnp.asarray(temperature, jnp.float32) ** (2 * jnp.floor(dim_t / 2) / num_pos_feats)
    pos_x = pos[..., 0, None] / dim_t
    pos_y = pos[..., 1, None] / dim_t
    pos_x = jnp.stack((jnp.sin(pos_x[..., 0::2]), jnp.cos(pos_x[..., 1::2])),
                      axis=-1).reshape(pos.shape[:-1] + (-1,))
    pos_y = jnp.stack((jnp.sin(pos_y[..., 0::2]), jnp.cos(pos_y[..., 1::2])),
                      axis=-1).reshape(pos.shape[:-1] + (-1,))
    return jnp.concatenate((pos_y, pos_x), axis=-1)


def _reference_vis_token_pos_embed(batch, H, W, hidden_dim, w1, b1, w2, b2,
                                   level_emb, temperature=10000):
    y1 = jnp.cumsum(jnp.ones((batch, H), jnp.float32), axis=1)
    x1 = jnp.cumsum(jnp.ones((batch, W), jnp.float32), axis=1)
    pos_col = (y1 - 0.5) / y1[:, -1:]             # (batch, H)
    pos_row = (x1 - 0.5) / x1[:, -1:]             # (batch, W)
    pos_2d = jnp.concatenate(
        [jnp.broadcast_to(pos_row[:, None, :, None], (batch, H, W, 1)),
         jnp.broadcast_to(pos_col[:, :, None, None], (batch, H, W, 1))], axis=-1)
    emb = _pos2posemb2d_ref(pos_2d, hidden_dim // 2, temperature)
    h = jnp.maximum(jnp.einsum('bhwc,cd->bhwd', emb, w1,
                               precision=jax.lax.Precision.HIGHEST) + b1, 0.0)
    o = jnp.einsum('bhwc,cd->bhwd', h, w2,
                   precision=jax.lax.Precision.HIGHEST) + b2 + level_emb
    return o.reshape(batch, H * W, hidden_dim)


# ----------------------------------------------------------------------------
# main
# ----------------------------------------------------------------------------

if __name__ == "__main__":
    key = jax.random.PRNGKey(0)
    kx, kw1, kb1, kw2, kb2, klvl = jax.random.split(key, 6)

    B, Cin, H, W = 2, 4, 16, 16
    x = jax.random.normal(kx, (B, Cin, H, W), dtype=jnp.float32)

    # 1) PositionEmbeddingSine, class-default config, module-compatible NCHW.
    out = position_embedding_sine(x, num_pos_feats=64, normalize=False,
                                  channels_last=False)
    out = jax.block_until_ready(out)
    ref = _reference_position_embedding_sine(x, num_pos_feats=64, normalize=False)
    assert out.shape == (B, 128, H, W), out.shape
    assert jnp.allclose(out, ref, atol=2e-5, rtol=1e-5)

    # 2) Decoder pe_layer config (num_pos_feats=hidden//2=128, normalize=True),
    #    channel-last consumer layout straight from the kernel.
    out_cl = position_embedding_sine(x, num_pos_feats=128, normalize=True,
                                     channels_last=True)
    out_cl = jax.block_until_ready(out_cl)
    ref_cl = jnp.transpose(
        _reference_position_embedding_sine(x, num_pos_feats=128, normalize=True),
        (0, 2, 3, 1))
    assert out_cl.shape == (B, H, W, 256), out_cl.shape
    assert jnp.allclose(out_cl, ref_cl, atol=2e-5, rtol=1e-5)

    # 3) bf16 output smoke (halves HBM write traffic in the store-bound regime).
    out_bf = position_embedding_sine(x, num_pos_feats=64, normalize=True,
                                     channels_last=True, out_dtype=jnp.bfloat16)
    out_bf = jax.block_until_ready(out_bf)
    ref_bf = jnp.transpose(
        _reference_position_embedding_sine(x, num_pos_feats=64, normalize=True),
        (0, 2, 3, 1))
    assert jnp.allclose(out_bf.astype(jnp.float32), ref_bf, atol=2e-2, rtol=2e-2)

    # 4) Fused decoder pos path: sine embed + adapt_pos2d MLP + level_embed.
    D = 256  # hidden_dim (module default)
    w1 = jax.random.normal(kw1, (D, D), jnp.float32) * (1.0 / math.sqrt(D))
    b1 = jax.random.normal(kb1, (D,), jnp.float32) * 0.02
    w2 = jax.random.normal(kw2, (D, D), jnp.float32) * (1.0 / math.sqrt(D))
    b2 = jax.random.normal(kb2, (D,), jnp.float32) * 0.02
    lvl = jax.random.normal(klvl, (D,), jnp.float32) * 0.02
    pos = vis_token_pos_embed((H, W), B, w1, b1, w2, b2, lvl)
    pos = jax.block_until_ready(pos)
    pos_ref = _reference_vis_token_pos_embed(B, H, W, D, w1, b1, w2, b2, lvl)
    assert pos.shape == (B, H * W, D), pos.shape
    assert jnp.allclose(pos, pos_ref, atol=5e-3, rtol=5e-3)

    print("KERNEL_OK")
</pallas_src>

<mosaic_0001>
module attributes {stable_mosaic.version = 11 : i64} {
  func.func @_pos_sine_kernel(%arg0: i32, %arg1: i32, %arg2: memref<1x256x2xf32, #tpu.memory_space<vmem>>, %arg3: memref<3x128xf32, #tpu.memory_space<vmem>>, %arg4: memref<1x256x128xf32, #tpu.memory_space<vmem>>) attributes {dimension_semantics = [#tpu.dimension_semantics<parallel>, #tpu.dimension_semantics<parallel>], iteration_bounds = array<i64: 2, 1>, scalar_prefetch = 0 : i64, scratch_operands = 0 : i64, tpu.core_type = #tpu.core_type<tc>, window_params = [{transform_indices = @transform_0, window_bounds = array<i64: 1, 256, 2>}, {pipeline_mode = #tpu.pipeline_mode<synchronous>, transform_indices = @transform_1, window_bounds = array<i64: 3, 128>}, {transform_indices = @transform_2, window_bounds = array<i64: 1, 256, 128>}]} {
    %c0 = arith.constant 0 : index
    %c0_0 = arith.constant 0 : index
    %c0_1 = arith.constant 0 : index
    %0 = vector.load %arg2[%c0, %c0_0, %c0_1] : memref<1x256x2xf32, #tpu.memory_space<vmem>>, vector<1x256x2xf32>
    %1 = vector.shape_cast %0 : vector<1x256x2xf32> to vector<256x2xf32>
    %2 = vector.extract_strided_slice %1 {offsets = [0, 0], sizes = [256, 1], strides = [1, 1]} : vector<256x2xf32> to vector<256x1xf32>
    %3 = vector.extract_strided_slice %1 {offsets = [0, 1], sizes = [256, 1], strides = [1, 1]} : vector<256x2xf32> to vector<256x1xf32>
    %c0_2 = arith.constant 0 : index
    %c0_3 = arith.constant 0 : index
    %4 = vector.load %arg3[%c0_2, %c0_3] : memref<3x128xf32, #tpu.memory_space<vmem>>, vector<1x128xf32>
    %c1 = arith.constant 1 : index
    %c0_4 = arith.constant 0 : index
    %5 = vector.load %arg3[%c1, %c0_4] : memref<3x128xf32, #tpu.memory_space<vmem>>, vector<1x128xf32>
    %c2 = arith.constant 2 : index
    %c0_5 = arith.constant 0 : index
    %6 = vector.load %arg3[%c2, %c0_5] : memref<3x128xf32, #tpu.memory_space<vmem>>, vector<1x128xf32>
    %7 = vector.broadcast %2 : vector<256x1xf32> to vector<256x128xf32>
    %8 = vector.broadcast %4 : vector<1x128xf32> to vector<256x128xf32>
    %9 = arith.mulf %7, %8 : vector<256x128xf32>
    %10 = vector.broadcast %3 : vector<256x1xf32> to vector<256x128xf32>
    %11 = vector.broadcast %5 : vector<1x128xf32> to vector<256x128xf32>
    %12 = arith.mulf %10, %11 : vector<256x128xf32>
    %13 = arith.addf %9, %12 : vector<256x128xf32>
    %14 = vector.broadcast %6 : vector<1x128xf32> to vector<256x128xf32>
    %15 = arith.addf %13, %14 : vector<256x128xf32>
    %16 = math.sin %15 : vector<256x128xf32>
    %c0_6 = arith.constant 0 : index
    %c0_7 = arith.constant 0 : index
    %c0_8 = arith.constant 0 : index
    %17 = vector.load %arg4[%c0_6, %c0_7, %c0_8] : memref<1x256x128xf32, #tpu.memory_space<vmem>>, vector<1x256x128xf32>
    %18 = vector.shape_cast %17 : vector<1x256x128xf32> to vector<256x128xf32>
    %19 = vector.shape_cast %16 : vector<256x128xf32> to vector<1x256x128xf32>
    tpu.vector_store %arg4[%c0_6, %c0_7, %c0_8], %19 {strides = array<i32>} : memref<1x256x128xf32, #tpu.memory_space<vmem>>, vector<1x256x128xf32>,
    return
  }
  func.func @transform_0(%arg0: i32, %arg1: i32) -> (i32, i32, i32) {
    %c0_i32 = arith.constant 0 : i32
    %c0_i32_0 = arith.constant 0 : i32
    return %arg0, %arg1, %c0_i32 : i32, i32, i32
  }
  func.func @transform_1(%arg0: i32, %arg1: i32) -> (i32, i32) {
    %c0_i32 = arith.constant 0 : i32
    %c0_i32_0 = arith.constant 0 : i32
    %c0_i32_1 = arith.constant 0 : i32
    return %c0_i32, %c0_i32_0 : i32, i32
  }
  func.func @transform_2(%arg0: i32, %arg1: i32) -> (i32, i32, i32) {
    %c0_i32 = arith.constant 0 : i32
    %c0_i32_0 = arith.constant 0 : i32
    return %arg0, %arg1, %c0_i32 : i32, i32, i32
  }
}

</mosaic_0001>

<llo_original>
// kernel: tpu_custom_call.1
$region0: #{tpu_custom_call.1}
  #allocation0 [shape = 'u32[]', space=smem, size = 0x4, offset = 0x4, fixed_abs, tag = 'smem constant byte address 0x4 - core index']
  #allocation1 [shape = 'u32[144,128]{1,0:T(1,128)}', space=vmem, size = 0x12000, scoped, tag = 'internal scratch']
  %s0 = inlined_call_operand.vmem [shape: f32[2,256,2], index: 0, kind: input, shape index: {}]
  %s1 = inlined_call_operand.vmem [shape: f32[3,128], index: 1, kind: input, shape index: {}]
  %s2 = inlined_call_operand.hbm [shape: f32[2,256,128], index: 2, kind: output, shape index: {}]
  %s3 = sld [smem:[#allocation0]]
  $region41: #{tpu_custom_call.1} parent=0
    _
  %s5 = ssub.s32 1, %s3
  %s6 = scalar_select 0, %s5, %s3
  $region1: #{tpu_custom_call.1} parent=0
    #allocation2 [shape = 'u8[262144]{0}', space=vmem, size = 0x40000, scoped, tag = 'output window, operand 0']
    #allocation3 [shape = 's32[2]{0}', space=sflag, size = 0x8, scoped, tag = 'scoped memory for tpu_custom_call.1']
    %7 = vsyncpa [#allocation3], 0
    %s8 = scalar_lea.sflag [#allocation3], 1
    %9 = vsyncpa %s8, 0
    loop: start=0, step=1, limit=4
    $region2: #{tpu_custom_call.1} parent=1 // loop_pre_header
      _
    $region3: #{tpu_custom_call.1} parent=1 // loop_header
      %s11 = sphi 0, %s15
      %p12 = scmp.ge.s32.totalorder %s11, 4
      %s18 = sphi 0, %s30
      %s19 = sphi 0, %s26
      %s20 = sphi 0, %s18
      %s21 = sphi 0, %s19
      %s22 = sphi 0, %s20
      %s23 = sphi 0, %s21
      %s35 = sphi 0, %s37
      %s38 = sphi 0, %s35
      %s39 = sphi 0, %s38
      %s55 = sphi 0, %s39
      %s59 = sphi 0, %s59
      %s61 = sphi 0, %s59
      %s62 = sphi 0, %s61
      %s76 = sphi 0, %s62
      %s84 = sphi 0, %s86
      %s87 = sphi 0, %s84
      %s88 = sphi 0, %s87
      %s104 = sphi 0, %s88
    $region4: #{tpu_custom_call.1} parent=1 // loop_header_branch
      %14 = sbr.rel (%p12) target = $region8
    $region5: #{tpu_custom_call.1} parent=1 // loop_body
      %s16 = ssub.s32 %s11, 1
      %s17 = ssub.s32 %s11, 2
      %s24 = sadd.s32 1, %s19
      %p25 = scmp.ge.s32.totalorder %s24, 1
      %s26 = scalar_select %p25, 0, %s24
      %s27 = sadd.s32 1, %s18
      %s28 = scalar_select %p25, %s27, %s18
      %p29 = scmp.ge.s32.totalorder %s28, 2
      %s30 = scalar_select %p29, 0, %s28
      %s31 = ssub.s32 %s18, %s30
      %s32 = ssub.s32 %s19, %s26
      %s33 = sor.u32 %s31, %s32
      %p34 = scmp.eq.s32.totalorder %s33, 0
      %s36 = sadd.s32 %s35, 1
      %s37 = scalar_select %p34, %s35, %s36
      %p40 = pneg %p34
      %p41 = scmp.eq.s32.totalorder %s11, 1
      %p42 = por %p40, %p41
      %p43 = scmp.ne.s32.totalorder %s35, %s38
      %p44 = scmp.eq.s32.totalorder %s11, 0
      %p45 = por %p43, %p44
      %p46 = scmp.ne.s32.totalorder %s35, %s38
      %p47 = scmp.eq.s32.totalorder %s16, 1
      %p48 = por %p46, %p47
      %p49 = scmp.ne.s32.totalorder %s38, %s39
      %p50 = scmp.eq.s32.totalorder %s16, 0
      %p51 = por %p49, %p50
      %p52 = scmp.ne.s32.totalorder %s38, %s39
      %p53 = scmp.eq.s32.totalorder %s17, 1
      %p54 = por %p52, %p53
      %p56 = scmp.ne.s32.totalorder %s39, %s55
      %p57 = scmp.eq.s32.totalorder %s17, 0
      %p58 = por %p56, %p57
      %s60 = sadd.s32 %s59, 1
      %p63 = scmp.eq.s32.totalorder %s11, 1
      %p64 = scmp.ne.s32.totalorder %s59, %s61
      %p65 = scmp.eq.s32.totalorder %s11, 0
      %p66 = por %p64, %p65
      %p67 = scmp.ne.s32.totalorder %s59, %s61
      %p68 = scmp.eq.s32.totalorder %s16, 1
      %p69 = por %p67, %p68
      %p70 = scmp.ne.s32.totalorder %s61, %s62
      %p71 = scmp.eq.s32.totalorder %s16, 0
      %p72 = por %p70, %p71
      %p73 = scmp.ne.s32.totalorder %s61, %s62
      %p74 = scmp.eq.s32.totalorder %s17, 1
      %p75 = por %p73, %p74
      %p77 = scmp.ne.s32.totalorder %s62, %s76
      %p78 = scmp.eq.s32.totalorder %s17, 0
      %p79 = por %p77, %p78
      %s80 = ssub.s32 %s18, %s30
      %s81 = ssub.s32 %s19, %s26
      %s82 = sor.u32 %s80, %s81
      %p83 = scmp.eq.s32.totalorder %s82, 0
      %s85 = sadd.s32 %s84, 1
      %s86 = scalar_select %p83, %s84, %s85
      %p89 = pneg %p83
      %p90 = scmp.eq.s32.totalorder %s11, 1
      %p91 = por %p89, %p90
      %p92 = scmp.ne.s32.totalorder %s84, %s87
      %p93 = scmp.eq.s32.totalorder %s11, 0
      %p94 = por %p92, %p93
      %p95 = scmp.ne.s32.totalorder %s84, %s87
      %p96 = scmp.eq.s32.totalorder %s16, 1
      %p97 = por %p95, %p96
      %p98 = scmp.ne.s32.totalorder %s87, %s88
      %p99 = scmp.eq.s32.totalorder %s16, 0
      %p100 = por %p98, %p99
      %p101 = scmp.ne.s32.totalorder %s87, %s88
      %p102 = scmp.eq.s32.totalorder %s17, 1
      %p103 = por %p101, %p102
      %p105 = scmp.ne.s32.totalorder %s88, %s104
      %p106 = scmp.eq.s32.totalorder %s17, 0
      %p107 = por %p105, %p106
      %p108 = scmp.le.s32.totalorder 1, %s11
      %p109 = scmp.lt.s32.totalorder %s11, 3
      %p110 = pnand %p108, %p109
      %p111 = pneg %p110
      // Predicated region
      $region9: #{tpu_custom_call.1} parent=5 // pred_check
        _
      $region10: #{tpu_custom_call.1} parent=5 // pred_check_branch
        %113 = sbr.rel (%p110) target = $region12
      $region11: #{tpu_custom_call.1} parent=5 // pred_region
        %s114 = ssub.s32 %s11, 1
        // Predicated region
        $region13: #{tpu_custom_call.1} parent=11 // pred_check
          %p115 = pneg %p72
        $region14: #{tpu_custom_call.1} parent=11 // pred_check_branch
          %117 = sbr.rel (%p115) target = $region16
        $region15: #{tpu_custom_call.1} parent=11 // pred_region
          _
        $region16: #{tpu_custom_call.1} parent=11 // pred_fallthru
          _
      $region12: #{tpu_custom_call.1} parent=5 // pred_fallthru
        _
      %p118 = scmp.lt.s32.totalorder %s11, 2
      // Predicated region
      $region17: #{tpu_custom_call.1} parent=5 // pred_check
        %p119 = pneg %p118
      $region18: #{tpu_custom_call.1} parent=5 // pred_check_branch
        %121 = sbr.rel (%p119) target = $region20
      $region19: #{tpu_custom_call.1} parent=5 // pred_region
        // Predicated region
        $region21: #{tpu_custom_call.1} parent=19 // pred_check
          %p122 = pneg %p45
        $region22: #{tpu_custom_call.1} parent=19 // pred_check_branch
          %124 = sbr.rel (%p122) target = $region24
        $region23: #{tpu_custom_call.1} parent=19 // pred_region
          %s125 = smul.u32 32, %s19
          %p126 = scmp.lt.s32.totalorder %s18, 1
          %s127 = scalar_select %p126, %s18, 1
          %p128 = scmp.lt.s32.totalorder %s125, 31
          %s129 = scalar_select %p128, %s125, 31
          %s130 = smul.addr %s127, 32
          %s131 = sadd.s32 %s129, %s130
          %s132 = smul.addr %s131, 8
          %s133 = scalar_lea.vmem %s0, %s132
          %s134 = smul.u32 32, %s19
        $region24: #{tpu_custom_call.1} parent=19 // pred_fallthru
          _
      $region20: #{tpu_custom_call.1} parent=5 // pred_fallthru
        _
      %p135 = scmp.le.s32.totalorder 1, %s11
      %p136 = scmp.lt.s32.totalorder %s11, 3
      %p137 = pnand %p135, %p136
      %p138 = pneg %p137
      // Predicated region
      $region25: #{tpu_custom_call.1} parent=5 // pred_check
        _
      $region26: #{tpu_custom_call.1} parent=5 // pred_check_branch
        %140 = sbr.rel (%p137) target = $region28
      $region27: #{tpu_custom_call.1} parent=5 // pred_region
        %s141 = ssub.s32 %s11, 1
        %s142 = smul.u32 32, %s21
        %p143 = scmp.lt.s32.totalorder %s20, 1
        %s144 = scalar_select %p143, %s20, 1
        %p145 = scmp.lt.s32.totalorder %s142, 31
        %s146 = scalar_select %p145, %s142, 31
        %s147 = smul.addr %s144, 32
        %s148 = sadd.s32 %s146, %s147
        %s149 = smul.addr %s148, 8
        %s150 = scalar_lea.vmem %s0, %s149
        %p151 = pneg %p51
        %p152 = pneg %p48
        %p153 = pneg %p72
        %p154 = pneg %p69
        %p155 = pneg %p100
        %p156 = pneg %p97
        %s157 = sand.u32 %s87, 1
        %s158 = scalar_lea.sflag [#allocation3], %s157
        %s159 = sand.u32 %s87, 1
        %s160 = smul.addr %s159, 256
        %s161 = scalar_lea.vmem [#allocation2], %s160
        %s162 = smul.u32 32, %s21
        %p163 = scmp.lt.s32.totalorder %s20, 1
        %s164 = scalar_select %p163, %s20, 1
        %p165 = scmp.lt.s32.totalorder %s162, 31
        %s166 = scalar_select %p165, %s162, 31
        %s167 = smul.addr %s164, 32
        %s168 = sadd.s32 %s166, %s167
        %s169 = smul.addr %s168, 8
        %s170 = scalar_lea.vmem %s0, %s169
        %s171 = smul.u32 32, %s21
        %s172 = smul.u32 32, %s21
        %v173 = vld [vmem:[%s170] sm:$0xff]
        %v174 = vld [vmem:[%s170 + $0x8] sm:$0xff]
        %v175 = vld [vmem:[%s170 + $0x10] sm:$0xff]
        %v176 = vld [vmem:[%s170 + $0x18] sm:$0xff]
        %v177 = vld [vmem:[%s170 + $0x20] sm:$0xff]
        %v178 = vld [vmem:[%s170 + $0x28] sm:$0xff]
        %v179 = vld [vmem:[%s170 + $0x30] sm:$0xff]
        %v180 = vld [vmem:[%s170 + $0x38] sm:$0xff]
        %v181 = vld [vmem:[%s170 + $0x40] sm:$0xff]
        %v182 = vld [vmem:[%s170 + $0x48] sm:$0xff]
        %v183 = vld [vmem:[%s170 + $0x50] sm:$0xff]
        %v184 = vld [vmem:[%s170 + $0x58] sm:$0xff]
        %v185 = vld [vmem:[%s170 + $0x60] sm:$0xff]
        %v186 = vld [vmem:[%s170 + $0x68] sm:$0xff]
        %v187 = vld [vmem:[%s170 + $0x70] sm:$0xff]
        %v188 = vld [vmem:[%s170 + $0x78] sm:$0xff]
        %v189 = vld [vmem:[%s170 + $0x80] sm:$0xff]
        %v190 = vld [vmem:[%s170 + $0x88] sm:$0xff]
        %v191 = vld [vmem:[%s170 + $0x90] sm:$0xff]
        %v192 = vld [vmem:[%s170 + $0x98] sm:$0xff]
        %v193 = vld [vmem:[%s170 + $0xa0] sm:$0xff]
        %v194 = vld [vmem:[%s170 + $0xa8] sm:$0xff]
        %v195 = vld [vmem:[%s170 + $0xb0] sm:$0xff]
        %v196 = vld [vmem:[%s170 + $0xb8] sm:$0xff]
        %v197 = vld [vmem:[%s170 + $0xc0] sm:$0xff]
        %v198 = vld [vmem:[%s170 + $0xc8] sm:$0xff]
        %v199 = vld [vmem:[%s170 + $0xd0] sm:$0xff]
        %v200 = vld [vmem:[%s170 + $0xd8] sm:$0xff]
        %v201 = vld [vmem:[%s170 + $0xe0] sm:$0xff]
        %v202 = vld [vmem:[%s170 + $0xe8] sm:$0xff]
        %v203 = vld [vmem:[%s170 + $0xf0] sm:$0xff]
        %v204 = vld [vmem:[%s170 + $0xf8] sm:$0xff]
        %v205 = vld [vmem:[%s1] sm:$0x1]
        %v206 = vld [vmem:[%s1 + $0x1] sm:$0x1]
        %v207 = vld [vmem:[%s1 + $0x2] sm:$0x1]
        %209 = vset.pattern.permute.xlu0 0
        %210 = vperm.xlu0 %209, %v173
        %v211 = vpop.permute.xlu0 %210
        %214 = vset.pattern.permute.xlu0 0
        %215 = vperm.xlu0 %214, %v174
        %v216 = vpop.permute.xlu0 %215
        %219 = vset.pattern.permute.xlu0 0
        %220 = vperm.xlu0 %219, %v175
        %v221 = vpop.permute.xlu0 %220
        %224 = vset.pattern.permute.xlu0 0
        %225 = vperm.xlu0 %224, %v176
        %v226 = vpop.permute.xlu0 %225
        %229 = vset.pattern.permute.xlu0 0
        %230 = vperm.xlu0 %229, %v177
        %v231 = vpop.permute.xlu0 %230
        %234 = vset.pattern.permute.xlu0 0
        %235 = vperm.xlu0 %234, %v178
        %v236 = vpop.permute.xlu0 %235
        %239 = vset.pattern.permute.xlu0 0
        %240 = vperm.xlu0 %239, %v179
        %v241 = vpop.permute.xlu0 %240
        %244 = vset.pattern.permute.xlu0 0
        %245 = vperm.xlu0 %244, %v180
        %v246 = vpop.permute.xlu0 %245
        %249 = vset.pattern.permute.xlu0 0
        %250 = vperm.xlu0 %249, %v181
        %v251 = vpop.permute.xlu0 %250
        %254 = vset.pattern.permute.xlu0 0
        %255 = vperm.xlu0 %254, %v182
        %v256 = vpop.permute.xlu0 %255
        %259 = vset.pattern.permute.xlu0 0
        %260 = vperm.xlu0 %259, %v183
        %v261 = vpop.permute.xlu0 %260
        %264 = vset.pattern.permute.xlu0 0
        %265 = vperm.xlu0 %264, %v184
        %v266 = vpop.permute.xlu0 %265
        %269 = vset.pattern.permute.xlu0 0
        %270 = vperm.xlu0 %269, %v185
        %v271 = vpop.permute.xlu0 %270
        %274 = vset.pattern.permute.xlu0 0
        %275 = vperm.xlu0 %274, %v186
        %v276 = vpop.permute.xlu0 %275
        %279 = vset.pattern.permute.xlu0 0
        %280 = vperm.xlu0 %279, %v187
        %v281 = vpop.permute.xlu0 %280
        %284 = vset.pattern.permute.xlu0 0
        %285 = vperm.xlu0 %284, %v188
        %v286 = vpop.permute.xlu0 %285
        %289 = vset.pattern.permute.xlu0 0
        %290 = vperm.xlu0 %289, %v189
        %v291 = vpop.permute.xlu0 %290
        %294 = vset.pattern.permute.xlu0 0
        %295 = vperm.xlu0 %294, %v190
        %v296 = vpop.permute.xlu0 %295
        %299 = vset.pattern.permute.xlu0 0
        %300 = vperm.xlu0 %299, %v191
        %v301 = vpop.permute.xlu0 %300
        %304 = vset.pattern.permute.xlu0 0
        %305 = vperm.xlu0 %304, %v192
        %v306 = vpop.permute.xlu0 %305
        %309 = vset.pattern.permute.xlu0 0
        %310 = vperm.xlu0 %309, %v193
        %v311 = vpop.permute.xlu0 %310
        %314 = vset.pattern.permute.xlu0 0
        %315 = vperm.xlu0 %314, %v194
        %v316 = vpop.permute.xlu0 %315
        %319 = vset.pattern.permute.xlu0 0
        %320 = vperm.xlu0 %319, %v195
        %v321 = vpop.permute.xlu0 %320
        %324 = vset.pattern.permute.xlu0 0
        %325 = vperm.xlu0 %324, %v196
        %v326 = vpop.permute.xlu0 %325
        %329 = vset.pattern.permute.xlu0 0
        %330 = vperm.xlu0 %329, %v197
        %v331 = vpop.permute.xlu0 %330
        %334 = vset.pattern.permute.xlu0 0
        %335 = vperm.xlu0 %334, %v198
        %v336 = vpop.permute.xlu0 %335
        %339 = vset.pattern.permute.xlu0 0
        %340 = vperm.xlu0 %339, %v199
        %v341 = vpop.permute.xlu0 %340
        %344 = vset.pattern.permute.xlu0 0
        %345 = vperm.xlu0 %344, %v200
        %v346 = vpop.permute.xlu0 %345
        %349 = vset.pattern.permute.xlu0 0
        %350 = vperm.xlu0 %349, %v201
        %v351 = vpop.permute.xlu0 %350
        %354 = vset.pattern.permute.xlu0 0
        %355 = vperm.xlu0 %354, %v202
        %v356 = vpop.permute.xlu0 %355
        %359 = vset.pattern.permute.xlu0 0
        %360 = vperm.xlu0 %359, %v203
        %v361 = vpop.permute.xlu0 %360
        %364 = vset.pattern.permute.xlu0 0
        %365 = vperm.xlu0 %364, %v204
        %v366 = vpop.permute.xlu0 %365
        %v368 = vlaneseq
        %v369 = vshrl.u32 %v368, 7
        %v370 = vsub.s32 0, %v369
        %v371 = vrot.slane %v205, %v370
        %v372 = vmul.f32 %v211, %v371
        %v373 = vmul.f32 %v216, %v371
        %v374 = vmul.f32 %v221, %v371
        %v375 = vmul.f32 %v226, %v371
        %v376 = vmul.f32 %v231, %v371
        %v377 = vmul.f32 %v236, %v371
        %v378 = vmul.f32 %v241, %v371
        %v379 = vmul.f32 %v246, %v371
        %v380 = vmul.f32 %v251, %v371
        %v381 = vmul.f32 %v256, %v371
        %v382 = vmul.f32 %v261, %v371
        %v383 = vmul.f32 %v266, %v371
        %v384 = vmul.f32 %v271, %v371
        %v385 = vmul.f32 %v276, %v371
        %v386 = vmul.f32 %v281, %v371
        %v387 = vmul.f32 %v286, %v371
        %v388 = vmul.f32 %v291, %v371
        %v389 = vmul.f32 %v296, %v371
        %v390 = vmul.f32 %v301, %v371
        %v391 = vmul.f32 %v306, %v371
        %v392 = vmul.f32 %v311, %v371
        %v393 = vmul.f32 %v316, %v371
        %v394 = vmul.f32 %v321, %v371
        %v395 = vmul.f32 %v326, %v371
        %v396 = vmul.f32 %v331, %v371
        %v397 = vmul.f32 %v336, %v371
        %v398 = vmul.f32 %v341, %v371
        %v399 = vmul.f32 %v346, %v371
        %v400 = vmul.f32 %v351, %v371
        %v401 = vmul.f32 %v356, %v371
        %v402 = vmul.f32 %v361, %v371
        %v403 = vmul.f32 %v366, %v371
        %404 = vset.pattern.permute.xlu0 1
        %405 = vperm.xlu0 %404, %v173
        %v406 = vpop.permute.xlu0 %405
        %408 = vset.pattern.permute.xlu0 1
        %409 = vperm.xlu0 %408, %v174
        %v410 = vpop.permute.xlu0 %409
        %412 = vset.pattern.permute.xlu0 1
        %413 = vperm.xlu0 %412, %v175
        %v414 = vpop.permute.xlu0 %413
        %416 = vset.pattern.permute.xlu0 1
        %417 = vperm.xlu0 %416, %v176
        %v418 = vpop.permute.xlu0 %417
        %420 = vset.pattern.permute.xlu0 1
        %421 = vperm.xlu0 %420, %v177
        %v422 = vpop.permute.xlu0 %421
        %424 = vset.pattern.permute.xlu0 1
        %425 = vperm.xlu0 %424, %v178
        %v426 = vpop.permute.xlu0 %425
        %428 = vset.pattern.permute.xlu0 1
        %429 = vperm.xlu0 %428, %v179
        %v430 = vpop.permute.xlu0 %429
        %432 = vset.pattern.permute.xlu0 1
        %433 = vperm.xlu0 %432, %v180
        %v434 = vpop.permute.xlu0 %433
        %436 = vset.pattern.permute.xlu0 1
        %437 = vperm.xlu0 %436, %v181
        %v438 = vpop.permute.xlu0 %437
        %440 = vset.pattern.permute.xlu0 1
        %441 = vperm.xlu0 %440, %v182
        %v442 = vpop.permute.xlu0 %441
        %444 = vset.pattern.permute.xlu0 1
        %445 = vperm.xlu0 %444, %v183
        %v446 = vpop.permute.xlu0 %445
        %448 = vset.pattern.permute.xlu0 1
        %449 = vperm.xlu0 %448, %v184
        %v450 = vpop.permute.xlu0 %449
        %452 = vset.pattern.permute.xlu0 1
        %453 = vperm.xlu0 %452, %v185
        %v454 = vpop.permute.xlu0 %453
        %456 = vset.pattern.permute.xlu0 1
        %457 = vperm.xlu0 %456, %v186
        %v458 = vpop.permute.xlu0 %457
        %460 = vset.pattern.permute.xlu0 1
        %461 = vperm.xlu0 %460, %v187
        %v462 = vpop.permute.xlu0 %461
        %464 = vset.pattern.permute.xlu0 1
        %465 = vperm.xlu0 %464, %v188
        %v466 = vpop.permute.xlu0 %465
        %468 = vset.pattern.permute.xlu0 1
        %469 = vperm.xlu0 %468, %v189
        %v470 = vpop.permute.xlu0 %469
        %472 = vset.pattern.permute.xlu0 1
        %473 = vperm.xlu0 %472, %v190
        %v474 = vpop.permute.xlu0 %473
        %476 = vset.pattern.permute.xlu0 1
        %477 = vperm.xlu0 %476, %v191
        %v478 = vpop.permute.xlu0 %477
        %480 = vset.pattern.permute.xlu0 1
        %481 = vperm.xlu0 %480, %v192
        %v482 = vpop.permute.xlu0 %481
        %484 = vset.pattern.permute.xlu0 1
        %485 = vperm.xlu0 %484, %v193
        %v486 = vpop.permute.xlu0 %485
        %488 = vset.pattern.permute.xlu0 1
        %489 = vperm.xlu0 %488, %v194
        %v490 = vpop.permute.xlu0 %489
        %492 = vset.pattern.permute.xlu0 1
        %493 = vperm.xlu0 %492, %v195
        %v494 = vpop.permute.xlu0 %493
        %496 = vset.pattern.permute.xlu0 1
        %497 = vperm.xlu0 %496, %v196
        %v498 = vpop.permute.xlu0 %497
        %500 = vset.pattern.permute.xlu0 1
        %501 = vperm.xlu0 %500, %v197
        %v502 = vpop.permute.xlu0 %501
        %504 = vset.pattern.permute.xlu0 1
        %505 = vperm.xlu0 %504, %v198
        %v506 = vpop.permute.xlu0 %505
        %508 = vset.pattern.permute.xlu0 1
        %509 = vperm.xlu0 %508, %v199
        %v510 = vpop.permute.xlu0 %509
        %512 = vset.pattern.permute.xlu0 1
        %513 = vperm.xlu0 %512, %v200
        %v514 = vpop.permute.xlu0 %513
        %516 = vset.pattern.permute.xlu0 1
        %517 = vperm.xlu0 %516, %v201
        %v518 = vpop.permute.xlu0 %517
        %520 = vset.pattern.permute.xlu0 1
        %521 = vperm.xlu0 %520, %v202
        %v522 = vpop.permute.xlu0 %521
        %524 = vset.pattern.permute.xlu0 1
        %525 = vperm.xlu0 %524, %v203
        %v526 = vpop.permute.xlu0 %525
        %528 = vset.pattern.permute.xlu0 1
        %529 = vperm.xlu0 %528, %v204
        %v530 = vpop.permute.xlu0 %529
        %v532 = vlaneseq
        %v533 = vshrl.u32 %v532, 7
        %v534 = vsub.s32 0, %v533
        %v535 = vrot.slane %v206, %v534
        %v536 = vmul.f32 %v406, %v535
        %v537 = vmul.f32 %v410, %v535
        %v538 = vmul.f32 %v414, %v535
        %v539 = vmul.f32 %v418, %v535
        %v540 = vmul.f32 %v422, %v535
        %v541 = vmul.f32 %v426, %v535
        %v542 = vmul.f32 %v430, %v535
        %v543 = vmul.f32 %v434, %v535
        %v544 = vmul.f32 %v438, %v535
        %v545 = vmul.f32 %v442, %v535
        %v546 = vmul.f32 %v446, %v535
        %v547 = vmul.f32 %v450, %v535
        %v548 = vmul.f32 %v454, %v535
        %v549 = vmul.f32 %v458, %v535
        %v550 = vmul.f32 %v462, %v535
        %v551 = vmul.f32 %v466, %v535
        %v552 = vmul.f32 %v470, %v535
        %v553 = vmul.f32 %v474, %v535
        %v554 = vmul.f32 %v478, %v535
        %v555 = vmul.f32 %v482, %v535
        %v556 = vmul.f32 %v486, %v535
        %v557 = vmul.f32 %v490, %v535
        %v558 = vmul.f32 %v494, %v535
        %v559 = vmul.f32 %v498, %v535
        %v560 = vmul.f32 %v502, %v535
        %v561 = vmul.f32 %v506, %v535
        %v562 = vmul.f32 %v510, %v535
        %v563 = vmul.f32 %v514, %v535
        %v564 = vmul.f32 %v518, %v535
        %v565 = vmul.f32 %v522, %v535
        %v566 = vmul.f32 %v526, %v535
        %v567 = vmul.f32 %v530, %v535
        %v568 = vadd.f32 %v372, %v536
        %v569 = vadd.f32 %v373, %v537
        %v570 = vadd.f32 %v374, %v538
        %v571 = vadd.f32 %v375, %v539
        %v572 = vadd.f32 %v376, %v540
        %v573 = vadd.f32 %v377, %v541
        %v574 = vadd.f32 %v378, %v542
        %v575 = vadd.f32 %v379, %v543
        %v576 = vadd.f32 %v380, %v544
        %v577 = vadd.f32 %v381, %v545
        %v578 = vadd.f32 %v382, %v546
        %v579 = vadd.f32 %v383, %v547
        %v580 = vadd.f32 %v384, %v548
        %v581 = vadd.f32 %v385, %v549
        %v582 = vadd.f32 %v386, %v550
        %v583 = vadd.f32 %v387, %v551
        %v584 = vadd.f32 %v388, %v552
        %v585 = vadd.f32 %v389, %v553
        %v586 = vadd.f32 %v390, %v554
        %v587 = vadd.f32 %v391, %v555
        %v588 = vadd.f32 %v392, %v556
        %v589 = vadd.f32 %v393, %v557
        %v590 = vadd.f32 %v394, %v558
        %v591 = vadd.f32 %v395, %v559
        %v592 = vadd.f32 %v396, %v560
        %v593 = vadd.f32 %v397, %v561
        %v594 = vadd.f32 %v398, %v562
        %v595 = vadd.f32 %v399, %v563
        %v596 = vadd.f32 %v400, %v564
        %v597 = vadd.f32 %v401, %v565
        %v598 = vadd.f32 %v402, %v566
        %v599 = vadd.f32 %v403, %v567
        %v600 = vlaneseq
        %v601 = vshrl.u32 %v600, 7
        %v602 = vsub.s32 0, %v601
        %v603 = vrot.slane %v207, %v602
        %v604 = vadd.f32 %v568, %v603
        %v605 = vadd.f32 %v569, %v603
        %v606 = vadd.f32 %v570, %v603
        %v607 = vadd.f32 %v571, %v603
        %v608 = vadd.f32 %v572, %v603
        %v609 = vadd.f32 %v573, %v603
        %v610 = vadd.f32 %v574, %v603
        %v611 = vadd.f32 %v575, %v603
        %v612 = vadd.f32 %v576, %v603
        %v613 = vadd.f32 %v577, %v603
        %v614 = vadd.f32 %v578, %v603
        %v615 = vadd.f32 %v579, %v603
        %v616 = vadd.f32 %v580, %v603
        %v617 = vadd.f32 %v581, %v603
        %v618 = vadd.f32 %v582, %v603
        %v619 = vadd.f32 %v583, %v603
        %v620 = vadd.f32 %v584, %v603
        %v621 = vadd.f32 %v585, %v603
        %v622 = vadd.f32 %v586, %v603
        %v623 = vadd.f32 %v587, %v603
        %v624 = vadd.f32 %v588, %v603
        %v625 = vadd.f32 %v589, %v603
        %v626 = vadd.f32 %v590, %v603
        %v627 = vadd.f32 %v591, %v603
        %v628 = vadd.f32 %v592, %v603
        %v629 = vadd.f32 %v593, %v603
        %v630 = vadd.f32 %v594, %v603
        %v631 = vadd.f32 %v595, %v603
        %v632 = vadd.f32 %v596, %v603
        %v633 = vadd.f32 %v597, %v603
        %v634 = vadd.f32 %v598, %v603
        %v635 = vadd.f32 %v599, %v603
        %v636 = vand.u32 2147483647, %v604
        %vm637 = vcmp.le.f32.partialorder %v636, 0.7853982
        %vm638 = vcmp.lt.s32.totalorder %v604, 0
        %v639 = vand.u32 %v604, 2139095040
        %v640 = vshrl.u32 %v639, 23
        %v641 = vsub.s32 %v640, 127
        %v642 = vand.u32 2147483647, %v604
        %v643 = vand.u32 %v642, 8388607
        %v644 = vor.u32 %v643, 8388608
        %v645 = vsub.s32 0, %v644
        %v646 = vadd.s32 %v641, 1
        %vm647 = vcmp.gt.s32.totalorder %v646, 0
        %v648 = vsel %vm647, %v646, 0
        %v649 = vshrl.u32 %v648, 5
        %v650 = vand.u32 %v648, 31
        %v651 = vsub.s32 32, %v650
        %v652 = vshrl.u32 683565275, %v651
        %v653 = vshll.u32 683565275, %v650
        %v654 = vshrl.u32 2475754826, %v651
        %v655 = vor.u32 %v653, %v654
        %v656 = vshll.u32 2475754826, %v650
        %v657 = vshrl.u32 2131351028, %v651
        %v658 = vor.u32 %v656, %v657
        %v659 = vshll.u32 2131351028, %v650
        %v660 = vshrl.u32 2102212464, %v651
        %v661 = vor.u32 %v659, %v660
        %v662 = vshll.u32 2102212464, %v650
        %v663 = vshrl.u32 920167782, %v651
        %v664 = vor.u32 %v662, %v663
        %v665 = vshll.u32 920167782, %v650
        %v666 = vshrl.u32 1326507024, %v651
        %v667 = vor.u32 %v665, %v666
        %vm668 = vcmp.lt.s32.totalorder %v649, 1
        %vm669 = vcmp.lt.s32.totalorder %v649, 2
        %vm670 = vcmp.lt.s32.totalorder %v649, 3
        %vm671 = vcmp.lt.s32.totalorder %v649, 4
        %v672 = vsel %vm668, %v652, %v655
        %v673 = vsel %vm671, %v661, 2102212464
        %v674 = vsel %vm670, %v658, %v673
        %v675 = vsel %vm669, %v672, %v674
        %v676 = vsel %vm668, %v655, %v658
        %v677 = vsel %vm671, %v664, 920167782
        %v678 = vsel %vm670, %v661, %v677
        %v679 = vsel %vm669, %v676, %v678
        %v680 = vsel %vm668, %v658, %v661
        %v681 = vsel %vm671, %v667, 1326507024
        %v682 = vsel %vm670, %v664, %v681
        %v683 = vsel %vm669, %v680, %v682
        %v684 = vshll.u32 %v644, 8
        %v685 = vmul.u32.u64.compose %v684, %v683
        %v686 = vextract.low.u32 %v685
        %v687 = vextract.high.u32 %v685
        %v688 = vmul.u32.u64.compose %v684, %v679
        %v689 = vextract.low.u32 %v688
        %v690 = vextract.high.u32 %v688
        %v691 = vmul.u32 %v684, %v675
        %v692 = vadd.s32 %v687, %v689
        %vm693 = vc.u32 %v687, %v689
        %v694 = vadd.s32 %v690, 1
        %v695 = vsel %vm693, %v694, %v690
        %v696 = vadd.s32 %v691, %v695
        %v697 = vadd.s32 %v696, 536870912
        %v698 = vshrl.u32 %v697, 30
        %v699 = vshll.u32 %v698, 30
        %v700 = vsub.s32 %v696, %v699
        %vm701 = vcmp.lt.s32.totalorder %v700, 0
        %v702 = vsub.s32 0, %v700
        %v703 = vsel %vm701, %v702, %v700
        %v704 = vclz %v703
        %v705 = vsub.s32 %v704, 2
        %vm706 = vcmp.gt.s32.totalorder 0, %v705
        %v707 = vsel %vm706, 0, %v705
        %v708 = vsub.s32 32, %v707
        %v709 = vshll.u32 %v700, %v707
        %v710 = vshrl.u32 %v692, %v708
        %v711 = vor.u32 %v709, %v710
        %v712 = vsub.s32 4294967266, %v707
        %v713 = vadd.s32 %v712, 127
        %v714 = vshll.u32 %v713, 23
        %v715 = vor.u32 4788187, %v714
        %v716 = vand.u32 2147483647, %v715
        %v718 = vcvt.s32.f32 %v711
        %v719 = vmul.f32 %v718, %v716
        %v720 = vxor.u32 %v719, 2147483648
        %v721 = vsel %vm638, %v720, %v719
        %v722 = vsub.s32 4, %v698
        %v723 = vsel %vm638, %v722, %v698
        %v724 = vsel %vm637, %v604, %v721
        %v725 = vsel %vm637, 0, %v723
        %v726 = vcosq.f32.pop %v724
        %v727 = vsinq.f32.pop %v724
        %vm728 = vweird.f32 %v604
        %v729 = vadd.s32 %v725, 3
        %v730 = vand.u32 %v729, 3
        %vm731 = vcmp.lt.s32.totalorder %v730, 2
        %vm732 = vcmp.eq.s32.totalorder %v730, 0
        %v733 = vxor.u32 %v727, 2147483648
        %v734 = vsel %vm732, %v726, %v733
        %vm735 = vcmp.eq.s32.totalorder %v730, 2
        %v736 = vxor.u32 %v726, 2147483648
        %v737 = vsel %vm735, %v736, %v727
        %v738 = vsel %vm731, %v734, %v737
        %v739 = vsel %vm728, nan, %v738
        %v740 = vand.u32 2147483647, %v605
        %vm741 = vcmp.le.f32.partialorder %v740, 0.7853982
        %vm742 = vcmp.lt.s32.totalorder %v605, 0
        %v743 = vand.u32 %v605, 2139095040
        %v744 = vshrl.u32 %v743, 23
        %v745 = vsub.s32 %v744, 127
        %v746 = vand.u32 2147483647, %v605
        %v747 = vand.u32 %v746, 8388607
        %v748 = vor.u32 %v747, 8388608
        %v749 = vsub.s32 0, %v748
        %v750 = vadd.s32 %v745, 1
        %vm751 = vcmp.gt.s32.totalorder %v750, 0
        %v752 = vsel %vm751, %v750, 0
        %v753 = vshrl.u32 %v752, 5
        %v754 = vand.u32 %v752, 31
        %v755 = vsub.s32 32, %v754
        %v756 = vshrl.u32 683565275, %v755
        %v757 = vshll.u32 683565275, %v754
        %v758 = vshrl.u32 2475754826, %v755
        %v759 = vor.u32 %v757, %v758
        %v760 = vshll.u32 2475754826, %v754
        %v761 = vshrl.u32 2131351028, %v755
        %v762 = vor.u32 %v760, %v761
        %v763 = vshll.u32 2131351028, %v754
        %v764 = vshrl.u32 2102212464, %v755
        %v765 = vor.u32 %v763, %v764
        %v766 = vshll.u32 2102212464, %v754
        %v767 = vshrl.u32 920167782, %v755
        %v768 = vor.u32 %v766, %v767
        %v769 = vshll.u32 920167782, %v754
        %v770 = vshrl.u32 1326507024, %v755
        %v771 = vor.u32 %v769, %v770
        %vm772 = vcmp.lt.s32.totalorder %v753, 1
        %vm773 = vcmp.lt.s32.totalorder %v753, 2
        %vm774 = vcmp.lt.s32.totalorder %v753, 3
        %vm775 = vcmp.lt.s32.totalorder %v753, 4
        %v776 = vsel %vm772, %v756, %v759
        %v777 = vsel %vm775, %v765, 2102212464
        %v778 = vsel %vm774, %v762, %v777
        %v779 = vsel %vm773, %v776, %v778
        %v780 = vsel %vm772, %v759, %v762
        %v781 = vsel %vm775, %v768, 920167782
        %v782 = vsel %vm774, %v765, %v781
        %v783 = vsel %vm773, %v780, %v782
        %v784 = vsel %vm772, %v762, %v765
        %v785 = vsel %vm775, %v771, 1326507024
        %v786 = vsel %vm774, %v768, %v785
        %v787 = vsel %vm773, %v784, %v786
        %v788 = vshll.u32 %v748, 8
        %v789 = vmul.u32.u64.compose %v788, %v787
        %v790 = vextract.low.u32 %v789
        %v791 = vextract.high.u32 %v789
        %v792 = vmul.u32.u64.compose %v788, %v783
        %v793 = vextract.low.u32 %v792
        %v794 = vextract.high.u32 %v792
        %v795 = vmul.u32 %v788, %v779
        %v796 = vadd.s32 %v791, %v793
        %vm797 = vc.u32 %v791, %v793
        %v798 = vadd.s32 %v794, 1
        %v799 = vsel %vm797, %v798, %v794
        %v800 = vadd.s32 %v795, %v799
        %v801 = vadd.s32 %v800, 536870912
        %v802 = vshrl.u32 %v801, 30
        %v803 = vshll.u32 %v802, 30
        %v804 = vsub.s32 %v800, %v803
        %vm805 = vcmp.lt.s32.totalorder %v804, 0
        %v806 = vsub.s32 0, %v804
        %v807 = vsel %vm805, %v806, %v804
        %v808 = vclz %v807
        %v809 = vsub.s32 %v808, 2
        %vm810 = vcmp.gt.s32.totalorder 0, %v809
        %v811 = vsel %vm810, 0, %v809
        %v812 = vsub.s32 32, %v811
        %v813 = vshll.u32 %v804, %v811
        %v814 = vshrl.u32 %v796, %v812
        %v815 = vor.u32 %v813, %v814
        %v816 = vsub.s32 4294967266, %v811
        %v817 = vadd.s32 %v816, 127
        %v818 = vshll.u32 %v817, 23
        %v819 = vor.u32 4788187, %v818
        %v820 = vand.u32 2147483647, %v819
        %v822 = vcvt.s32.f32 %v815
        %v823 = vmul.f32 %v822, %v820
        %v824 = vxor.u32 %v823, 2147483648
        %v825 = vsel %vm742, %v824, %v823
        %v826 = vsub.s32 4, %v802
        %v827 = vsel %vm742, %v826, %v802
        %v828 = vsel %vm741, %v605, %v825
        %v829 = vsel %vm741, 0, %v827
        %v830 = vcosq.f32.pop %v828
        %v831 = vsinq.f32.pop %v828
        %vm832 = vweird.f32 %v605
        %v833 = vadd.s32 %v829, 3
        %v834 = vand.u32 %v833, 3
        %vm835 = vcmp.lt.s32.totalorder %v834, 2
        %vm836 = vcmp.eq.s32.totalorder %v834, 0
        %v837 = vxor.u32 %v831, 2147483648
        %v838 = vsel %vm836, %v830, %v837
        %vm839 = vcmp.eq.s32.totalorder %v834, 2
        %v840 = vxor.u32 %v830, 2147483648
        %v841 = vsel %vm839, %v840, %v831
        %v842 = vsel %vm835, %v838, %v841
        %v843 = vsel %vm832, nan, %v842
        %v844 = vand.u32 2147483647, %v606
        %vm845 = vcmp.le.f32.partialorder %v844, 0.7853982
        %vm846 = vcmp.lt.s32.totalorder %v606, 0
        %v847 = vand.u32 %v606, 2139095040
        %v848 = vshrl.u32 %v847, 23
        %v849 = vsub.s32 %v848, 127
        %v850 = vand.u32 2147483647, %v606
        %v851 = vand.u32 %v850, 8388607
        %v852 = vor.u32 %v851, 8388608
        %v853 = vsub.s32 0, %v852
        %v854 = vadd.s32 %v849, 1
        %vm855 = vcmp.gt.s32.totalorder %v854, 0
        %v856 = vsel %vm855, %v854, 0
        %v857 = vshrl.u32 %v856, 5
        %v858 = vand.u32 %v856, 31
        %v859 = vsub.s32 32, %v858
        %v860 = vshrl.u32 683565275, %v859
        %v861 = vshll.u32 683565275, %v858
        %v862 = vshrl.u32 2475754826, %v859
        %v863 = vor.u32 %v861, %v862
        %v864 = vshll.u32 2475754826, %v858
        %v865 = vshrl.u32 2131351028, %v859
        %v866 = vor.u32 %v864, %v865
        %v867 = vshll.u32 2131351028, %v858
        %v868 = vshrl.u32 2102212464, %v859
        %v869 = vor.u32 %v867, %v868
        %v870 = vshll.u32 2102212464, %v858
        %v871 = vshrl.u32 920167782, %v859
        %v872 = vor.u32 %v870, %v871
        %v873 = vshll.u32 920167782, %v858
        %v874 = vshrl.u32 1326507024, %v859
        %v875 = vor.u32 %v873, %v874
        %vm876 = vcmp.lt.s32.totalorder %v857, 1
        %vm877 = vcmp.lt.s32.totalorder %v857, 2
        %vm878 = vcmp.lt.s32.totalorder %v857, 3
        %vm879 = vcmp.lt.s32.totalorder %v857, 4
        %v880 = vsel %vm876, %v860, %v863
        %v881 = vsel %vm879, %v869, 2102212464
        %v882 = vsel %vm878, %v866, %v881
        %v883 = vsel %vm877, %v880, %v882
        %v884 = vsel %vm876, %v863, %v866
        %v885 = vsel %vm879, %v872, 920167782
        %v886 = vsel %vm878, %v869, %v885
        %v887 = vsel %vm877, %v884, %v886
        %v888 = vsel %vm876, %v866, %v869
        %v889 = vsel %vm879, %v875, 1326507024
        %v890 = vsel %vm878, %v872, %v889
        %v891 = vsel %vm877, %v888, %v890
        %v892 = vshll.u32 %v852, 8
        %v893 = vmul.u32.u64.compose %v892, %v891
        %v894 = vextract.low.u32 %v893
        %v895 = vextract.high.u32 %v893
        %v896 = vmul.u32.u64.compose %v892, %v887
        %v897 = vextract.low.u32 %v896
        %v898 = vextract.high.u32 %v896
        %v899 = vmul.u32 %v892, %v883
        %v900 = vadd.s32 %v895, %v897
        %vm901 = vc.u32 %v895, %v897
        %v902 = vadd.s32 %v898, 1
        %v903 = vsel %vm901, %v902, %v898
        %v904 = vadd.s32 %v899, %v903
        %v905 = vadd.s32 %v904, 536870912
        %v906 = vshrl.u32 %v905, 30
        %v907 = vshll.u32 %v906, 30
        %v908 = vsub.s32 %v904, %v907
        %vm909 = vcmp.lt.s32.totalorder %v908, 0
        %v910 = vsub.s32 0, %v908
        %v911 = vsel %vm909, %v910, %v908
        %v912 = vclz %v911
        %v913 = vsub.s32 %v912, 2
        %vm914 = vcmp.gt.s32.totalorder 0, %v913
        %v915 = vsel %vm914, 0, %v913
        %v916 = vsub.s32 32, %v915
        %v917 = vshll.u32 %v908, %v915
        %v918 = vshrl.u32 %v900, %v916
        %v919 = vor.u32 %v917, %v918
        %v920 = vsub.s32 4294967266, %v915
        %v921 = vadd.s32 %v920, 127
        %v922 = vshll.u32 %v921, 23
        %v923 = vor.u32 4788187, %v922
        %v924 = vand.u32 2147483647, %v923
        %v926 = vcvt.s32.f32 %v919
        %v927 = vmul.f32 %v926, %v924
        %v928 = vxor.u32 %v927, 2147483648
        %v929 = vsel %vm846, %v928, %v927
        %v930 = vsub.s32 4, %v906
        %v931 = vsel %vm846, %v930, %v906
        %v932 = vsel %vm845, %v606, %v929
        %v933 = vsel %vm845, 0, %v931
        %v934 = vcosq.f32.pop %v932
        %v935 = vsinq.f32.pop %v932
        %vm936 = vweird.f32 %v606
        %v937 = vadd.s32 %v933, 3
        %v938 = vand.u32 %v937, 3
        %vm939 = vcmp.lt.s32.totalorder %v938, 2
        %vm940 = vcmp.eq.s32.totalorder %v938, 0
        %v941 = vxor.u32 %v935, 2147483648
        %v942 = vsel %vm940, %v934, %v941
        %vm943 = vcmp.eq.s32.totalorder %v938, 2
        %v944 = vxor.u32 %v934, 2147483648
        %v945 = vsel %vm943, %v944, %v935
        %v946 = vsel %vm939, %v942, %v945
        %v947 = vsel %vm936, nan, %v946
        %v948 = vand.u32 2147483647, %v607
        %vm949 = vcmp.le.f32.partialorder %v948, 0.7853982
        %vm950 = vcmp.lt.s32.totalorder %v607, 0
        %v951 = vand.u32 %v607, 2139095040
        %v952 = vshrl.u32 %v951, 23
        %v953 = vsub.s32 %v952, 127
        %v954 = vand.u32 2147483647, %v607
        %v955 = vand.u32 %v954, 8388607
        %v956 = vor.u32 %v955, 8388608
        %v957 = vsub.s32 0, %v956
        %v958 = vadd.s32 %v953, 1
        %vm959 = vcmp.gt.s32.totalorder %v958, 0
        %v960 = vsel %vm959, %v958, 0
        %v961 = vshrl.u32 %v960, 5
        %v962 = vand.u32 %v960, 31
        %v963 = vsub.s32 32, %v962
        %v964 = vshrl.u32 683565275, %v963
        %v965 = vshll.u32 683565275, %v962
        %v966 = vshrl.u32 2475754826, %v963
        %v967 = vor.u32 %v965, %v966
        %v968 = vshll.u32 2475754826, %v962
        %v969 = vshrl.u32 2131351028, %v963
        %v970 = vor.u32 %v968, %v969
        %v971 = vshll.u32 2131351028, %v962
        %v972 = vshrl.u32 2102212464, %v963
        %v973 = vor.u32 %v971, %v972
        %v974 = vshll.u32 2102212464, %v962
        %v975 = vshrl.u32 920167782, %v963
        %v976 = vor.u32 %v974, %v975
        %v977 = vshll.u32 920167782, %v962
        %v978 = vshrl.u32 1326507024, %v963
        %v979 = vor.u32 %v977, %v978
        %vm980 = vcmp.lt.s32.totalorder %v961, 1
        %vm981 = vcmp.lt.s32.totalorder %v961, 2
        %vm982 = vcmp.lt.s32.totalorder %v961, 3
        %vm983 = vcmp.lt.s32.totalorder %v961, 4
        %v984 = vsel %vm980, %v964, %v967
        %v985 = vsel %vm983, %v973, 2102212464
        %v986 = vsel %vm982, %v970, %v985
        %v987 = vsel %vm981, %v984, %v986
        %v988 = vsel %vm980, %v967, %v970
        %v989 = vsel %vm983, %v976, 920167782
        %v990 = vsel %vm982, %v973, %v989
        %v991 = vsel %vm981, %v988, %v990
        %v992 = vsel %vm980, %v970, %v973
        %v993 = vsel %vm983, %v979, 1326507024
        %v994 = vsel %vm982, %v976, %v993
        %v995 = vsel %vm981, %v992, %v994
        %v996 = vshll.u32 %v956, 8
        %v997 = vmul.u32.u64.compose %v996, %v995
        %v998 = vextract.low.u32 %v997
        %v999 = vextract.high.u32 %v997
        %v1000 = vmul.u32.u64.compose %v996, %v991
        %v1001 = vextract.low.u32 %v1000
        %v1002 = vextract.high.u32 %v1000
        %v1003 = vmul.u32 %v996, %v987
        %v1004 = vadd.s32 %v999, %v1001
        %vm1005 = vc.u32 %v999, %v1001
        %v1006 = vadd.s32 %v1002, 1
        %v1007 = vsel %vm1005, %v1006, %v1002
        %v1008 = vadd.s32 %v1003, %v1007
        %v1009 = vadd.s32 %v1008, 536870912
        %v1010 = vshrl.u32 %v1009, 30
        %v1011 = vshll.u32 %v1010, 30
        %v1012 = vsub.s32 %v1008, %v1011
        %vm1013 = vcmp.lt.s32.totalorder %v1012, 0
        %v1014 = vsub.s32 0, %v1012
        %v1015 = vsel %vm1013, %v1014, %v1012
        %v1016 = vclz %v1015
        %v1017 = vsub.s32 %v1016, 2
        %vm1018 = vcmp.gt.s32.totalorder 0, %v1017
        %v1019 = vsel %vm1018, 0, %v1017
        %v1020 = vsub.s32 32, %v1019
        %v1021 = vshll.u32 %v1012, %v1019
        %v1022 = vshrl.u32 %v1004, %v1020
        %v1023 = vor.u32 %v1021, %v1022
        %v1024 = vsub.s32 4294967266, %v1019
        %v1025 = vadd.s32 %v1024, 127
        %v1026 = vshll.u32 %v1025, 23
        %v1027 = vor.u32 4788187, %v1026
        %v1028 = vand.u32 2147483647, %v1027
        %v1030 = vcvt.s32.f32 %v1023
        %v1031 = vmul.f32 %v1030, %v1028
        %v1032 = vxor.u32 %v1031, 2147483648
        %v1033 = vsel %vm950, %v1032, %v1031
        %v1034 = vsub.s32 4, %v1010
        %v1035 = vsel %vm950, %v1034, %v1010
        %v1036 = vsel %vm949, %v607, %v1033
        %v1037 = vsel %vm949, 0, %v1035
        %v1038 = vcosq.f32.pop %v1036
        %v1039 = vsinq.f32.pop %v1036
        %vm1040 = vweird.f32 %v607
        %v1041 = vadd.s32 %v1037, 3
        %v1042 = vand.u32 %v1041, 3
        %vm1043 = vcmp.lt.s32.totalorder %v1042, 2
        %vm1044 = vcmp.eq.s32.totalorder %v1042, 0
        %v1045 = vxor.u32 %v1039, 2147483648
        %v1046 = vsel %vm1044, %v1038, %v1045
        %vm1047 = vcmp.eq.s32.totalorder %v1042, 2
        %v1048 = vxor.u32 %v1038, 2147483648
        %v1049 = vsel %vm1047, %v1048, %v1039
        %v1050 = vsel %vm1043, %v1046, %v1049
        %v1051 = vsel %vm1040, nan, %v1050
        %v1052 = vand.u32 2147483647, %v608
        %vm1053 = vcmp.le.f32.partialorder %v1052, 0.7853982
        %vm1054 = vcmp.lt.s32.totalorder %v608, 0
        %v1055 = vand.u32 %v608, 2139095040
        %v1056 = vshrl.u32 %v1055, 23
        %v1057 = vsub.s32 %v1056, 127
        %v1058 = vand.u32 2147483647, %v608
        %v1059 = vand.u32 %v1058, 8388607
        %v1060 = vor.u32 %v1059, 8388608
        %v1061 = vsub.s32 0, %v1060
        %v1062 = vadd.s32 %v1057, 1
        %vm1063 = vcmp.gt.s32.totalorder %v1062, 0
        %v1064 = vsel %vm1063, %v1062, 0
        %v1065 = vshrl.u32 %v1064, 5
        %v1066 = vand.u32 %v1064, 31
        %v1067 = vsub.s32 32, %v1066
        %v1068 = vshrl.u32 683565275, %v1067
        %v1069 = vshll.u32 683565275, %v1066
        %v1070 = vshrl.u32 2475754826, %v1067
        %v1071 = vor.u32 %v1069, %v1070
        %v1072 = vshll.u32 2475754826, %v1066
        %v1073 = vshrl.u32 2131351028, %v1067
        %v1074 = vor.u32 %v1072, %v1073
        %v1075 = vshll.u32 2131351028, %v1066
        %v1076 = vshrl.u32 2102212464, %v1067
        %v1077 = vor.u32 %v1075, %v1076
        %v1078 = vshll.u32 2102212464, %v1066
        %v1079 = vshrl.u32 920167782, %v1067
        %v1080 = vor.u32 %v1078, %v1079
        %v1081 = vshll.u32 920167782, %v1066
        %v1082 = vshrl.u32 1326507024, %v1067
        %v1083 = vor.u32 %v1081, %v1082
        %vm1084 = vcmp.lt.s32.totalorder %v1065, 1
        %vm1085 = vcmp.lt.s32.totalorder %v1065, 2
        %vm1086 = vcmp.lt.s32.totalorder %v1065, 3
        %vm1087 = vcmp.lt.s32.totalorder %v1065, 4
        %v1088 = vsel %vm1084, %v1068, %v1071
        %v1089 = vsel %vm1087, %v1077, 2102212464
        %v1090 = vsel %vm1086, %v1074, %v1089
        %v1091 = vsel %vm1085, %v1088, %v1090
        %v1092 = vsel %vm1084, %v1071, %v1074
        %v1093 = vsel %vm1087, %v1080, 920167782
        %v1094 = vsel %vm1086, %v1077, %v1093
        %v1095 = vsel %vm1085, %v1092, %v1094
        %v1096 = vsel %vm1084, %v1074, %v1077
        %v1097 = vsel %vm1087, %v1083, 1326507024
        %v1098 = vsel %vm1086, %v1080, %v1097
        %v1099 = vsel %vm1085, %v1096, %v1098
        %v1100 = vshll.u32 %v1060, 8
        %v1101 = vmul.u32.u64.compose %v1100, %v1099
        %v1102 = vextract.low.u32 %v1101
        %v1103 = vextract.high.u32 %v1101
        %v1104 = vmul.u32.u64.compose %v1100, %v1095
        %v1105 = vextract.low.u32 %v1104
        %v1106 = vextract.high.u32 %v1104
        %v1107 = vmul.u32 %v1100, %v1091
        %v1108 = vadd.s32 %v1103, %v1105
        %vm1109 = vc.u32 %v1103, %v1105
        %v1110 = vadd.s32 %v1106, 1
        %v1111 = vsel %vm1109, %v1110, %v1106
        %v1112 = vadd.s32 %v1107, %v1111
        %v1113 = vadd.s32 %v1112, 536870912
        %v1114 = vshrl.u32 %v1113, 30
        %v1115 = vshll.u32 %v1114, 30
        %v1116 = vsub.s32 %v1112, %v1115
        %vm1117 = vcmp.lt.s32.totalorder %v1116, 0
        %v1118 = vsub.s32 0, %v1116
        %v1119 = vsel %vm1117, %v1118, %v1116
        %v1120 = vclz %v1119
        %v1121 = vsub.s32 %v1120, 2
        %vm1122 = vcmp.gt.s32.totalorder 0, %v1121
        %v1123 = vsel %vm1122, 0, %v1121
        %v1124 = vsub.s32 32, %v1123
        %v1125 = vshll.u32 %v1116, %v1123
        %v1126 = vshrl.u32 %v1108, %v1124
        %v1127 = vor.u32 %v1125, %v1126
        %v1128 = vsub.s32 4294967266, %v1123
        %v1129 = vadd.s32 %v1128, 127
        %v1130 = vshll.u32 %v1129, 23
        %v1131 = vor.u32 4788187, %v1130
        %v1132 = vand.u32 2147483647, %v1131
        %v1134 = vcvt.s32.f32 %v1127
        %v1135 = vmul.f32 %v1134, %v1132
        %v1136 = vxor.u32 %v1135, 2147483648
        %v1137 = vsel %vm1054, %v1136, %v1135
        %v1138 = vsub.s32 4, %v1114
        %v1139 = vsel %vm1054, %v1138, %v1114
        %v1140 = vsel %vm1053, %v608, %v1137
        %v1141 = vsel %vm1053, 0, %v1139
        %v1142 = vcosq.f32.pop %v1140
        %v1143 = vsinq.f32.pop %v1140
        %vm1144 = vweird.f32 %v608
        %v1145 = vadd.s32 %v1141, 3
        %v1146 = vand.u32 %v1145, 3
        %vm1147 = vcmp.lt.s32.totalorder %v1146, 2
        %vm1148 = vcmp.eq.s32.totalorder %v1146, 0
        %v1149 = vxor.u32 %v1143, 2147483648
        %v1150 = vsel %vm1148, %v1142, %v1149
        %vm1151 = vcmp.eq.s32.totalorder %v1146, 2
        %v1152 = vxor.u32 %v1142, 2147483648
        %v1153 = vsel %vm1151, %v1152, %v1143
        %v1154 = vsel %vm1147, %v1150, %v1153
        %v1155 = vsel %vm1144, nan, %v1154
        %v1156 = vand.u32 2147483647, %v609
        %vm1157 = vcmp.le.f32.partialorder %v1156, 0.7853982
        %vm1158 = vcmp.lt.s32.totalorder %v609, 0
        %v1159 = vand.u32 %v609, 2139095040
        %v1160 = vshrl.u32 %v1159, 23
        %v1161 = vsub.s32 %v1160, 127
        %v1162 = vand.u32 2147483647, %v609
        %v1163 = vand.u32 %v1162, 8388607
        %v1164 = vor.u32 %v1163, 8388608
        %v1165 = vsub.s32 0, %v1164
        %v1166 = vadd.s32 %v1161, 1
        %vm1167 = vcmp.gt.s32.totalorder %v1166, 0
        %v1168 = vsel %vm1167, %v1166, 0
        %v1169 = vshrl.u32 %v1168, 5
        %v1170 = vand.u32 %v1168, 31
        %v1171 = vsub.s32 32, %v1170
        %v1172 = vshrl.u32 683565275, %v1171
        %v1173 = vshll.u32 683565275, %v1170
        %v1174 = vshrl.u32 2475754826, %v1171
        %v1175 = vor.u32 %v1173, %v1174
        %v1176 = vshll.u32 2475754826, %v1170
        %v1177 = vshrl.u32 2131351028, %v1171
        %v1178 = vor.u32 %v1176, %v1177
        %v1179 = vshll.u32 2131351028, %v1170
        %v1180 = vshrl.u32 2102212464, %v1171
        %v1181 = vor.u32 %v1179, %v1180
        %v1182 = vshll.u32 2102212464, %v1170
        %v1183 = vshrl.u32 920167782, %v1171
        %v1184 = vor.u32 %v1182, %v1183
        %v1185 = vshll.u32 920167782, %v1170
        %v1186 = vshrl.u32 1326507024, %v1171
        %v1187 = vor.u32 %v1185, %v1186
        %vm1188 = vcmp.lt.s32.totalorder %v1169, 1
        %vm1189 = vcmp.lt.s32.totalorder %v1169, 2
        %vm1190 = vcmp.lt.s32.totalorder %v1169, 3
        %vm1191 = vcmp.lt.s32.totalorder %v1169, 4
        %v1192 = vsel %vm1188, %v1172, %v1175
        %v1193 = vsel %vm1191, %v1181, 2102212464
        %v1194 = vsel %vm1190, %v1178, %v1193
        %v1195 = vsel %vm1189, %v1192, %v1194
        %v1196 = vsel %vm1188, %v1175, %v1178
        %v1197 = vsel %vm1191, %v1184, 920167782
        %v1198 = vsel %vm1190, %v1181, %v1197
        %v1199 = vsel %vm1189, %v1196, %v1198
        %v1200 = vsel %vm1188, %v1178, %v1181
        %v1201 = vsel %vm1191, %v1187, 1326507024
        %v1202 = vsel %vm1190, %v1184, %v1201
        %v1203 = vsel %vm1189, %v1200, %v1202
        %v1204 = vshll.u32 %v1164, 8
        %v1205 = vmul.u32.u64.compose %v1204, %v1203
        %v1206 = vextract.low.u32 %v1205
        %v1207 = vextract.high.u32 %v1205
        %v1208 = vmul.u32.u64.compose %v1204, %v1199
        %v1209 = vextract.low.u32 %v1208
        %v1210 = vextract.high.u32 %v1208
        %v1211 = vmul.u32 %v1204, %v1195
        %v1212 = vadd.s32 %v1207, %v1209
        %vm1213 = vc.u32 %v1207, %v1209
        %v1214 = vadd.s32 %v1210, 1
        %v1215 = vsel %vm1213, %v1214, %v1210
        %v1216 = vadd.s32 %v1211, %v1215
        %v1217 = vadd.s32 %v1216, 536870912
        %v1218 = vshrl.u32 %v1217, 30
        %v1219 = vshll.u32 %v1218, 30
        %v1220 = vsub.s32 %v1216, %v1219
        %vm1221 = vcmp.lt.s32.totalorder %v1220, 0
        %v1222 = vsub.s32 0, %v1220
        %v1223 = vsel %vm1221, %v1222, %v1220
        %v1224 = vclz %v1223
        %v1225 = vsub.s32 %v1224, 2
        %vm1226 = vcmp.gt.s32.totalorder 0, %v1225
        %v1227 = vsel %vm1226, 0, %v1225
        %v1228 = vsub.s32 32, %v1227
        %v1229 = vshll.u32 %v1220, %v1227
        %v1230 = vshrl.u32 %v1212, %v1228
        %v1231 = vor.u32 %v1229, %v1230
        %v1232 = vsub.s32 4294967266, %v1227
        %v1233 = vadd.s32 %v1232, 127
        %v1234 = vshll.u32 %v1233, 23
        %v1235 = vor.u32 4788187, %v1234
        %v1236 = vand.u32 2147483647, %v1235
        %v1238 = vcvt.s32.f32 %v1231
        %v1239 = vmul.f32 %v1238, %v1236
        %v1240 = vxor.u32 %v1239, 2147483648
        %v1241 = vsel %vm1158, %v1240, %v1239
        %v1242 = vsub.s32 4, %v1218
        %v1243 = vsel %vm1158, %v1242, %v1218
        %v1244 = vsel %vm1157, %v609, %v1241
        %v1245 = vsel %vm1157, 0, %v1243
        %v1246 = vcosq.f32.pop %v1244
        %v1247 = vsinq.f32.pop %v1244
        %vm1248 = vweird.f32 %v609
        %v1249 = vadd.s32 %v1245, 3
        %v1250 = vand.u32 %v1249, 3
        %vm1251 = vcmp.lt.s32.totalorder %v1250, 2
        %vm1252 = vcmp.eq.s32.totalorder %v1250, 0
        %v1253 = vxor.u32 %v1247, 2147483648
        %v1254 = vsel %vm1252, %v1246, %v1253
        %vm1255 = vcmp.eq.s32.totalorder %v1250, 2
        %v1256 = vxor.u32 %v1246, 2147483648
        %v1257 = vsel %vm1255, %v1256, %v1247
        %v1258 = vsel %vm1251, %v1254, %v1257
        %v1259 = vsel %vm1248, nan, %v1258
        %v1260 = vand.u32 2147483647, %v610
        %vm1261 = vcmp.le.f32.partialorder %v1260, 0.7853982
        %vm1262 = vcmp.lt.s32.totalorder %v610, 0
        %v1263 = vand.u32 %v610, 2139095040
        %v1264 = vshrl.u32 %v1263, 23
        %v1265 = vsub.s32 %v1264, 127
        %v1266 = vand.u32 2147483647, %v610
        %v1267 = vand.u32 %v1266, 8388607
        %v1268 = vor.u32 %v1267, 8388608
        %v1269 = vsub.s32 0, %v1268
        %v1270 = vadd.s32 %v1265, 1
        %vm1271 = vcmp.gt.s32.totalorder %v1270, 0
        %v1272 = vsel %vm1271, %v1270, 0
        %v1273 = vshrl.u32 %v1272, 5
        %v1274 = vand.u32 %v1272, 31
        %v1275 = vsub.s32 32, %v1274
        %v1276 = vshrl.u32 683565275, %v1275
        %v1277 = vshll.u32 683565275, %v1274
        %v1278 = vshrl.u32 2475754826, %v1275
        %v1279 = vor.u32 %v1277, %v1278
        %v1280 = vshll.u32 2475754826, %v1274
        %v1281 = vshrl.u32 2131351028, %v1275
        %v1282 = vor.u32 %v1280, %v1281
        %v1283 = vshll.u32 2131351028, %v1274
        %v1284 = vshrl.u32 2102212464, %v1275
        %v1285 = vor.u32 %v1283, %v1284
        %v1286 = vshll.u32 2102212464, %v1274
        %v1287 = vshrl.u32 920167782, %v1275
        %v1288 = vor.u32 %v1286, %v1287
        %v1289 = vshll.u32 920167782, %v1274
        %v1290 = vshrl.u32 1326507024, %v1275
        %v1291 = vor.u32 %v1289, %v1290
        %vm1292 = vcmp.lt.s32.totalorder %v1273, 1
        %vm1293 = vcmp.lt.s32.totalorder %v1273, 2
        %vm1294 = vcmp.lt.s32.totalorder %v1273, 3
        %vm1295 = vcmp.lt.s32.totalorder %v1273, 4
        %v1296 = vsel %vm1292, %v1276, %v1279
        %v1297 = vsel %vm1295, %v1285, 2102212464
        %v1298 = vsel %vm1294, %v1282, %v1297
        %v1299 = vsel %vm1293, %v1296, %v1298
        %v1300 = vsel %vm1292, %v1279, %v1282
        %v1301 = vsel %vm1295, %v1288, 920167782
        %v1302 = vsel %vm1294, %v1285, %v1301
        %v1303 = vsel %vm1293, %v1300, %v1302
        %v1304 = vsel %vm1292, %v1282, %v1285
        %v1305 = vsel %vm1295, %v1291, 1326507024
        %v1306 = vsel %vm1294, %v1288, %v1305
        %v1307 = vsel %vm1293, %v1304, %v1306
        %v1308 = vshll.u32 %v1268, 8
        %v1309 = vmul.u32.u64.compose %v1308, %v1307
        %v1310 = vextract.low.u32 %v1309
        %v1311 = vextract.high.u32 %v1309
        %v1312 = vmul.u32.u64.compose %v1308, %v1303
        %v1313 = vextract.low.u32 %v1312
        %v1314 = vextract.high.u32 %v1312
        %v1315 = vmul.u32 %v1308, %v1299
        %v1316 = vadd.s32 %v1311, %v1313
        %vm1317 = vc.u32 %v1311, %v1313
        %v1318 = vadd.s32 %v1314, 1
        %v1319 = vsel %vm1317, %v1318, %v1314
        %v1320 = vadd.s32 %v1315, %v1319
        %v1321 = vadd.s32 %v1320, 536870912
        %v1322 = vshrl.u32 %v1321, 30
        %v1323 = vshll.u32 %v1322, 30
        %v1324 = vsub.s32 %v1320, %v1323
        %vm1325 = vcmp.lt.s32.totalorder %v1324, 0
        %v1326 = vsub.s32 0, %v1324
        %v1327 = vsel %vm1325, %v1326, %v1324
        %v1328 = vclz %v1327
        %v1329 = vsub.s32 %v1328, 2
        %vm1330 = vcmp.gt.s32.totalorder 0, %v1329
        %v1331 = vsel %vm1330, 0, %v1329
        %v1332 = vsub.s32 32, %v1331
        %v1333 = vshll.u32 %v1324, %v1331
        %v1334 = vshrl.u32 %v1316, %v1332
        %v1335 = vor.u32 %v1333, %v1334
        %v1336 = vsub.s32 4294967266, %v1331
        %v1337 = vadd.s32 %v1336, 127
        %v1338 = vshll.u32 %v1337, 23
        %v1339 = vor.u32 4788187, %v1338
        %v1340 = vand.u32 2147483647, %v1339
        %v1342 = vcvt.s32.f32 %v1335
        %v1343 = vmul.f32 %v1342, %v1340
        %v1344 = vxor.u32 %v1343, 2147483648
        %v1345 = vsel %vm1262, %v1344, %v1343
        %v1346 = vsub.s32 4, %v1322
        %v1347 = vsel %vm1262, %v1346, %v1322
        %v1348 = vsel %vm1261, %v610, %v1345
        %v1349 = vsel %vm1261, 0, %v1347
        %v1350 = vcosq.f32.pop %v1348
        %v1351 = vsinq.f32.pop %v1348
        %vm1352 = vweird.f32 %v610
        %v1353 = vadd.s32 %v1349, 3
        %v1354 = vand.u32 %v1353, 3
        %vm1355 = vcmp.lt.s32.totalorder %v1354, 2
        %vm1356 = vcmp.eq.s32.totalorder %v1354, 0
        %v1357 = vxor.u32 %v1351, 2147483648
        %v1358 = vsel %vm1356, %v1350, %v1357
        %vm1359 = vcmp.eq.s32.totalorder %v1354, 2
        %v1360 = vxor.u32 %v1350, 2147483648
        %v1361 = vsel %vm1359, %v1360, %v1351
        %v1362 = vsel %vm1355, %v1358, %v1361
        %v1363 = vsel %vm1352, nan, %v1362
        %v1364 = vand.u32 2147483647, %v611
        %vm1365 = vcmp.le.f32.partialorder %v1364, 0.7853982
        %vm1366 = vcmp.lt.s32.totalorder %v611, 0
        %v1367 = vand.u32 %v611, 2139095040
        %v1368 = vshrl.u32 %v1367, 23
        %v1369 = vsub.s32 %v1368, 127
        %v1370 = vand.u32 2147483647, %v611
        %v1371 = vand.u32 %v1370, 8388607
        %v1372 = vor.u32 %v1371, 8388608
        %v1373 = vsub.s32 0, %v1372
        %v1374 = vadd.s32 %v1369, 1
        %vm1375 = vcmp.gt.s32.totalorder %v1374, 0
        %v1376 = vsel %vm1375, %v1374, 0
        %v1377 = vshrl.u32 %v1376, 5
        %v1378 = vand.u32 %v1376, 31
        %v1379 = vsub.s32 32, %v1378
        %v1380 = vshrl.u32 683565275, %v1379
        %v1381 = vshll.u32 683565275, %v1378
        %v1382 = vshrl.u32 2475754826, %v1379
        %v1383 = vor.u32 %v1381, %v1382
        %v1384 = vshll.u32 2475754826, %v1378
        %v1385 = vshrl.u32 2131351028, %v1379
        %v1386 = vor.u32 %v1384, %v1385
        %v1387 = vshll.u32 2131351028, %v1378
        %v1388 = vshrl.u32 2102212464, %v1379
        %v1389 = vor.u32 %v1387, %v1388
        %v1390 = vshll.u32 2102212464, %v1378
        %v1391 = vshrl.u32 920167782, %v1379
        %v1392 = vor.u32 %v1390, %v1391
        %v1393 = vshll.u32 920167782, %v1378
        %v1394 = vshrl.u32 1326507024, %v1379
        %v1395 = vor.u32 %v1393, %v1394
        %vm1396 = vcmp.lt.s32.totalorder %v1377, 1
        %vm1397 = vcmp.lt.s32.totalorder %v1377, 2
        %vm1398 = vcmp.lt.s32.totalorder %v1377, 3
        %vm1399 = vcmp.lt.s32.totalorder %v1377, 4
        %v1400 = vsel %vm1396, %v1380, %v1383
        %v1401 = vsel %vm1399, %v1389, 2102212464
        %v1402 = vsel %vm1398, %v1386, %v1401
        %v1403 = vsel %vm1397, %v1400, %v1402
        %v1404 = vsel %vm1396, %v1383, %v1386
        %v1405 = vsel %vm1399, %v1392, 920167782
        %v1406 = vsel %vm1398, %v1389, %v1405
        %v1407 = vsel %vm1397, %v1404, %v1406
        %v1408 = vsel %vm1396, %v1386, %v1389
        %v1409 = vsel %vm1399, %v1395, 1326507024
        %v1410 = vsel %vm1398, %v1392, %v1409
        %v1411 = vsel %vm1397, %v1408, %v1410
        %v1412 = vshll.u32 %v1372, 8
        %v1413 = vmul.u32.u64.compose %v1412, %v1411
        %v1414 = vextract.low.u32 %v1413
        %v1415 = vextract.high.u32 %v1413
        %v1416 = vmul.u32.u64.compose %v1412, %v1407
        %v1417 = vextract.low.u32 %v1416
        %v1418 = vextract.high.u32 %v1416
        %v1419 = vmul.u32 %v1412, %v1403
        %v1420 = vadd.s32 %v1415, %v1417
        %vm1421 = vc.u32 %v1415, %v1417
        %v1422 = vadd.s32 %v1418, 1
        %v1423 = vsel %vm1421, %v1422, %v1418
        %v1424 = vadd.s32 %v1419, %v1423
        %v1425 = vadd.s32 %v1424, 536870912
        %v1426 = vshrl.u32 %v1425, 30
        %v1427 = vshll.u32 %v1426, 30
        %v1428 = vsub.s32 %v1424, %v1427
        %vm1429 = vcmp.lt.s32.totalorder %v1428, 0
        %v1430 = vsub.s32 0, %v1428
        %v1431 = vsel %vm1429, %v1430, %v1428
        %v1432 = vclz %v1431
        %v1433 = vsub.s32 %v1432, 2
        %vm1434 = vcmp.gt.s32.totalorder 0, %v1433
        %v1435 = vsel %vm1434, 0, %v1433
        %v1436 = vsub.s32 32, %v1435
        %v1437 = vshll.u32 %v1428, %v1435
        %v1438 = vshrl.u32 %v1420, %v1436
        %v1439 = vor.u32 %v1437, %v1438
        %v1440 = vsub.s32 4294967266, %v1435
        %v1441 = vadd.s32 %v1440, 127
        %v1442 = vshll.u32 %v1441, 23
        %v1443 = vor.u32 4788187, %v1442
        %v1444 = vand.u32 2147483647, %v1443
        %v1446 = vcvt.s32.f32 %v1439
        %v1447 = vmul.f32 %v1446, %v1444
        %v1448 = vxor.u32 %v1447, 2147483648
        %v1449 = vsel %vm1366, %v1448, %v1447
        %v1450 = vsub.s32 4, %v1426
        %v1451 = vsel %vm1366, %v1450, %v1426
        %v1452 = vsel %vm1365, %v611, %v1449
        %v1453 = vsel %vm1365, 0, %v1451
        %v1454 = vcosq.f32.pop %v1452
        %v1455 = vsinq.f32.pop %v1452
        %vm1456 = vweird.f32 %v611
        %v1457 = vadd.s32 %v1453, 3
        %v1458 = vand.u32 %v1457, 3
        %vm1459 = vcmp.lt.s32.totalorder %v1458, 2
        %vm1460 = vcmp.eq.s32.totalorder %v1458, 0
        %v1461 = vxor.u32 %v1455, 2147483648
        %v1462 = vsel %vm1460, %v1454, %v1461
        %vm1463 = vcmp.eq.s32.totalorder %v1458, 2
        %v1464 = vxor.u32 %v1454, 2147483648
        %v1465 = vsel %vm1463, %v1464, %v1455
        %v1466 = vsel %vm1459, %v1462, %v1465
        %v1467 = vsel %vm1456, nan, %v1466
        %v1468 = vand.u32 2147483647, %v612
        %vm1469 = vcmp.le.f32.partialorder %v1468, 0.7853982
        %vm1470 = vcmp.lt.s32.totalorder %v612, 0
        %v1471 = vand.u32 %v612, 2139095040
        %v1472 = vshrl.u32 %v1471, 23
        %v1473 = vsub.s32 %v1472, 127
        %v1474 = vand.u32 2147483647, %v612
        %v1475 = vand.u32 %v1474, 8388607
        %v1476 = vor.u32 %v1475, 8388608
        %v1477 = vsub.s32 0, %v1476
        %v1478 = vadd.s32 %v1473, 1
        %vm1479 = vcmp.gt.s32.totalorder %v1478, 0
        %v1480 = vsel %vm1479, %v1478, 0
        %v1481 = vshrl.u32 %v1480, 5
        %v1482 = vand.u32 %v1480, 31
        %v1483 = vsub.s32 32, %v1482
        %v1484 = vshrl.u32 683565275, %v1483
        %v1485 = vshll.u32 683565275, %v1482
        %v1486 = vshrl.u32 2475754826, %v1483
        %v1487 = vor.u32 %v1485, %v1486
        %v1488 = vshll.u32 2475754826, %v1482
        %v1489 = vshrl.u32 2131351028, %v1483
        %v1490 = vor.u32 %v1488, %v1489
        %v1491 = vshll.u32 2131351028, %v1482
        %v1492 = vshrl.u32 2102212464, %v1483
        %v1493 = vor.u32 %v1491, %v1492
        %v1494 = vshll.u32 2102212464, %v1482
        %v1495 = vshrl.u32 920167782, %v1483
        %v1496 = vor.u32 %v1494, %v1495
        %v1497 = vshll.u32 920167782, %v1482
        %v1498 = vshrl.u32 1326507024, %v1483
        %v1499 = vor.u32 %v1497, %v1498
        %vm1500 = vcmp.lt.s32.totalorder %v1481, 1
        %vm1501 = vcmp.lt.s32.totalorder %v1481, 2
        %vm1502 = vcmp.lt.s32.totalorder %v1481, 3
        %vm1503 = vcmp.lt.s32.totalorder %v1481, 4
        %v1504 = vsel %vm1500, %v1484, %v1487
        %v1505 = vsel %vm1503, %v1493, 2102212464
        %v1506 = vsel %vm1502, %v1490, %v1505
        %v1507 = vsel %vm1501, %v1504, %v1506
        %v1508 = vsel %vm1500, %v1487, %v1490
        %v1509 = vsel %vm1503, %v1496, 920167782
        %v1510 = vsel %vm1502, %v1493, %v1509
        %v1511 = vsel %vm1501, %v1508, %v1510
        %v1512 = vsel %vm1500, %v1490, %v1493
        %v1513 = vsel %vm1503, %v1499, 1326507024
        %v1514 = vsel %vm1502, %v1496, %v1513
        %v1515 = vsel %vm1501, %v1512, %v1514
        %v1516 = vshll.u32 %v1476, 8
        %v1517 = vmul.u32.u64.compose %v1516, %v1515
        %v1518 = vextract.low.u32 %v1517
        %v1519 = vextract.high.u32 %v1517
        %v1520 = vmul.u32.u64.compose %v1516, %v1511
        %v1521 = vextract.low.u32 %v1520
        %v1522 = vextract.high.u32 %v1520
        %v1523 = vmul.u32 %v1516, %v1507
        %v1524 = vadd.s32 %v1519, %v1521
        %vm1525 = vc.u32 %v1519, %v1521
        %v1526 = vadd.s32 %v1522, 1
        %v1527 = vsel %vm1525, %v1526, %v1522
        %v1528 = vadd.s32 %v1523, %v1527
        %v1529 = vadd.s32 %v1528, 536870912
        %v1530 = vshrl.u32 %v1529, 30
        %v1531 = vshll.u32 %v1530, 30
        %v1532 = vsub.s32 %v1528, %v1531
        %vm1533 = vcmp.lt.s32.totalorder %v1532, 0
        %v1534 = vsub.s32 0, %v1532
        %v1535 = vsel %vm1533, %v1534, %v1532
        %v1536 = vclz %v1535
        %v1537 = vsub.s32 %v1536, 2
        %vm1538 = vcmp.gt.s32.totalorder 0, %v1537
        %v1539 = vsel %vm1538, 0, %v1537
        %v1540 = vsub.s32 32, %v1539
        %v1541 = vshll.u32 %v1532, %v1539
        %v1542 = vshrl.u32 %v1524, %v1540
        %v1543 = vor.u32 %v1541, %v1542
        %v1544 = vsub.s32 4294967266, %v1539
        %v1545 = vadd.s32 %v1544, 127
        %v1546 = vshll.u32 %v1545, 23
        %v1547 = vor.u32 4788187, %v1546
        %v1548 = vand.u32 2147483647, %v1547
        %v1550 = vcvt.s32.f32 %v1543
        %v1551 = vmul.f32 %v1550, %v1548
        %v1552 = vxor.u32 %v1551, 2147483648
        %v1553 = vsel %vm1470, %v1552, %v1551
        %v1554 = vsub.s32 4, %v1530
        %v1555 = vsel %vm1470, %v1554, %v1530
        %v1556 = vsel %vm1469, %v612, %v1553
        %v1557 = vsel %vm1469, 0, %v1555
        %v1558 = vcosq.f32.pop %v1556
        %v1559 = vsinq.f32.pop %v1556
        %vm1560 = vweird.f32 %v612
        %v1561 = vadd.s32 %v1557, 3
        %v1562 = vand.u32 %v1561, 3
        %vm1563 = vcmp.lt.s32.totalorder %v1562, 2
        %vm1564 = vcmp.eq.s32.totalorder %v1562, 0
        %v1565 = vxor.u32 %v1559, 2147483648
        %v1566 = vsel %vm1564, %v1558, %v1565
        %vm1567 = vcmp.eq.s32.totalorder %v1562, 2
        %v1568 = vxor.u32 %v1558, 2147483648
        %v1569 = vsel %vm1567, %v1568, %v1559
        %v1570 = vsel %vm1563, %v1566, %v1569
        %v1571 = vsel %vm1560, nan, %v1570
        %v1572 = vand.u32 2147483647, %v613
        %vm1573 = vcmp.le.f32.partialorder %v1572, 0.7853982
        %vm1574 = vcmp.lt.s32.totalorder %v613, 0
        %v1575 = vand.u32 %v613, 2139095040
        %v1576 = vshrl.u32 %v1575, 23
        %v1577 = vsub.s32 %v1576, 127
        %v1578 = vand.u32 2147483647, %v613
        %v1579 = vand.u32 %v1578, 8388607
        %v1580 = vor.u32 %v1579, 8388608
        %v1581 = vsub.s32 0, %v1580
        %v1582 = vadd.s32 %v1577, 1
        %vm1583 = vcmp.gt.s32.totalorder %v1582, 0
        %v1584 = vsel %vm1583, %v1582, 0
        %v1585 = vshrl.u32 %v1584, 5
        %v1586 = vand.u32 %v1584, 31
        %v1587 = vsub.s32 32, %v1586
        %v1588 = vshrl.u32 683565275, %v1587
        %v1589 = vshll.u32 683565275, %v1586
        %v1590 = vshrl.u32 2475754826, %v1587
        %v1591 = vor.u32 %v1589, %v1590
        %v1592 = vshll.u32 2475754826, %v1586
        %v1593 = vshrl.u32 2131351028, %v1587
        %v1594 = vor.u32 %v1592, %v1593
        %v1595 = vshll.u32 2131351028, %v1586
        %v1596 = vshrl.u32 2102212464, %v1587
        %v1597 = vor.u32 %v1595, %v1596
        %v1598 = vshll.u32 2102212464, %v1586
        %v1599 = vshrl.u32 920167782, %v1587
        %v1600 = vor.u32 %v1598, %v1599
        %v1601 = vshll.u32 920167782, %v1586
        %v1602 = vshrl.u32 1326507024, %v1587
        %v1603 = vor.u32 %v1601, %v1602
        %vm1604 = vcmp.lt.s32.totalorder %v1585, 1
        %vm1605 = vcmp.lt.s32.totalorder %v1585, 2
        %vm1606 = vcmp.lt.s32.totalorder %v1585, 3
        %vm1607 = vcmp.lt.s32.totalorder %v1585, 4
        %v1608 = vsel %vm1604, %v1588, %v1591
        %v1609 = vsel %vm1607, %v1597, 2102212464
        %v1610 = vsel %vm1606, %v1594, %v1609
        %v1611 = vsel %vm1605, %v1608, %v1610
        %v1612 = vsel %vm1604, %v1591, %v1594
        %v1613 = vsel %vm1607, %v1600, 920167782
        %v1614 = vsel %vm1606, %v1597, %v1613
        %v1615 = vsel %vm1605, %v1612, %v1614
        %v1616 = vsel %vm1604, %v1594, %v1597
        %v1617 = vsel %vm1607, %v1603, 1326507024
        %v1618 = vsel %vm1606, %v1600, %v1617
        %v1619 = vsel %vm1605, %v1616, %v1618
        %v1620 = vshll.u32 %v1580, 8
        %v1621 = vmul.u32.u64.compose %v1620, %v1619
        %v1622 = vextract.low.u32 %v1621
        %v1623 = vextract.high.u32 %v1621
        %v1624 = vmul.u32.u64.compose %v1620, %v1615
        %v1625 = vextract.low.u32 %v1624
        %v1626 = vextract.high.u32 %v1624
        %v1627 = vmul.u32 %v1620, %v1611
        %v1628 = vadd.s32 %v1623, %v1625
        %vm1629 = vc.u32 %v1623, %v1625
        %v1630 = vadd.s32 %v1626, 1
        %v1631 = vsel %vm1629, %v1630, %v1626
        %v1632 = vadd.s32 %v1627, %v1631
        %v1633 = vadd.s32 %v1632, 536870912
        %v1634 = vshrl.u32 %v1633, 30
        %v1635 = vshll.u32 %v1634, 30
        %v1636 = vsub.s32 %v1632, %v1635
        %vm1637 = vcmp.lt.s32.totalorder %v1636, 0
        %v1638 = vsub.s32 0, %v1636
        %v1639 = vsel %vm1637, %v1638, %v1636
        %v1640 = vclz %v1639
        %v1641 = vsub.s32 %v1640, 2
        %vm1642 = vcmp.gt.s32.totalorder 0, %v1641
        %v1643 = vsel %vm1642, 0, %v1641
        %v1644 = vsub.s32 32, %v1643
        %v1645 = vshll.u32 %v1636, %v1643
        %v1646 = vshrl.u32 %v1628, %v1644
        %v1647 = vor.u32 %v1645, %v1646
        %v1648 = vsub.s32 4294967266, %v1643
        %v1649 = vadd.s32 %v1648, 127
        %v1650 = vshll.u32 %v1649, 23
        %v1651 = vor.u32 4788187, %v1650
        %v1652 = vand.u32 2147483647, %v1651
        %v1654 = vcvt.s32.f32 %v1647
        %v1655 = vmul.f32 %v1654, %v1652
        %v1656 = vxor.u32 %v1655, 2147483648
        %v1657 = vsel %vm1574, %v1656, %v1655
        %v1658 = vsub.s32 4, %v1634
        %v1659 = vsel %vm1574, %v1658, %v1634
        %v1660 = vsel %vm1573, %v613, %v1657
        %v1661 = vsel %vm1573, 0, %v1659
        %v1662 = vcosq.f32.pop %v1660
        %v1663 = vsinq.f32.pop %v1660
        %vm1664 = vweird.f32 %v613
        %v1665 = vadd.s32 %v1661, 3
        %v1666 = vand.u32 %v1665, 3
        %vm1667 = vcmp.lt.s32.totalorder %v1666, 2
        %vm1668 = vcmp.eq.s32.totalorder %v1666, 0
        %v1669 = vxor.u32 %v1663, 2147483648
        %v1670 = vsel %vm1668, %v1662, %v1669
        %vm1671 = vcmp.eq.s32.totalorder %v1666, 2
        %v1672 = vxor.u32 %v1662, 2147483648
        %v1673 = vsel %vm1671, %v1672, %v1663
        %v1674 = vsel %vm1667, %v1670, %v1673
        %v1675 = vsel %vm1664, nan, %v1674
        %v1676 = vand.u32 2147483647, %v614
        %vm1677 = vcmp.le.f32.partialorder %v1676, 0.7853982
        %vm1678 = vcmp.lt.s32.totalorder %v614, 0
        %v1679 = vand.u32 %v614, 2139095040
        %v1680 = vshrl.u32 %v1679, 23
        %v1681 = vsub.s32 %v1680, 127
        %v1682 = vand.u32 2147483647, %v614
        %v1683 = vand.u32 %v1682, 8388607
        %v1684 = vor.u32 %v1683, 8388608
        %v1685 = vsub.s32 0, %v1684
        %v1686 = vadd.s32 %v1681, 1
        %vm1687 = vcmp.gt.s32.totalorder %v1686, 0
        %v1688 = vsel %vm1687, %v1686, 0
        %v1689 = vshrl.u32 %v1688, 5
        %v1690 = vand.u32 %v1688, 31
        %v1691 = vsub.s32 32, %v1690
        %v1692 = vshrl.u32 683565275, %v1691
        %v1693 = vshll.u32 683565275, %v1690
        %v1694 = vshrl.u32 2475754826, %v1691
        %v1695 = vor.u32 %v1693, %v1694
        %v1696 = vshll.u32 2475754826, %v1690
        %v1697 = vshrl.u32 2131351028, %v1691
        %v1698 = vor.u32 %v1696, %v1697
        %v1699 = vshll.u32 2131351028, %v1690
        %v1700 = vshrl.u32 2102212464, %v1691
        %v1701 = vor.u32 %v1699, %v1700
        %v1702 = vshll.u32 2102212464, %v1690
        %v1703 = vshrl.u32 920167782, %v1691
        %v1704 = vor.u32 %v1702, %v1703
        %v1705 = vshll.u32 920167782, %v1690
        %v1706 = vshrl.u32 1326507024, %v1691
        %v1707 = vor.u32 %v1705, %v1706
        %vm1708 = vcmp.lt.s32.totalorder %v1689, 1
        %vm1709 = vcmp.lt.s32.totalorder %v1689, 2
        %vm1710 = vcmp.lt.s32.totalorder %v1689, 3
        %vm1711 = vcmp.lt.s32.totalorder %v1689, 4
        %v1712 = vsel %vm1708, %v1692, %v1695
        %v1713 = vsel %vm1711, %v1701, 2102212464
        %v1714 = vsel %vm1710, %v1698, %v1713
        %v1715 = vsel %vm1709, %v1712, %v1714
        %v1716 = vsel %vm1708, %v1695, %v1698
        %v1717 = vsel %vm1711, %v1704, 920167782
        %v1718 = vsel %vm1710, %v1701, %v1717
        %v1719 = vsel %vm1709, %v1716, %v1718
        %v1720 = vsel %vm1708, %v1698, %v1701
        %v1721 = vsel %vm1711, %v1707, 1326507024
        %v1722 = vsel %vm1710, %v1704, %v1721
        %v1723 = vsel %vm1709, %v1720, %v1722
        %v1724 = vshll.u32 %v1684, 8
        %v1725 = vmul.u32.u64.compose %v1724, %v1723
        %v1726 = vextract.low.u32 %v1725
        %v1727 = vextract.high.u32 %v1725
        %v1728 = vmul.u32.u64.compose %v1724, %v1719
        %v1729 = vextract.low.u32 %v1728
        %v1730 = vextract.high.u32 %v1728
        %v1731 = vmul.u32 %v1724, %v1715
        %v1732 = vadd.s32 %v1727, %v1729
        %vm1733 = vc.u32 %v1727, %v1729
        %v1734 = vadd.s32 %v1730, 1
        %v1735 = vsel %vm1733, %v1734, %v1730
        %v1736 = vadd.s32 %v1731, %v1735
        %v1737 = vadd.s32 %v1736, 536870912
        %v1738 = vshrl.u32 %v1737, 30
        %v1739 = vshll.u32 %v1738, 30
        %v1740 = vsub.s32 %v1736, %v1739
        %vm1741 = vcmp.lt.s32.totalorder %v1740, 0
        %v1742 = vsub.s32 0, %v1740
        %v1743 = vsel %vm1741, %v1742, %v1740
        %v1744 = vclz %v1743
        %v1745 = vsub.s32 %v1744, 2
        %vm1746 = vcmp.gt.s32.totalorder 0, %v1745
        %v1747 = vsel %vm1746, 0, %v1745
        %v1748 = vsub.s32 32, %v1747
        %v1749 = vshll.u32 %v1740, %v1747
        %v1750 = vshrl.u32 %v1732, %v1748
        %v1751 = vor.u32 %v1749, %v1750
        %v1752 = vsub.s32 4294967266, %v1747
        %v1753 = vadd.s32 %v1752, 127
        %v1754 = vshll.u32 %v1753, 23
        %v1755 = vor.u32 4788187, %v1754
        %v1756 = vand.u32 2147483647, %v1755
        %v1758 = vcvt.s32.f32 %v1751
        %v1759 = vmul.f32 %v1758, %v1756
        %v1760 = vxor.u32 %v1759, 2147483648
        %v1761 = vsel %vm1678, %v1760, %v1759
        %v1762 = vsub.s32 4, %v1738
        %v1763 = vsel %vm1678, %v1762, %v1738
        %v1764 = vsel %vm1677, %v614, %v1761
        %v1765 = vsel %vm1677, 0, %v1763
        %v1766 = vcosq.f32.pop %v1764
        %v1767 = vsinq.f32.pop %v1764
        %vm1768 = vweird.f32 %v614
        %v1769 = vadd.s32 %v1765, 3
        %v1770 = vand.u32 %v1769, 3
        %vm1771 = vcmp.lt.s32.totalorder %v1770, 2
        %vm1772 = vcmp.eq.s32.totalorder %v1770, 0
        %v1773 = vxor.u32 %v1767, 2147483648
        %v1774 = vsel %vm1772, %v1766, %v1773
        %vm1775 = vcmp.eq.s32.totalorder %v1770, 2
        %v1776 = vxor.u32 %v1766, 2147483648
        %v1777 = vsel %vm1775, %v1776, %v1767
        %v1778 = vsel %vm1771, %v1774, %v1777
        %v1779 = vsel %vm1768, nan, %v1778
        %v1780 = vand.u32 2147483647, %v615
        %vm1781 = vcmp.le.f32.partialorder %v1780, 0.7853982
        %vm1782 = vcmp.lt.s32.totalorder %v615, 0
        %v1783 = vand.u32 %v615, 2139095040
        %v1784 = vshrl.u32 %v1783, 23
        %v1785 = vsub.s32 %v1784, 127
        %v1786 = vand.u32 2147483647, %v615
        %v1787 = vand.u32 %v1786, 8388607
        %v1788 = vor.u32 %v1787, 8388608
        %v1789 = vsub.s32 0, %v1788
        %v1790 = vadd.s32 %v1785, 1
        %vm1791 = vcmp.gt.s32.totalorder %v1790, 0
        %v1792 = vsel %vm1791, %v1790, 0
        %v1793 = vshrl.u32 %v1792, 5
        %v1794 = vand.u32 %v1792, 31
        %v1795 = vsub.s32 32, %v1794
        %v1796 = vshrl.u32 683565275, %v1795
        %v1797 = vshll.u32 683565275, %v1794
        %v1798 = vshrl.u32 2475754826, %v1795
        %v1799 = vor.u32 %v1797, %v1798
        %v1800 = vshll.u32 2475754826, %v1794
        %v1801 = vshrl.u32 2131351028, %v1795
        %v1802 = vor.u32 %v1800, %v1801
        %v1803 = vshll.u32 2131351028, %v1794
        %v1804 = vshrl.u32 2102212464, %v1795
        %v1805 = vor.u32 %v1803, %v1804
        %v1806 = vshll.u32 2102212464, %v1794
        %v1807 = vshrl.u32 920167782, %v1795
        %v1808 = vor.u32 %v1806, %v1807
        %v1809 = vshll.u32 920167782, %v1794
        %v1810 = vshrl.u32 1326507024, %v1795
        %v1811 = vor.u32 %v1809, %v1810
        %vm1812 = vcmp.lt.s32.totalorder %v1793, 1
        %vm1813 = vcmp.lt.s32.totalorder %v1793, 2
        %vm1814 = vcmp.lt.s32.totalorder %v1793, 3
        %vm1815 = vcmp.lt.s32.totalorder %v1793, 4
        %v1816 = vsel %vm1812, %v1796, %v1799
        %v1817 = vsel %vm1815, %v1805, 2102212464
        %v1818 = vsel %vm1814, %v1802, %v1817
        %v1819 = vsel %vm1813, %v1816, %v1818
        %v1820 = vsel %vm1812, %v1799, %v1802
        %v1821 = vsel %vm1815, %v1808, 920167782
        %v1822 = vsel %vm1814, %v1805, %v1821
        %v1823 = vsel %vm1813, %v1820, %v1822
        %v1824 = vsel %vm1812, %v1802, %v1805
        %v1825 = vsel %vm1815, %v1811, 1326507024
        %v1826 = vsel %vm1814, %v1808, %v1825
        %v1827 = vsel %vm1813, %v1824, %v1826
        %v1828 = vshll.u32 %v1788, 8
        %v1829 = vmul.u32.u64.compose %v1828, %v1827
        %v1830 = vextract.low.u32 %v1829
        %v1831 = vextract.high.u32 %v1829
        %v1832 = vmul.u32.u64.compose %v1828, %v1823
        %v1833 = vextract.low.u32 %v1832
        %v1834 = vextract.high.u32 %v1832
        %v1835 = vmul.u32 %v1828, %v1819
        %v1836 = vadd.s32 %v1831, %v1833
        %vm1837 = vc.u32 %v1831, %v1833
        %v1838 = vadd.s32 %v1834, 1
        %v1839 = vsel %vm1837, %v1838, %v1834
        %v1840 = vadd.s32 %v1835, %v1839
        %v1841 = vadd.s32 %v1840, 536870912
        %v1842 = vshrl.u32 %v1841, 30
        %v1843 = vshll.u32 %v1842, 30
        %v1844 = vsub.s32 %v1840, %v1843
        %vm1845 = vcmp.lt.s32.totalorder %v1844, 0
        %v1846 = vsub.s32 0, %v1844
        %v1847 = vsel %vm1845, %v1846, %v1844
        %v1848 = vclz %v1847
        %v1849 = vsub.s32 %v1848, 2
        %vm1850 = vcmp.gt.s32.totalorder 0, %v1849
        %v1851 = vsel %vm1850, 0, %v1849
        %v1852 = vsub.s32 32, %v1851
        %v1853 = vshll.u32 %v1844, %v1851
        %v1854 = vshrl.u32 %v1836, %v1852
        %v1855 = vor.u32 %v1853, %v1854
        %v1856 = vsub.s32 4294967266, %v1851
        %v1857 = vadd.s32 %v1856, 127
        %v1858 = vshll.u32 %v1857, 23
        %v1859 = vor.u32 4788187, %v1858
        %v1860 = vand.u32 2147483647, %v1859
        %v1862 = vcvt.s32.f32 %v1855
        %v1863 = vmul.f32 %v1862, %v1860
        %v1864 = vxor.u32 %v1863, 2147483648
        %v1865 = vsel %vm1782, %v1864, %v1863
        %v1866 = vsub.s32 4, %v1842
        %v1867 = vsel %vm1782, %v1866, %v1842
        %v1868 = vsel %vm1781, %v615, %v1865
        %v1869 = vsel %vm1781, 0, %v1867
        %v1870 = vcosq.f32.pop %v1868
        %v1871 = vsinq.f32.pop %v1868
        %vm1872 = vweird.f32 %v615
        %v1873 = vadd.s32 %v1869, 3
        %v1874 = vand.u32 %v1873, 3
        %vm1875 = vcmp.lt.s32.totalorder %v1874, 2
        %vm1876 = vcmp.eq.s32.totalorder %v1874, 0
        %v1877 = vxor.u32 %v1871, 2147483648
        %v1878 = vsel %vm1876, %v1870, %v1877
        %vm1879 = vcmp.eq.s32.totalorder %v1874, 2
        %v1880 = vxor.u32 %v1870, 2147483648
        %v1881 = vsel %vm1879, %v1880, %v1871
        %v1882 = vsel %vm1875, %v1878, %v1881
        %v1883 = vsel %vm1872, nan, %v1882
        %v1884 = vand.u32 2147483647, %v616
        %vm1885 = vcmp.le.f32.partialorder %v1884, 0.7853982
        %vm1886 = vcmp.lt.s32.totalorder %v616, 0
        %v1887 = vand.u32 %v616, 2139095040
        %v1888 = vshrl.u32 %v1887, 23
        %v1889 = vsub.s32 %v1888, 127
        %v1890 = vand.u32 2147483647, %v616
        %v1891 = vand.u32 %v1890, 8388607
        %v1892 = vor.u32 %v1891, 8388608
        %v1893 = vsub.s32 0, %v1892
        %v1894 = vadd.s32 %v1889, 1
        %vm1895 = vcmp.gt.s32.totalorder %v1894, 0
        %v1896 = vsel %vm1895, %v1894, 0
        %v1897 = vshrl.u32 %v1896, 5
        %v1898 = vand.u32 %v1896, 31
        %v1899 = vsub.s32 32, %v1898
        %v1900 = vshrl.u32 683565275, %v1899
        %v1901 = vshll.u32 683565275, %v1898
        %v1902 = vshrl.u32 2475754826, %v1899
        %v1903 = vor.u32 %v1901, %v1902
        %v1904 = vshll.u32 2475754826, %v1898
        %v1905 = vshrl.u32 2131351028, %v1899
        %v1906 = vor.u32 %v1904, %v1905
        %v1907 = vshll.u32 2131351028, %v1898
        %v1908 = vshrl.u32 2102212464, %v1899
        %v1909 = vor.u32 %v1907, %v1908
        %v1910 = vshll.u32 2102212464, %v1898
        %v1911 = vshrl.u32 920167782, %v1899
        %v1912 = vor.u32 %v1910, %v1911
        %v1913 = vshll.u32 920167782, %v1898
        %v1914 = vshrl.u32 1326507024, %v1899
        %v1915 = vor.u32 %v1913, %v1914
        %vm1916 = vcmp.lt.s32.totalorder %v1897, 1
        %vm1917 = vcmp.lt.s32.totalorder %v1897, 2
        %vm1918 = vcmp.lt.s32.totalorder %v1897, 3
        %vm1919 = vcmp.lt.s32.totalorder %v1897, 4
        %v1920 = vsel %vm1916, %v1900, %v1903
        %v1921 = vsel %vm1919, %v1909, 2102212464
        %v1922 = vsel %vm1918, %v1906, %v1921
        %v1923 = vsel %vm1917, %v1920, %v1922
        %v1924 = vsel %vm1916, %v1903, %v1906
        %v1925 = vsel %vm1919, %v1912, 920167782
        %v1926 = vsel %vm1918, %v1909, %v1925
        %v1927 = vsel %vm1917, %v1924, %v1926
        %v1928 = vsel %vm1916, %v1906, %v1909
        %v1929 = vsel %vm1919, %v1915, 1326507024
        %v1930 = vsel %vm1918, %v1912, %v1929
        %v1931 = vsel %vm1917, %v1928, %v1930
        %v1932 = vshll.u32 %v1892, 8
        %v1933 = vmul.u32.u64.compose %v1932, %v1931
        %v1934 = vextract.low.u32 %v1933
        %v1935 = vextract.high.u32 %v1933
        %v1936 = vmul.u32.u64.compose %v1932, %v1927
        %v1937 = vextract.low.u32 %v1936
        %v1938 = vextract.high.u32 %v1936
        %v1939 = vmul.u32 %v1932, %v1923
        %v1940 = vadd.s32 %v1935, %v1937
        %vm1941 = vc.u32 %v1935, %v1937
        %v1942 = vadd.s32 %v1938, 1
        %v1943 = vsel %vm1941, %v1942, %v1938
        %v1944 = vadd.s32 %v1939, %v1943
        %v1945 = vadd.s32 %v1944, 536870912
        %v1946 = vshrl.u32 %v1945, 30
        %v1947 = vshll.u32 %v1946, 30
        %v1948 = vsub.s32 %v1944, %v1947
        %vm1949 = vcmp.lt.s32.totalorder %v1948, 0
        %v1950 = vsub.s32 0, %v1948
        %v1951 = vsel %vm1949, %v1950, %v1948
        %v1952 = vclz %v1951
        %v1953 = vsub.s32 %v1952, 2
        %vm1954 = vcmp.gt.s32.totalorder 0, %v1953
        %v1955 = vsel %vm1954, 0, %v1953
        %v1956 = vsub.s32 32, %v1955
        %v1957 = vshll.u32 %v1948, %v1955
        %v1958 = vshrl.u32 %v1940, %v1956
        %v1959 = vor.u32 %v1957, %v1958
        %v1960 = vsub.s32 4294967266, %v1955
        %v1961 = vadd.s32 %v1960, 127
        %v1962 = vshll.u32 %v1961, 23
        %v1963 = vor.u32 4788187, %v1962
        %v1964 = vand.u32 2147483647, %v1963
        %v1966 = vcvt.s32.f32 %v1959
        %v1967 = vmul.f32 %v1966, %v1964
        %v1968 = vxor.u32 %v1967, 2147483648
        %v1969 = vsel %vm1886, %v1968, %v1967
        %v1970 = vsub.s32 4, %v1946
        %v1971 = vsel %vm1886, %v1970, %v1946
        %v1972 = vsel %vm1885, %v616, %v1969
        %v1973 = vsel %vm1885, 0, %v1971
        %v1974 = vcosq.f32.pop %v1972
        %v1975 = vsinq.f32.pop %v1972
        %vm1976 = vweird.f32 %v616
        %v1977 = vadd.s32 %v1973, 3
        %v1978 = vand.u32 %v1977, 3
        %vm1979 = vcmp.lt.s32.totalorder %v1978, 2
        %vm1980 = vcmp.eq.s32.totalorder %v1978, 0
        %v1981 = vxor.u32 %v1975, 2147483648
        %v1982 = vsel %vm1980, %v1974, %v1981
        %vm1983 = vcmp.eq.s32.totalorder %v1978, 2
        %v1984 = vxor.u32 %v1974, 2147483648
        %v1985 = vsel %vm1983, %v1984, %v1975
        %v1986 = vsel %vm1979, %v1982, %v1985
        %v1987 = vsel %vm1976, nan, %v1986
        %v1988 = vand.u32 2147483647, %v617
        %vm1989 = vcmp.le.f32.partialorder %v1988, 0.7853982
        %vm1990 = vcmp.lt.s32.totalorder %v617, 0
        %v1991 = vand.u32 %v617, 2139095040
        %v1992 = vshrl.u32 %v1991, 23
        %v1993 = vsub.s32 %v1992, 127
        %v1994 = vand.u32 2147483647, %v617
        %v1995 = vand.u32 %v1994, 8388607
        %v1996 = vor.u32 %v1995, 8388608
        %v1997 = vsub.s32 0, %v1996
        %v1998 = vadd.s32 %v1993, 1
        %vm1999 = vcmp.gt.s32.totalorder %v1998, 0
        %v2000 = vsel %vm1999, %v1998, 0
        %v2001 = vshrl.u32 %v2000, 5
        %v2002 = vand.u32 %v2000, 31
        %v2003 = vsub.s32 32, %v2002
        %v2004 = vshrl.u32 683565275, %v2003
        %v2005 = vshll.u32 683565275, %v2002
        %v2006 = vshrl.u32 2475754826, %v2003
        %v2007 = vor.u32 %v2005, %v2006
        %v2008 = vshll.u32 2475754826, %v2002
        %v2009 = vshrl.u32 2131351028, %v2003
        %v2010 = vor.u32 %v2008, %v2009
        %v2011 = vshll.u32 2131351028, %v2002
        %v2012 = vshrl.u32 2102212464, %v2003
        %v2013 = vor.u32 %v2011, %v2012
        %v2014 = vshll.u32 2102212464, %v2002
        %v2015 = vshrl.u32 920167782, %v2003
        %v2016 = vor.u32 %v2014, %v2015
        %v2017 = vshll.u32 920167782, %v2002
        %v2018 = vshrl.u32 1326507024, %v2003
        %v2019 = vor.u32 %v2017, %v2018
        %vm2020 = vcmp.lt.s32.totalorder %v2001, 1
        %vm2021 = vcmp.lt.s32.totalorder %v2001, 2
        %vm2022 = vcmp.lt.s32.totalorder %v2001, 3
        %vm2023 = vcmp.lt.s32.totalorder %v2001, 4
        %v2024 = vsel %vm2020, %v2004, %v2007
        %v2025 = vsel %vm2023, %v2013, 2102212464
        %v2026 = vsel %vm2022, %v2010, %v2025
        %v2027 = vsel %vm2021, %v2024, %v2026
        %v2028 = vsel %vm2020, %v2007, %v2010
        %v2029 = vsel %vm2023, %v2016, 920167782
        %v2030 = vsel %vm2022, %v2013, %v2029
        %v2031 = vsel %vm2021, %v2028, %v2030
        %v2032 = vsel %vm2020, %v2010, %v2013
        %v2033 = vsel %vm2023, %v2019, 1326507024
        %v2034 = vsel %vm2022, %v2016, %v2033
        %v2035 = vsel %vm2021, %v2032, %v2034
        %v2036 = vshll.u32 %v1996, 8
        %v2037 = vmul.u32.u64.compose %v2036, %v2035
        %v2038 = vextract.low.u32 %v2037
        %v2039 = vextract.high.u32 %v2037
        %v2040 = vmul.u32.u64.compose %v2036, %v2031
        %v2041 = vextract.low.u32 %v2040
        %v2042 = vextract.high.u32 %v2040
        %v2043 = vmul.u32 %v2036, %v2027
        %v2044 = vadd.s32 %v2039, %v2041
        %vm2045 = vc.u32 %v2039, %v2041
        %v2046 = vadd.s32 %v2042, 1
        %v2047 = vsel %vm2045, %v2046, %v2042
        %v2048 = vadd.s32 %v2043, %v2047
        %v2049 = vadd.s32 %v2048, 536870912
        %v2050 = vshrl.u32 %v2049, 30
        %v2051 = vshll.u32 %v2050, 30
        %v2052 = vsub.s32 %v2048, %v2051
        %vm2053 = vcmp.lt.s32.totalorder %v2052, 0
        %v2054 = vsub.s32 0, %v2052
        %v2055 = vsel %vm2053, %v2054, %v2052
        %v2056 = vclz %v2055
        %v2057 = vsub.s32 %v2056, 2
        %vm2058 = vcmp.gt.s32.totalorder 0, %v2057
        %v2059 = vsel %vm2058, 0, %v2057
        %v2060 = vsub.s32 32, %v2059
        %v2061 = vshll.u32 %v2052, %v2059
        %v2062 = vshrl.u32 %v2044, %v2060
        %v2063 = vor.u32 %v2061, %v2062
        %v2064 = vsub.s32 4294967266, %v2059
        %v2065 = vadd.s32 %v2064, 127
        %v2066 = vshll.u32 %v2065, 23
        %v2067 = vor.u32 4788187, %v2066
        %v2068 = vand.u32 2147483647, %v2067
        %v2070 = vcvt.s32.f32 %v2063
        %v2071 = vmul.f32 %v2070, %v2068
        %v2072 = vxor.u32 %v2071, 2147483648
        %v2073 = vsel %vm1990, %v2072, %v2071
        %v2074 = vsub.s32 4, %v2050
        %v2075 = vsel %vm1990, %v2074, %v2050
        %v2076 = vsel %vm1989, %v617, %v2073
        %v2077 = vsel %vm1989, 0, %v2075
        %v2078 = vcosq.f32.pop %v2076
        %v2079 = vsinq.f32.pop %v2076
        %vm2080 = vweird.f32 %v617
        %v2081 = vadd.s32 %v2077, 3
        %v2082 = vand.u32 %v2081, 3
        %vm2083 = vcmp.lt.s32.totalorder %v2082, 2
        %vm2084 = vcmp.eq.s32.totalorder %v2082, 0
        %v2085 = vxor.u32 %v2079, 2147483648
        %v2086 = vsel %vm2084, %v2078, %v2085
        %vm2087 = vcmp.eq.s32.totalorder %v2082, 2
        %v2088 = vxor.u32 %v2078, 2147483648
        %v2089 = vsel %vm2087, %v2088, %v2079
        %v2090 = vsel %vm2083, %v2086, %v2089
        %v2091 = vsel %vm2080, nan, %v2090
        %v2092 = vand.u32 2147483647, %v618
        %vm2093 = vcmp.le.f32.partialorder %v2092, 0.7853982
        %vm2094 = vcmp.lt.s32.totalorder %v618, 0
        %v2095 = vand.u32 %v618, 2139095040
        %v2096 = vshrl.u32 %v2095, 23
        %v2097 = vsub.s32 %v2096, 127
        %v2098 = vand.u32 2147483647, %v618
        %v2099 = vand.u32 %v2098, 8388607
        %v2100 = vor.u32 %v2099, 8388608
        %v2101 = vsub.s32 0, %v2100
        %v2102 = vadd.s32 %v2097, 1
        %vm2103 = vcmp.gt.s32.totalorder %v2102, 0
        %v2104 = vsel %vm2103, %v2102, 0
        %v2105 = vshrl.u32 %v2104, 5
        %v2106 = vand.u32 %v2104, 31
        %v2107 = vsub.s32 32, %v2106
        %v2108 = vshrl.u32 683565275, %v2107
        %v2109 = vshll.u32 683565275, %v2106
        %v2110 = vshrl.u32 2475754826, %v2107
        %v2111 = vor.u32 %v2109, %v2110
        %v2112 = vshll.u32 2475754826, %v2106
        %v2113 = vshrl.u32 2131351028, %v2107
        %v2114 = vor.u32 %v2112, %v2113
        %v2115 = vshll.u32 2131351028, %v2106
        %v2116 = vshrl.u32 2102212464, %v2107
        %v2117 = vor.u32 %v2115, %v2116
        %v2118 = vshll.u32 2102212464, %v2106
        %v2119 = vshrl.u32 920167782, %v2107
        %v2120 = vor.u32 %v2118, %v2119
        %v2121 = vshll.u32 920167782, %v2106
        %v2122 = vshrl.u32 1326507024, %v2107
        %v2123 = vor.u32 %v2121, %v2122
        %vm2124 = vcmp.lt.s32.totalorder %v2105, 1
        %vm2125 = vcmp.lt.s32.totalorder %v2105, 2
        %vm2126 = vcmp.lt.s32.totalorder %v2105, 3
        %vm2127 = vcmp.lt.s32.totalorder %v2105, 4
        %v2128 = vsel %vm2124, %v2108, %v2111
        %v2129 = vsel %vm2127, %v2117, 2102212464
        %v2130 = vsel %vm2126, %v2114, %v2129
        %v2131 = vsel %vm2125, %v2128, %v2130
        %v2132 = vsel %vm2124, %v2111, %v2114
        %v2133 = vsel %vm2127, %v2120, 920167782
        %v2134 = vsel %vm2126, %v2117, %v2133
        %v2135 = vsel %vm2125, %v2132, %v2134
        %v2136 = vsel %vm2124, %v2114, %v2117
        %v2137 = vsel %vm2127, %v2123, 1326507024
        %v2138 = vsel %vm2126, %v2120, %v2137
        %v2139 = vsel %vm2125, %v2136, %v2138
        %v2140 = vshll.u32 %v2100, 8
        %v2141 = vmul.u32.u64.compose %v2140, %v2139
        %v2142 = vextract.low.u32 %v2141
        %v2143 = vextract.high.u32 %v2141
        %v2144 = vmul.u32.u64.compose %v2140, %v2135
        %v2145 = vextract.low.u32 %v2144
        %v2146 = vextract.high.u32 %v2144
        %v2147 = vmul.u32 %v2140, %v2131
        %v2148 = vadd.s32 %v2143, %v2145
        %vm2149 = vc.u32 %v2143, %v2145
        %v2150 = vadd.s32 %v2146, 1
        %v2151 = vsel %vm2149, %v2150, %v2146
        %v2152 = vadd.s32 %v2147, %v2151
        %v2153 = vadd.s32 %v2152, 536870912
        %v2154 = vshrl.u32 %v2153, 30
        %v2155 = vshll.u32 %v2154, 30
        %v2156 = vsub.s32 %v2152, %v2155
        %vm2157 = vcmp.lt.s32.totalorder %v2156, 0
        %v2158 = vsub.s32 0, %v2156
        %v2159 = vsel %vm2157, %v2158, %v2156
        %v2160 = vclz %v2159
        %v2161 = vsub.s32 %v2160, 2
        %vm2162 = vcmp.gt.s32.totalorder 0, %v2161
        %v2163 = vsel %vm2162, 0, %v2161
        %v2164 = vsub.s32 32, %v2163
        %v2165 = vshll.u32 %v2156, %v2163
        %v2166 = vshrl.u32 %v2148, %v2164
        %v2167 = vor.u32 %v2165, %v2166
        %v2168 = vsub.s32 4294967266, %v2163
        %v2169 = vadd.s32 %v2168, 127
        %v2170 = vshll.u32 %v2169, 23
        %v2171 = vor.u32 4788187, %v2170
        %v2172 = vand.u32 2147483647, %v2171
        %v2174 = vcvt.s32.f32 %v2167
        %v2175 = vmul.f32 %v2174, %v2172
        %v2176 = vxor.u32 %v2175, 2147483648
        %v2177 = vsel %vm2094, %v2176, %v2175
        %v2178 = vsub.s32 4, %v2154
        %v2179 = vsel %vm2094, %v2178, %v2154
        %v2180 = vsel %vm2093, %v618, %v2177
        %v2181 = vsel %vm2093, 0, %v2179
        %v2182 = vcosq.f32.pop %v2180
        %v2183 = vsinq.f32.pop %v2180
        %vm2184 = vweird.f32 %v618
        %v2185 = vadd.s32 %v2181, 3
        %v2186 = vand.u32 %v2185, 3
        %vm2187 = vcmp.lt.s32.totalorder %v2186, 2
        %vm2188 = vcmp.eq.s32.totalorder %v2186, 0
        %v2189 = vxor.u32 %v2183, 2147483648
        %v2190 = vsel %vm2188, %v2182, %v2189
        %vm2191 = vcmp.eq.s32.totalorder %v2186, 2
        %v2192 = vxor.u32 %v2182, 2147483648
        %v2193 = vsel %vm2191, %v2192, %v2183
        %v2194 = vsel %vm2187, %v2190, %v2193
        %v2195 = vsel %vm2184, nan, %v2194
        %v2196 = vand.u32 2147483647, %v619
        %vm2197 = vcmp.le.f32.partialorder %v2196, 0.7853982
        %vm2198 = vcmp.lt.s32.totalorder %v619, 0
        %v2199 = vand.u32 %v619, 2139095040
        %v2200 = vshrl.u32 %v2199, 23
        %v2201 = vsub.s32 %v2200, 127
        %v2202 = vand.u32 2147483647, %v619
        %v2203 = vand.u32 %v2202, 8388607
        %v2204 = vor.u32 %v2203, 8388608
        %v2205 = vsub.s32 0, %v2204
        %v2206 = vadd.s32 %v2201, 1
        %vm2207 = vcmp.gt.s32.totalorder %v2206, 0
        %v2208 = vsel %vm2207, %v2206, 0
        %v2209 = vshrl.u32 %v2208, 5
        %v2210 = vand.u32 %v2208, 31
        %v2211 = vsub.s32 32, %v2210
        %v2212 = vshrl.u32 683565275, %v2211
        %v2213 = vshll.u32 683565275, %v2210
        %v2214 = vshrl.u32 2475754826, %v2211
        %v2215 = vor.u32 %v2213, %v2214
        %v2216 = vshll.u32 2475754826, %v2210
        %v2217 = vshrl.u32 2131351028, %v2211
        %v2218 = vor.u32 %v2216, %v2217
        %v2219 = vshll.u32 2131351028, %v2210
        %v2220 = vshrl.u32 2102212464, %v2211
        %v2221 = vor.u32 %v2219, %v2220
        %v2222 = vshll.u32 2102212464, %v2210
        %v2223 = vshrl.u32 920167782, %v2211
        %v2224 = vor.u32 %v2222, %v2223
        %v2225 = vshll.u32 920167782, %v2210
        %v2226 = vshrl.u32 1326507024, %v2211
        %v2227 = vor.u32 %v2225, %v2226
        %vm2228 = vcmp.lt.s32.totalorder %v2209, 1
        %vm2229 = vcmp.lt.s32.totalorder %v2209, 2
        %vm2230 = vcmp.lt.s32.totalorder %v2209, 3
        %vm2231 = vcmp.lt.s32.totalorder %v2209, 4
        %v2232 = vsel %vm2228, %v2212, %v2215
        %v2233 = vsel %vm2231, %v2221, 2102212464
        %v2234 = vsel %vm2230, %v2218, %v2233
        %v2235 = vsel %vm2229, %v2232, %v2234
        %v2236 = vsel %vm2228, %v2215, %v2218
        %v2237 = vsel %vm2231, %v2224, 920167782
        %v2238 = vsel %vm2230, %v2221, %v2237
        %v2239 = vsel %vm2229, %v2236, %v2238
        %v2240 = vsel %vm2228, %v2218, %v2221
        %v2241 = vsel %vm2231, %v2227, 1326507024
        %v2242 = vsel %vm2230, %v2224, %v2241
        %v2243 = vsel %vm2229, %v2240, %v2242
        %v2244 = vshll.u32 %v2204, 8
        %v2245 = vmul.u32.u64.compose %v2244, %v2243
        %v2246 = vextract.low.u32 %v2245
        %v2247 = vextract.high.u32 %v2245
        %v2248 = vmul.u32.u64.compose %v2244, %v2239
        %v2249 = vextract.low.u32 %v2248
        %v2250 = vextract.high.u32 %v2248
        %v2251 = vmul.u32 %v2244, %v2235
        %v2252 = vadd.s32 %v2247, %v2249
        %vm2253 = vc.u32 %v2247, %v2249
        %v2254 = vadd.s32 %v2250, 1
        %v2255 = vsel %vm2253, %v2254, %v2250
        %v2256 = vadd.s32 %v2251, %v2255
        %v2257 = vadd.s32 %v2256, 536870912
        %v2258 = vshrl.u32 %v2257, 30
        %v2259 = vshll.u32 %v2258, 30
        %v2260 = vsub.s32 %v2256, %v2259
        %vm2261 = vcmp.lt.s32.totalorder %v2260, 0
        %v2262 = vsub.s32 0, %v2260
        %v2263 = vsel %vm2261, %v2262, %v2260
        %v2264 = vclz %v2263
        %v2265 = vsub.s32 %v2264, 2
        %vm2266 = vcmp.gt.s32.totalorder 0, %v2265
        %v2267 = vsel %vm2266, 0, %v2265
        %v2268 = vsub.s32 32, %v2267
        %v2269 = vshll.u32 %v2260, %v2267
        %v2270 = vshrl.u32 %v2252, %v2268
        %v2271 = vor.u32 %v2269, %v2270
        %v2272 = vsub.s32 4294967266, %v2267
        %v2273 = vadd.s32 %v2272, 127
        %v2274 = vshll.u32 %v2273, 23
        %v2275 = vor.u32 4788187, %v2274
        %v2276 = vand.u32 2147483647, %v2275
        %v2278 = vcvt.s32.f32 %v2271
        %v2279 = vmul.f32 %v2278, %v2276
        %v2280 = vxor.u32 %v2279, 2147483648
        %v2281 = vsel %vm2198, %v2280, %v2279
        %v2282 = vsub.s32 4, %v2258
        %v2283 = vsel %vm2198, %v2282, %v2258
        %v2284 = vsel %vm2197, %v619, %v2281
        %v2285 = vsel %vm2197, 0, %v2283
        %v2286 = vcosq.f32.pop %v2284
        %v2287 = vsinq.f32.pop %v2284
        %vm2288 = vweird.f32 %v619
        %v2289 = vadd.s32 %v2285, 3
        %v2290 = vand.u32 %v2289, 3
        %vm2291 = vcmp.lt.s32.totalorder %v2290, 2
        %vm2292 = vcmp.eq.s32.totalorder %v2290, 0
        %v2293 = vxor.u32 %v2287, 2147483648
        %v2294 = vsel %vm2292, %v2286, %v2293
        %vm2295 = vcmp.eq.s32.totalorder %v2290, 2
        %v2296 = vxor.u32 %v2286, 2147483648
        %v2297 = vsel %vm2295, %v2296, %v2287
        %v2298 = vsel %vm2291, %v2294, %v2297
        %v2299 = vsel %vm2288, nan, %v2298
        %v2300 = vand.u32 2147483647, %v620
        %vm2301 = vcmp.le.f32.partialorder %v2300, 0.7853982
        %vm2302 = vcmp.lt.s32.totalorder %v620, 0
        %v2303 = vand.u32 %v620, 2139095040
        %v2304 = vshrl.u32 %v2303, 23
        %v2305 = vsub.s32 %v2304, 127
        %v2306 = vand.u32 2147483647, %v620
        %v2307 = vand.u32 %v2306, 8388607
        %v2308 = vor.u32 %v2307, 8388608
        %v2309 = vsub.s32 0, %v2308
        %v2310 = vadd.s32 %v2305, 1
        %vm2311 = vcmp.gt.s32.totalorder %v2310, 0
        %v2312 = vsel %vm2311, %v2310, 0
        %v2313 = vshrl.u32 %v2312, 5
        %v2314 = vand.u32 %v2312, 31
        %v2315 = vsub.s32 32, %v2314
        %v2316 = vshrl.u32 683565275, %v2315
        %v2317 = vshll.u32 683565275, %v2314
        %v2318 = vshrl.u32 2475754826, %v2315
        %v2319 = vor.u32 %v2317, %v2318
        %v2320 = vshll.u32 2475754826, %v2314
        %v2321 = vshrl.u32 2131351028, %v2315
        %v2322 = vor.u32 %v2320, %v2321
        %v2323 = vshll.u32 2131351028, %v2314
        %v2324 = vshrl.u32 2102212464, %v2315
        %v2325 = vor.u32 %v2323, %v2324
        %v2326 = vshll.u32 2102212464, %v2314
        %v2327 = vshrl.u32 920167782, %v2315
        %v2328 = vor.u32 %v2326, %v2327
        %v2329 = vshll.u32 920167782, %v2314
        %v2330 = vshrl.u32 1326507024, %v2315
        %v2331 = vor.u32 %v2329, %v2330
        %vm2332 = vcmp.lt.s32.totalorder %v2313, 1
        %vm2333 = vcmp.lt.s32.totalorder %v2313, 2
        %vm2334 = vcmp.lt.s32.totalorder %v2313, 3
        %vm2335 = vcmp.lt.s32.totalorder %v2313, 4
        %v2336 = vsel %vm2332, %v2316, %v2319
        %v2337 = vsel %vm2335, %v2325, 2102212464
        %v2338 = vsel %vm2334, %v2322, %v2337
        %v2339 = vsel %vm2333, %v2336, %v2338
        %v2340 = vsel %vm2332, %v2319, %v2322
        %v2341 = vsel %vm2335, %v2328, 920167782
        %v2342 = vsel %vm2334, %v2325, %v2341
        %v2343 = vsel %vm2333, %v2340, %v2342
        %v2344 = vsel %vm2332, %v2322, %v2325
        %v2345 = vsel %vm2335, %v2331, 1326507024
        %v2346 = vsel %vm2334, %v2328, %v2345
        %v2347 = vsel %vm2333, %v2344, %v2346
        %v2348 = vshll.u32 %v2308, 8
        %v2349 = vmul.u32.u64.compose %v2348, %v2347
        %v2350 = vextract.low.u32 %v2349
        %v2351 = vextract.high.u32 %v2349
        %v2352 = vmul.u32.u64.compose %v2348, %v2343
        %v2353 = vextract.low.u32 %v2352
        %v2354 = vextract.high.u32 %v2352
        %v2355 = vmul.u32 %v2348, %v2339
        %v2356 = vadd.s32 %v2351, %v2353
        %vm2357 = vc.u32 %v2351, %v2353
        %v2358 = vadd.s32 %v2354, 1
        %v2359 = vsel %vm2357, %v2358, %v2354
        %v2360 = vadd.s32 %v2355, %v2359
        %v2361 = vadd.s32 %v2360, 536870912
        %v2362 = vshrl.u32 %v2361, 30
        %v2363 = vshll.u32 %v2362, 30
        %v2364 = vsub.s32 %v2360, %v2363
        %vm2365 = vcmp.lt.s32.totalorder %v2364, 0
        %v2366 = vsub.s32 0, %v2364
        %v2367 = vsel %vm2365, %v2366, %v2364
        %v2368 = vclz %v2367
        %v2369 = vsub.s32 %v2368, 2
        %vm2370 = vcmp.gt.s32.totalorder 0, %v2369
        %v2371 = vsel %vm2370, 0, %v2369
        %v2372 = vsub.s32 32, %v2371
        %v2373 = vshll.u32 %v2364, %v2371
        %v2374 = vshrl.u32 %v2356, %v2372
        %v2375 = vor.u32 %v2373, %v2374
        %v2376 = vsub.s32 4294967266, %v2371
        %v2377 = vadd.s32 %v2376, 127
        %v2378 = vshll.u32 %v2377, 23
        %v2379 = vor.u32 4788187, %v2378
        %v2380 = vand.u32 2147483647, %v2379
        %v2382 = vcvt.s32.f32 %v2375
        %v2383 = vmul.f32 %v2382, %v2380
        %v2384 = vxor.u32 %v2383, 2147483648
        %v2385 = vsel %vm2302, %v2384, %v2383
        %v2386 = vsub.s32 4, %v2362
        %v2387 = vsel %vm2302, %v2386, %v2362
        %v2388 = vsel %vm2301, %v620, %v2385
        %v2389 = vsel %vm2301, 0, %v2387
        %v2390 = vcosq.f32.pop %v2388
        %v2391 = vsinq.f32.pop %v2388
        %vm2392 = vweird.f32 %v620
        %v2393 = vadd.s32 %v2389, 3
        %v2394 = vand.u32 %v2393, 3
        %vm2395 = vcmp.lt.s32.totalorder %v2394, 2
        %vm2396 = vcmp.eq.s32.totalorder %v2394, 0
        %v2397 = vxor.u32 %v2391, 2147483648
        %v2398 = vsel %vm2396, %v2390, %v2397
        %vm2399 = vcmp.eq.s32.totalorder %v2394, 2
        %v2400 = vxor.u32 %v2390, 2147483648
        %v2401 = vsel %vm2399, %v2400, %v2391
        %v2402 = vsel %vm2395, %v2398, %v2401
        %v2403 = vsel %vm2392, nan, %v2402
        %v2404 = vand.u32 2147483647, %v621
        %vm2405 = vcmp.le.f32.partialorder %v2404, 0.7853982
        %vm2406 = vcmp.lt.s32.totalorder %v621, 0
        %v2407 = vand.u32 %v621, 2139095040
        %v2408 = vshrl.u32 %v2407, 23
        %v2409 = vsub.s32 %v2408, 127
        %v2410 = vand.u32 2147483647, %v621
        %v2411 = vand.u32 %v2410, 8388607
        %v2412 = vor.u32 %v2411, 8388608
        %v2413 = vsub.s32 0, %v2412
        %v2414 = vadd.s32 %v2409, 1
        %vm2415 = vcmp.gt.s32.totalorder %v2414, 0
        %v2416 = vsel %vm2415, %v2414, 0
        %v2417 = vshrl.u32 %v2416, 5
        %v2418 = vand.u32 %v2416, 31
        %v2419 = vsub.s32 32, %v2418
        %v2420 = vshrl.u32 683565275, %v2419
        %v2421 = vshll.u32 683565275, %v2418
        %v2422 = vshrl.u32 2475754826, %v2419
        %v2423 = vor.u32 %v2421, %v2422
        %v2424 = vshll.u32 2475754826, %v2418
        %v2425 = vshrl.u32 2131351028, %v2419
        %v2426 = vor.u32 %v2424, %v2425
        %v2427 = vshll.u32 2131351028, %v2418
        %v2428 = vshrl.u32 2102212464, %v2419
        %v2429 = vor.u32 %v2427, %v2428
        %v2430 = vshll.u32 2102212464, %v2418
        %v2431 = vshrl.u32 920167782, %v2419
        %v2432 = vor.u32 %v2430, %v2431
        %v2433 = vshll.u32 920167782, %v2418
        %v2434 = vshrl.u32 1326507024, %v2419
        %v2435 = vor.u32 %v2433, %v2434
        %vm2436 = vcmp.lt.s32.totalorder %v2417, 1
        %vm2437 = vcmp.lt.s32.totalorder %v2417, 2
        %vm2438 = vcmp.lt.s32.totalorder %v2417, 3
        %vm2439 = vcmp.lt.s32.totalorder %v2417, 4
        %v2440 = vsel %vm2436, %v2420, %v2423
        %v2441 = vsel %vm2439, %v2429, 2102212464
        %v2442 = vsel %vm2438, %v2426, %v2441
        %v2443 = vsel %vm2437, %v2440, %v2442
        %v2444 = vsel %vm2436, %v2423, %v2426
        %v2445 = vsel %vm2439, %v2432, 920167782
        %v2446 = vsel %vm2438, %v2429, %v2445
        %v2447 = vsel %vm2437, %v2444, %v2446
        %v2448 = vsel %vm2436, %v2426, %v2429
        %v2449 = vsel %vm2439, %v2435, 1326507024
        %v2450 = vsel %vm2438, %v2432, %v2449
        %v2451 = vsel %vm2437, %v2448, %v2450
        %v2452 = vshll.u32 %v2412, 8
        %v2453 = vmul.u32.u64.compose %v2452, %v2451
        %v2454 = vextract.low.u32 %v2453
        %v2455 = vextract.high.u32 %v2453
        %v2456 = vmul.u32.u64.compose %v2452, %v2447
        %v2457 = vextract.low.u32 %v2456
        %v2458 = vextract.high.u32 %v2456
        %v2459 = vmul.u32 %v2452, %v2443
        %v2460 = vadd.s32 %v2455, %v2457
        %vm2461 = vc.u32 %v2455, %v2457
        %v2462 = vadd.s32 %v2458, 1
        %v2463 = vsel %vm2461, %v2462, %v2458
        %v2464 = vadd.s32 %v2459, %v2463
        %v2465 = vadd.s32 %v2464, 536870912
        %v2466 = vshrl.u32 %v2465, 30
        %v2467 = vshll.u32 %v2466, 30
        %v2468 = vsub.s32 %v2464, %v2467
        %vm2469 = vcmp.lt.s32.totalorder %v2468, 0
        %v2470 = vsub.s32 0, %v2468
        %v2471 = vsel %vm2469, %v2470, %v2468
        %v2472 = vclz %v2471
        %v2473 = vsub.s32 %v2472, 2
        %vm2474 = vcmp.gt.s32.totalorder 0, %v2473
        %v2475 = vsel %vm2474, 0, %v2473
        %v2476 = vsub.s32 32, %v2475
        %v2477 = vshll.u32 %v2468, %v2475
        %v2478 = vshrl.u32 %v2460, %v2476
        %v2479 = vor.u32 %v2477, %v2478
        %v2480 = vsub.s32 4294967266, %v2475
        %v2481 = vadd.s32 %v2480, 127
        %v2482 = vshll.u32 %v2481, 23
        %v2483 = vor.u32 4788187, %v2482
        %v2484 = vand.u32 2147483647, %v2483
        %v2486 = vcvt.s32.f32 %v2479
        %v2487 = vmul.f32 %v2486, %v2484
        %v2488 = vxor.u32 %v2487, 2147483648
        %v2489 = vsel %vm2406, %v2488, %v2487
        %v2490 = vsub.s32 4, %v2466
        %v2491 = vsel %vm2406, %v2490, %v2466
        %v2492 = vsel %vm2405, %v621, %v2489
        %v2493 = vsel %vm2405, 0, %v2491
        %v2494 = vcosq.f32.pop %v2492
        %v2495 = vsinq.f32.pop %v2492
        %vm2496 = vweird.f32 %v621
        %v2497 = vadd.s32 %v2493, 3
        %v2498 = vand.u32 %v2497, 3
        %vm2499 = vcmp.lt.s32.totalorder %v2498, 2
        %vm2500 = vcmp.eq.s32.totalorder %v2498, 0
        %v2501 = vxor.u32 %v2495, 2147483648
        %v2502 = vsel %vm2500, %v2494, %v2501
        %vm2503 = vcmp.eq.s32.totalorder %v2498, 2
        %v2504 = vxor.u32 %v2494, 2147483648
        %v2505 = vsel %vm2503, %v2504, %v2495
        %v2506 = vsel %vm2499, %v2502, %v2505
        %v2507 = vsel %vm2496, nan, %v2506
        %v2508 = vand.u32 2147483647, %v622
        %vm2509 = vcmp.le.f32.partialorder %v2508, 0.7853982
        %vm2510 = vcmp.lt.s32.totalorder %v622, 0
        %v2511 = vand.u32 %v622, 2139095040
        %v2512 = vshrl.u32 %v2511, 23
        %v2513 = vsub.s32 %v2512, 127
        %v2514 = vand.u32 2147483647, %v622
        %v2515 = vand.u32 %v2514, 8388607
        %v2516 = vor.u32 %v2515, 8388608
        %v2517 = vsub.s32 0, %v2516
        %v2518 = vadd.s32 %v2513, 1
        %vm2519 = vcmp.gt.s32.totalorder %v2518, 0
        %v2520 = vsel %vm2519, %v2518, 0
        %v2521 = vshrl.u32 %v2520, 5
        %v2522 = vand.u32 %v2520, 31
        %v2523 = vsub.s32 32, %v2522
        %v2524 = vshrl.u32 683565275, %v2523
        %v2525 = vshll.u32 683565275, %v2522
        %v2526 = vshrl.u32 2475754826, %v2523
        %v2527 = vor.u32 %v2525, %v2526
        %v2528 = vshll.u32 2475754826, %v2522
        %v2529 = vshrl.u32 2131351028, %v2523
        %v2530 = vor.u32 %v2528, %v2529
        %v2531 = vshll.u32 2131351028, %v2522
        %v2532 = vshrl.u32 2102212464, %v2523
        %v2533 = vor.u32 %v2531, %v2532
        %v2534 = vshll.u32 2102212464, %v2522
        %v2535 = vshrl.u32 920167782, %v2523
        %v2536 = vor.u32 %v2534, %v2535
        %v2537 = vshll.u32 920167782, %v2522
        %v2538 = vshrl.u32 1326507024, %v2523
        %v2539 = vor.u32 %v2537, %v2538
        %vm2540 = vcmp.lt.s32.totalorder %v2521, 1
        %vm2541 = vcmp.lt.s32.totalorder %v2521, 2
        %vm2542 = vcmp.lt.s32.totalorder %v2521, 3
        %vm2543 = vcmp.lt.s32.totalorder %v2521, 4
        %v2544 = vsel %vm2540, %v2524, %v2527
        %v2545 = vsel %vm2543, %v2533, 2102212464
        %v2546 = vsel %vm2542, %v2530, %v2545
        %v2547 = vsel %vm2541, %v2544, %v2546
        %v2548 = vsel %vm2540, %v2527, %v2530
        %v2549 = vsel %vm2543, %v2536, 920167782
        %v2550 = vsel %vm2542, %v2533, %v2549
        %v2551 = vsel %vm2541, %v2548, %v2550
        %v2552 = vsel %vm2540, %v2530, %v2533
        %v2553 = vsel %vm2543, %v2539, 1326507024
        %v2554 = vsel %vm2542, %v2536, %v2553
        %v2555 = vsel %vm2541, %v2552, %v2554
        %v2556 = vshll.u32 %v2516, 8
        %v2557 = vmul.u32.u64.compose %v2556, %v2555
        %v2558 = vextract.low.u32 %v2557
        %v2559 = vextract.high.u32 %v2557
        %v2560 = vmul.u32.u64.compose %v2556, %v2551
        %v2561 = vextract.low.u32 %v2560
        %v2562 = vextract.high.u32 %v2560
        %v2563 = vmul.u32 %v2556, %v2547
        %v2564 = vadd.s32 %v2559, %v2561
        %vm2565 = vc.u32 %v2559, %v2561
        %v2566 = vadd.s32 %v2562, 1
        %v2567 = vsel %vm2565, %v2566, %v2562
        %v2568 = vadd.s32 %v2563, %v2567
        %v2569 = vadd.s32 %v2568, 536870912
        %v2570 = vshrl.u32 %v2569, 30
        %v2571 = vshll.u32 %v2570, 30
        %v2572 = vsub.s32 %v2568, %v2571
        %vm2573 = vcmp.lt.s32.totalorder %v2572, 0
        %v2574 = vsub.s32 0, %v2572
        %v2575 = vsel %vm2573, %v2574, %v2572
        %v2576 = vclz %v2575
        %v2577 = vsub.s32 %v2576, 2
        %vm2578 = vcmp.gt.s32.totalorder 0, %v2577
        %v2579 = vsel %vm2578, 0, %v2577
        %v2580 = vsub.s32 32, %v2579
        %v2581 = vshll.u32 %v2572, %v2579
        %v2582 = vshrl.u32 %v2564, %v2580
        %v2583 = vor.u32 %v2581, %v2582
        %v2584 = vsub.s32 4294967266, %v2579
        %v2585 = vadd.s32 %v2584, 127
        %v2586 = vshll.u32 %v2585, 23
        %v2587 = vor.u32 4788187, %v2586
        %v2588 = vand.u32 2147483647, %v2587
        %v2590 = vcvt.s32.f32 %v2583
        %v2591 = vmul.f32 %v2590, %v2588
        %v2592 = vxor.u32 %v2591, 2147483648
        %v2593 = vsel %vm2510, %v2592, %v2591
        %v2594 = vsub.s32 4, %v2570
        %v2595 = vsel %vm2510, %v2594, %v2570
        %v2596 = vsel %vm2509, %v622, %v2593
        %v2597 = vsel %vm2509, 0, %v2595
        %v2598 = vcosq.f32.pop %v2596
        %v2599 = vsinq.f32.pop %v2596
        %vm2600 = vweird.f32 %v622
        %v2601 = vadd.s32 %v2597, 3
        %v2602 = vand.u32 %v2601, 3
        %vm2603 = vcmp.lt.s32.totalorder %v2602, 2
        %vm2604 = vcmp.eq.s32.totalorder %v2602, 0
        %v2605 = vxor.u32 %v2599, 2147483648
        %v2606 = vsel %vm2604, %v2598, %v2605
        %vm2607 = vcmp.eq.s32.totalorder %v2602, 2
        %v2608 = vxor.u32 %v2598, 2147483648
        %v2609 = vsel %vm2607, %v2608, %v2599
        %v2610 = vsel %vm2603, %v2606, %v2609
        %v2611 = vsel %vm2600, nan, %v2610
        %v2612 = vand.u32 2147483647, %v623
        %vm2613 = vcmp.le.f32.partialorder %v2612, 0.7853982
        %vm2614 = vcmp.lt.s32.totalorder %v623, 0
        %v2615 = vand.u32 %v623, 2139095040
        %v2616 = vshrl.u32 %v2615, 23
        %v2617 = vsub.s32 %v2616, 127
        %v2618 = vand.u32 2147483647, %v623
        %v2619 = vand.u32 %v2618, 8388607
        %v2620 = vor.u32 %v2619, 8388608
        %v2621 = vsub.s32 0, %v2620
        %v2622 = vadd.s32 %v2617, 1
        %vm2623 = vcmp.gt.s32.totalorder %v2622, 0
        %v2624 = vsel %vm2623, %v2622, 0
        %v2625 = vshrl.u32 %v2624, 5
        %v2626 = vand.u32 %v2624, 31
        %v2627 = vsub.s32 32, %v2626
        %v2628 = vshrl.u32 683565275, %v2627
        %v2629 = vshll.u32 683565275, %v2626
        %v2630 = vshrl.u32 2475754826, %v2627
        %v2631 = vor.u32 %v2629, %v2630
        %v2632 = vshll.u32 2475754826, %v2626
        %v2633 = vshrl.u32 2131351028, %v2627
        %v2634 = vor.u32 %v2632, %v2633
        %v2635 = vshll.u32 2131351028, %v2626
        %v2636 = vshrl.u32 2102212464, %v2627
        %v2637 = vor.u32 %v2635, %v2636
        %v2638 = vshll.u32 2102212464, %v2626
        %v2639 = vshrl.u32 920167782, %v2627
        %v2640 = vor.u32 %v2638, %v2639
        %v2641 = vshll.u32 920167782, %v2626
        %v2642 = vshrl.u32 1326507024, %v2627
        %v2643 = vor.u32 %v2641, %v2642
        %vm2644 = vcmp.lt.s32.totalorder %v2625, 1
        %vm2645 = vcmp.lt.s32.totalorder %v2625, 2
        %vm2646 = vcmp.lt.s32.totalorder %v2625, 3
        %vm2647 = vcmp.lt.s32.totalorder %v2625, 4
        %v2648 = vsel %vm2644, %v2628, %v2631
        %v2649 = vsel %vm2647, %v2637, 2102212464
        %v2650 = vsel %vm2646, %v2634, %v2649
        %v2651 = vsel %vm2645, %v2648, %v2650
        %v2652 = vsel %vm2644, %v2631, %v2634
        %v2653 = vsel %vm2647, %v2640, 920167782
        %v2654 = vsel %vm2646, %v2637, %v2653
        %v2655 = vsel %vm2645, %v2652, %v2654
        %v2656 = vsel %vm2644, %v2634, %v2637
        %v2657 = vsel %vm2647, %v2643, 1326507024
        %v2658 = vsel %vm2646, %v2640, %v2657
        %v2659 = vsel %vm2645, %v2656, %v2658
        %v2660 = vshll.u32 %v2620, 8
        %v2661 = vmul.u32.u64.compose %v2660, %v2659
        %v2662 = vextract.low.u32 %v2661
        %v2663 = vextract.high.u32 %v2661
        %v2664 = vmul.u32.u64.compose %v2660, %v2655
        %v2665 = vextract.low.u32 %v2664
        %v2666 = vextract.high.u32 %v2664
        %v2667 = vmul.u32 %v2660, %v2651
        %v2668 = vadd.s32 %v2663, %v2665
        %vm2669 = vc.u32 %v2663, %v2665
        %v2670 = vadd.s32 %v2666, 1
        %v2671 = vsel %vm2669, %v2670, %v2666
        %v2672 = vadd.s32 %v2667, %v2671
        %v2673 = vadd.s32 %v2672, 536870912
        %v2674 = vshrl.u32 %v2673, 30
        %v2675 = vshll.u32 %v2674, 30
        %v2676 = vsub.s32 %v2672, %v2675
        %vm2677 = vcmp.lt.s32.totalorder %v2676, 0
        %v2678 = vsub.s32 0, %v2676
        %v2679 = vsel %vm2677, %v2678, %v2676
        %v2680 = vclz %v2679
        %v2681 = vsub.s32 %v2680, 2
        %vm2682 = vcmp.gt.s32.totalorder 0, %v2681
        %v2683 = vsel %vm2682, 0, %v2681
        %v2684 = vsub.s32 32, %v2683
        %v2685 = vshll.u32 %v2676, %v2683
        %v2686 = vshrl.u32 %v2668, %v2684
        %v2687 = vor.u32 %v2685, %v2686
        %v2688 = vsub.s32 4294967266, %v2683
        %v2689 = vadd.s32 %v2688, 127
        %v2690 = vshll.u32 %v2689, 23
        %v2691 = vor.u32 4788187, %v2690
        %v2692 = vand.u32 2147483647, %v2691
        %v2694 = vcvt.s32.f32 %v2687
        %v2695 = vmul.f32 %v2694, %v2692
        %v2696 = vxor.u32 %v2695, 2147483648
        %v2697 = vsel %vm2614, %v2696, %v2695
        %v2698 = vsub.s32 4, %v2674
        %v2699 = vsel %vm2614, %v2698, %v2674
        %v2700 = vsel %vm2613, %v623, %v2697
        %v2701 = vsel %vm2613, 0, %v2699
        %v2702 = vcosq.f32.pop %v2700
        %v2703 = vsinq.f32.pop %v2700
        %vm2704 = vweird.f32 %v623
        %v2705 = vadd.s32 %v2701, 3
        %v2706 = vand.u32 %v2705, 3
        %vm2707 = vcmp.lt.s32.totalorder %v2706, 2
        %vm2708 = vcmp.eq.s32.totalorder %v2706, 0
        %v2709 = vxor.u32 %v2703, 2147483648
        %v2710 = vsel %vm2708, %v2702, %v2709
        %vm2711 = vcmp.eq.s32.totalorder %v2706, 2
        %v2712 = vxor.u32 %v2702, 2147483648
        %v2713 = vsel %vm2711, %v2712, %v2703
        %v2714 = vsel %vm2707, %v2710, %v2713
        %v2715 = vsel %vm2704, nan, %v2714
        %v2716 = vand.u32 2147483647, %v624
        %vm2717 = vcmp.le.f32.partialorder %v2716, 0.7853982
        %vm2718 = vcmp.lt.s32.totalorder %v624, 0
        %v2719 = vand.u32 %v624, 2139095040
        %v2720 = vshrl.u32 %v2719, 23
        %v2721 = vsub.s32 %v2720, 127
        %v2722 = vand.u32 2147483647, %v624
        %v2723 = vand.u32 %v2722, 8388607
        %v2724 = vor.u32 %v2723, 8388608
        %v2725 = vsub.s32 0, %v2724
        %v2726 = vadd.s32 %v2721, 1
        %vm2727 = vcmp.gt.s32.totalorder %v2726, 0
        %v2728 = vsel %vm2727, %v2726, 0
        %v2729 = vshrl.u32 %v2728, 5
        %v2730 = vand.u32 %v2728, 31
        %v2731 = vsub.s32 32, %v2730
        %v2732 = vshrl.u32 683565275, %v2731
        %v2733 = vshll.u32 683565275, %v2730
        %v2734 = vshrl.u32 2475754826, %v2731
        %v2735 = vor.u32 %v2733, %v2734
        %v2736 = vshll.u32 2475754826, %v2730
        %v2737 = vshrl.u32 2131351028, %v2731
        %v2738 = vor.u32 %v2736, %v2737
        %v2739 = vshll.u32 2131351028, %v2730
        %v2740 = vshrl.u32 2102212464, %v2731
        %v2741 = vor.u32 %v2739, %v2740
        %v2742 = vshll.u32 2102212464, %v2730
        %v2743 = vshrl.u32 920167782, %v2731
        %v2744 = vor.u32 %v2742, %v2743
        %v2745 = vshll.u32 920167782, %v2730
        %v2746 = vshrl.u32 1326507024, %v2731
        %v2747 = vor.u32 %v2745, %v2746
        %vm2748 = vcmp.lt.s32.totalorder %v2729, 1
        %vm2749 = vcmp.lt.s32.totalorder %v2729, 2
        %vm2750 = vcmp.lt.s32.totalorder %v2729, 3
        %vm2751 = vcmp.lt.s32.totalorder %v2729, 4
        %v2752 = vsel %vm2748, %v2732, %v2735
        %v2753 = vsel %vm2751, %v2741, 2102212464
        %v2754 = vsel %vm2750, %v2738, %v2753
        %v2755 = vsel %vm2749, %v2752, %v2754
        %v2756 = vsel %vm2748, %v2735, %v2738
        %v2757 = vsel %vm2751, %v2744, 920167782
        %v2758 = vsel %vm2750, %v2741, %v2757
        %v2759 = vsel %vm2749, %v2756, %v2758
        %v2760 = vsel %vm2748, %v2738, %v2741
        %v2761 = vsel %vm2751, %v2747, 1326507024
        %v2762 = vsel %vm2750, %v2744, %v2761
        %v2763 = vsel %vm2749, %v2760, %v2762
        %v2764 = vshll.u32 %v2724, 8
        %v2765 = vmul.u32.u64.compose %v2764, %v2763
        %v2766 = vextract.low.u32 %v2765
        %v2767 = vextract.high.u32 %v2765
        %v2768 = vmul.u32.u64.compose %v2764, %v2759
        %v2769 = vextract.low.u32 %v2768
        %v2770 = vextract.high.u32 %v2768
        %v2771 = vmul.u32 %v2764, %v2755
        %v2772 = vadd.s32 %v2767, %v2769
        %vm2773 = vc.u32 %v2767, %v2769
        %v2774 = vadd.s32 %v2770, 1
        %v2775 = vsel %vm2773, %v2774, %v2770
        %v2776 = vadd.s32 %v2771, %v2775
        %v2777 = vadd.s32 %v2776, 536870912
        %v2778 = vshrl.u32 %v2777, 30
        %v2779 = vshll.u32 %v2778, 30
        %v2780 = vsub.s32 %v2776, %v2779
        %vm2781 = vcmp.lt.s32.totalorder %v2780, 0
        %v2782 = vsub.s32 0, %v2780
        %v2783 = vsel %vm2781, %v2782, %v2780
        %v2784 = vclz %v2783
        %v2785 = vsub.s32 %v2784, 2
        %vm2786 = vcmp.gt.s32.totalorder 0, %v2785
        %v2787 = vsel %vm2786, 0, %v2785
        %v2788 = vsub.s32 32, %v2787
        %v2789 = vshll.u32 %v2780, %v2787
        %v2790 = vshrl.u32 %v2772, %v2788
        %v2791 = vor.u32 %v2789, %v2790
        %v2792 = vsub.s32 4294967266, %v2787
        %v2793 = vadd.s32 %v2792, 127
        %v2794 = vshll.u32 %v2793, 23
        %v2795 = vor.u32 4788187, %v2794
        %v2796 = vand.u32 2147483647, %v2795
        %v2798 = vcvt.s32.f32 %v2791
        %v2799 = vmul.f32 %v2798, %v2796
        %v2800 = vxor.u32 %v2799, 2147483648
        %v2801 = vsel %vm2718, %v2800, %v2799
        %v2802 = vsub.s32 4, %v2778
        %v2803 = vsel %vm2718, %v2802, %v2778
        %v2804 = vsel %vm2717, %v624, %v2801
        %v2805 = vsel %vm2717, 0, %v2803
        %v2806 = vcosq.f32.pop %v2804
        %v2807 = vsinq.f32.pop %v2804
        %vm2808 = vweird.f32 %v624
        %v2809 = vadd.s32 %v2805, 3
        %v2810 = vand.u32 %v2809, 3
        %vm2811 = vcmp.lt.s32.totalorder %v2810, 2
        %vm2812 = vcmp.eq.s32.totalorder %v2810, 0
        %v2813 = vxor.u32 %v2807, 2147483648
        %v2814 = vsel %vm2812, %v2806, %v2813
        %vm2815 = vcmp.eq.s32.totalorder %v2810, 2
        %v2816 = vxor.u32 %v2806, 2147483648
        %v2817 = vsel %vm2815, %v2816, %v2807
        %v2818 = vsel %vm2811, %v2814, %v2817
        %v2819 = vsel %vm2808, nan, %v2818
        %v2820 = vand.u32 2147483647, %v625
        %vm2821 = vcmp.le.f32.partialorder %v2820, 0.7853982
        %vm2822 = vcmp.lt.s32.totalorder %v625, 0
        %v2823 = vand.u32 %v625, 2139095040
        %v2824 = vshrl.u32 %v2823, 23
        %v2825 = vsub.s32 %v2824, 127
        %v2826 = vand.u32 2147483647, %v625
        %v2827 = vand.u32 %v2826, 8388607
        %v2828 = vor.u32 %v2827, 8388608
        %v2829 = vsub.s32 0, %v2828
        %v2830 = vadd.s32 %v2825, 1
        %vm2831 = vcmp.gt.s32.totalorder %v2830, 0
        %v2832 = vsel %vm2831, %v2830, 0
        %v2833 = vshrl.u32 %v2832, 5
        %v2834 = vand.u32 %v2832, 31
        %v2835 = vsub.s32 32, %v2834
        %v2836 = vshrl.u32 683565275, %v2835
        %v2837 = vshll.u32 683565275, %v2834
        %v2838 = vshrl.u32 2475754826, %v2835
        %v2839 = vor.u32 %v2837, %v2838
        %v2840 = vshll.u32 2475754826, %v2834
        %v2841 = vshrl.u32 2131351028, %v2835
        %v2842 = vor.u32 %v2840, %v2841
        %v2843 = vshll.u32 2131351028, %v2834
        %v2844 = vshrl.u32 2102212464, %v2835
        %v2845 = vor.u32 %v2843, %v2844
        %v2846 = vshll.u32 2102212464, %v2834
        %v2847 = vshrl.u32 920167782, %v2835
        %v2848 = vor.u32 %v2846, %v2847
        %v2849 = vshll.u32 920167782, %v2834
        %v2850 = vshrl.u32 1326507024, %v2835
        %v2851 = vor.u32 %v2849, %v2850
        %vm2852 = vcmp.lt.s32.totalorder %v2833, 1
        %vm2853 = vcmp.lt.s32.totalorder %v2833, 2
        %vm2854 = vcmp.lt.s32.totalorder %v2833, 3
        %vm2855 = vcmp.lt.s32.totalorder %v2833, 4
        %v2856 = vsel %vm2852, %v2836, %v2839
        %v2857 = vsel %vm2855, %v2845, 2102212464
        %v2858 = vsel %vm2854, %v2842, %v2857
        %v2859 = vsel %vm2853, %v2856, %v2858
        %v2860 = vsel %vm2852, %v2839, %v2842
        %v2861 = vsel %vm2855, %v2848, 920167782
        %v2862 = vsel %vm2854, %v2845, %v2861
        %v2863 = vsel %vm2853, %v2860, %v2862
        %v2864 = vsel %vm2852, %v2842, %v2845
        %v2865 = vsel %vm2855, %v2851, 1326507024
        %v2866 = vsel %vm2854, %v2848, %v2865
        %v2867 = vsel %vm2853, %v2864, %v2866
        %v2868 = vshll.u32 %v2828, 8
        %v2869 = vmul.u32.u64.compose %v2868, %v2867
        %v2870 = vextract.low.u32 %v2869
        %v2871 = vextract.high.u32 %v2869
        %v2872 = vmul.u32.u64.compose %v2868, %v2863
        %v2873 = vextract.low.u32 %v2872
        %v2874 = vextract.high.u32 %v2872
        %v2875 = vmul.u32 %v2868, %v2859
        %v2876 = vadd.s32 %v2871, %v2873
        %vm2877 = vc.u32 %v2871, %v2873
        %v2878 = vadd.s32 %v2874, 1
        %v2879 = vsel %vm2877, %v2878, %v2874
        %v2880 = vadd.s32 %v2875, %v2879
        %v2881 = vadd.s32 %v2880, 536870912
        %v2882 = vshrl.u32 %v2881, 30
        %v2883 = vshll.u32 %v2882, 30
        %v2884 = vsub.s32 %v2880, %v2883
        %vm2885 = vcmp.lt.s32.totalorder %v2884, 0
        %v2886 = vsub.s32 0, %v2884
        %v2887 = vsel %vm2885, %v2886, %v2884
        %v2888 = vclz %v2887
        %v2889 = vsub.s32 %v2888, 2
        %vm2890 = vcmp.gt.s32.totalorder 0, %v2889
        %v2891 = vsel %vm2890, 0, %v2889
        %v2892 = vsub.s32 32, %v2891
        %v2893 = vshll.u32 %v2884, %v2891
        %v2894 = vshrl.u32 %v2876, %v2892
        %v2895 = vor.u32 %v2893, %v2894
        %v2896 = vsub.s32 4294967266, %v2891
        %v2897 = vadd.s32 %v2896, 127
        %v2898 = vshll.u32 %v2897, 23
        %v2899 = vor.u32 4788187, %v2898
        %v2900 = vand.u32 2147483647, %v2899
        %v2902 = vcvt.s32.f32 %v2895
        %v2903 = vmul.f32 %v2902, %v2900
        %v2904 = vxor.u32 %v2903, 2147483648
        %v2905 = vsel %vm2822, %v2904, %v2903
        %v2906 = vsub.s32 4, %v2882
        %v2907 = vsel %vm2822, %v2906, %v2882
        %v2908 = vsel %vm2821, %v625, %v2905
        %v2909 = vsel %vm2821, 0, %v2907
        %v2910 = vcosq.f32.pop %v2908
        %v2911 = vsinq.f32.pop %v2908
        %vm2912 = vweird.f32 %v625
        %v2913 = vadd.s32 %v2909, 3
        %v2914 = vand.u32 %v2913, 3
        %vm2915 = vcmp.lt.s32.totalorder %v2914, 2
        %vm2916 = vcmp.eq.s32.totalorder %v2914, 0
        %v2917 = vxor.u32 %v2911, 2147483648
        %v2918 = vsel %vm2916, %v2910, %v2917
        %vm2919 = vcmp.eq.s32.totalorder %v2914, 2
        %v2920 = vxor.u32 %v2910, 2147483648
        %v2921 = vsel %vm2919, %v2920, %v2911
        %v2922 = vsel %vm2915, %v2918, %v2921
        %v2923 = vsel %vm2912, nan, %v2922
        %v2924 = vand.u32 2147483647, %v626
        %vm2925 = vcmp.le.f32.partialorder %v2924, 0.7853982
        %vm2926 = vcmp.lt.s32.totalorder %v626, 0
        %v2927 = vand.u32 %v626, 2139095040
        %v2928 = vshrl.u32 %v2927, 23
        %v2929 = vsub.s32 %v2928, 127
        %v2930 = vand.u32 2147483647, %v626
        %v2931 = vand.u32 %v2930, 8388607
        %v2932 = vor.u32 %v2931, 8388608
        %v2933 = vsub.s32 0, %v2932
        %v2934 = vadd.s32 %v2929, 1
        %vm2935 = vcmp.gt.s32.totalorder %v2934, 0
        %v2936 = vsel %vm2935, %v2934, 0
        %v2937 = vshrl.u32 %v2936, 5
        %v2938 = vand.u32 %v2936, 31
        %v2939 = vsub.s32 32, %v2938
        %v2940 = vshrl.u32 683565275, %v2939
        %v2941 = vshll.u32 683565275, %v2938
        %v2942 = vshrl.u32 2475754826, %v2939
        %v2943 = vor.u32 %v2941, %v2942
        %v2944 = vshll.u32 2475754826, %v2938
        %v2945 = vshrl.u32 2131351028, %v2939
        %v2946 = vor.u32 %v2944, %v2945
        %v2947 = vshll.u32 2131351028, %v2938
        %v2948 = vshrl.u32 2102212464, %v2939
        %v2949 = vor.u32 %v2947, %v2948
        %v2950 = vshll.u32 2102212464, %v2938
        %v2951 = vshrl.u32 920167782, %v2939
        %v2952 = vor.u32 %v2950, %v2951
        %v2953 = vshll.u32 920167782, %v2938
        %v2954 = vshrl.u32 1326507024, %v2939
        %v2955 = vor.u32 %v2953, %v2954
        %vm2956 = vcmp.lt.s32.totalorder %v2937, 1
        %vm2957 = vcmp.lt.s32.totalorder %v2937, 2
        %vm2958 = vcmp.lt.s32.totalorder %v2937, 3
        %vm2959 = vcmp.lt.s32.totalorder %v2937, 4
        %v2960 = vsel %vm2956, %v2940, %v2943
        %v2961 = vsel %vm2959, %v2949, 2102212464
        %v2962 = vsel %vm2958, %v2946, %v2961
        %v2963 = vsel %vm2957, %v2960, %v2962
        %v2964 = vsel %vm2956, %v2943, %v2946
        %v2965 = vsel %vm2959, %v2952, 920167782
        %v2966 = vsel %vm2958, %v2949, %v2965
        %v2967 = vsel %vm2957, %v2964, %v2966
        %v2968 = vsel %vm2956, %v2946, %v2949
        %v2969 = vsel %vm2959, %v2955, 1326507024
        %v2970 = vsel %vm2958, %v2952, %v2969
        %v2971 = vsel %vm2957, %v2968, %v2970
        %v2972 = vshll.u32 %v2932, 8
        %v2973 = vmul.u32.u64.compose %v2972, %v2971
        %v2974 = vextract.low.u32 %v2973
        %v2975 = vextract.high.u32 %v2973
        %v2976 = vmul.u32.u64.compose %v2972, %v2967
        %v2977 = vextract.low.u32 %v2976
        %v2978 = vextract.high.u32 %v2976
        %v2979 = vmul.u32 %v2972, %v2963
        %v2980 = vadd.s32 %v2975, %v2977
        %vm2981 = vc.u32 %v2975, %v2977
        %v2982 = vadd.s32 %v2978, 1
        %v2983 = vsel %vm2981, %v2982, %v2978
        %v2984 = vadd.s32 %v2979, %v2983
        %v2985 = vadd.s32 %v2984, 536870912
        %v2986 = vshrl.u32 %v2985, 30
        %v2987 = vshll.u32 %v2986, 30
        %v2988 = vsub.s32 %v2984, %v2987
        %vm2989 = vcmp.lt.s32.totalorder %v2988, 0
        %v2990 = vsub.s32 0, %v2988
        %v2991 = vsel %vm2989, %v2990, %v2988
        %v2992 = vclz %v2991
        %v2993 = vsub.s32 %v2992, 2
        %vm2994 = vcmp.gt.s32.totalorder 0, %v2993
        %v2995 = vsel %vm2994, 0, %v2993
        %v2996 = vsub.s32 32, %v2995
        %v2997 = vshll.u32 %v2988, %v2995
        %v2998 = vshrl.u32 %v2980, %v2996
        %v2999 = vor.u32 %v2997, %v2998
        %v3000 = vsub.s32 4294967266, %v2995
        %v3001 = vadd.s32 %v3000, 127
        %v3002 = vshll.u32 %v3001, 23
        %v3003 = vor.u32 4788187, %v3002
        %v3004 = vand.u32 2147483647, %v3003
        %v3006 = vcvt.s32.f32 %v2999
        %v3007 = vmul.f32 %v3006, %v3004
        %v3008 = vxor.u32 %v3007, 2147483648
        %v3009 = vsel %vm2926, %v3008, %v3007
        %v3010 = vsub.s32 4, %v2986
        %v3011 = vsel %vm2926, %v3010, %v2986
        %v3012 = vsel %vm2925, %v626, %v3009
        %v3013 = vsel %vm2925, 0, %v3011
        %v3014 = vcosq.f32.pop %v3012
        %v3015 = vsinq.f32.pop %v3012
        %vm3016 = vweird.f32 %v626
        %v3017 = vadd.s32 %v3013, 3
        %v3018 = vand.u32 %v3017, 3
        %vm3019 = vcmp.lt.s32.totalorder %v3018, 2
        %vm3020 = vcmp.eq.s32.totalorder %v3018, 0
        %v3021 = vxor.u32 %v3015, 2147483648
        %v3022 = vsel %vm3020, %v3014, %v3021
        %vm3023 = vcmp.eq.s32.totalorder %v3018, 2
        %v3024 = vxor.u32 %v3014, 2147483648
        %v3025 = vsel %vm3023, %v3024, %v3015
        %v3026 = vsel %vm3019, %v3022, %v3025
        %v3027 = vsel %vm3016, nan, %v3026
        %v3028 = vand.u32 2147483647, %v627
        %vm3029 = vcmp.le.f32.partialorder %v3028, 0.7853982
        %vm3030 = vcmp.lt.s32.totalorder %v627, 0
        %v3031 = vand.u32 %v627, 2139095040
        %v3032 = vshrl.u32 %v3031, 23
        %v3033 = vsub.s32 %v3032, 127
        %v3034 = vand.u32 2147483647, %v627
        %v3035 = vand.u32 %v3034, 8388607
        %v3036 = vor.u32 %v3035, 8388608
        %v3037 = vsub.s32 0, %v3036
        %v3038 = vadd.s32 %v3033, 1
        %vm3039 = vcmp.gt.s32.totalorder %v3038, 0
        %v3040 = vsel %vm3039, %v3038, 0
        %v3041 = vshrl.u32 %v3040, 5
        %v3042 = vand.u32 %v3040, 31
        %v3043 = vsub.s32 32, %v3042
        %v3044 = vshrl.u32 683565275, %v3043
        %v3045 = vshll.u32 683565275, %v3042
        %v3046 = vshrl.u32 2475754826, %v3043
        %v3047 = vor.u32 %v3045, %v3046
        %v3048 = vshll.u32 2475754826, %v3042
        %v3049 = vshrl.u32 2131351028, %v3043
        %v3050 = vor.u32 %v3048, %v3049
        %v3051 = vshll.u32 2131351028, %v3042
        %v3052 = vshrl.u32 2102212464, %v3043
        %v3053 = vor.u32 %v3051, %v3052
        %v3054 = vshll.u32 2102212464, %v3042
        %v3055 = vshrl.u32 920167782, %v3043
        %v3056 = vor.u32 %v3054, %v3055
        %v3057 = vshll.u32 920167782, %v3042
        %v3058 = vshrl.u32 1326507024, %v3043
        %v3059 = vor.u32 %v3057, %v3058
        %vm3060 = vcmp.lt.s32.totalorder %v3041, 1
        %vm3061 = vcmp.lt.s32.totalorder %v3041, 2
        %vm3062 = vcmp.lt.s32.totalorder %v3041, 3
        %vm3063 = vcmp.lt.s32.totalorder %v3041, 4
        %v3064 = vsel %vm3060, %v3044, %v3047
        %v3065 = vsel %vm3063, %v3053, 2102212464
        %v3066 = vsel %vm3062, %v3050, %v3065
        %v3067 = vsel %vm3061, %v3064, %v3066
        %v3068 = vsel %vm3060, %v3047, %v3050
        %v3069 = vsel %vm3063, %v3056, 920167782
        %v3070 = vsel %vm3062, %v3053, %v3069
        %v3071 = vsel %vm3061, %v3068, %v3070
        %v3072 = vsel %vm3060, %v3050, %v3053
        %v3073 = vsel %vm3063, %v3059, 1326507024
        %v3074 = vsel %vm3062, %v3056, %v3073
        %v3075 = vsel %vm3061, %v3072, %v3074
        %v3076 = vshll.u32 %v3036, 8
        %v3077 = vmul.u32.u64.compose %v3076, %v3075
        %v3078 = vextract.low.u32 %v3077
        %v3079 = vextract.high.u32 %v3077
        %v3080 = vmul.u32.u64.compose %v3076, %v3071
        %v3081 = vextract.low.u32 %v3080
        %v3082 = vextract.high.u32 %v3080
        %v3083 = vmul.u32 %v3076, %v3067
        %v3084 = vadd.s32 %v3079, %v3081
        %vm3085 = vc.u32 %v3079, %v3081
        %v3086 = vadd.s32 %v3082, 1
        %v3087 = vsel %vm3085, %v3086, %v3082
        %v3088 = vadd.s32 %v3083, %v3087
        %v3089 = vadd.s32 %v3088, 536870912
        %v3090 = vshrl.u32 %v3089, 30
        %v3091 = vshll.u32 %v3090, 30
        %v3092 = vsub.s32 %v3088, %v3091
        %vm3093 = vcmp.lt.s32.totalorder %v3092, 0
        %v3094 = vsub.s32 0, %v3092
        %v3095 = vsel %vm3093, %v3094, %v3092
        %v3096 = vclz %v3095
        %v3097 = vsub.s32 %v3096, 2
        %vm3098 = vcmp.gt.s32.totalorder 0, %v3097
        %v3099 = vsel %vm3098, 0, %v3097
        %v3100 = vsub.s32 32, %v3099
        %v3101 = vshll.u32 %v3092, %v3099
        %v3102 = vshrl.u32 %v3084, %v3100
        %v3103 = vor.u32 %v3101, %v3102
        %v3104 = vsub.s32 4294967266, %v3099
        %v3105 = vadd.s32 %v3104, 127
        %v3106 = vshll.u32 %v3105, 23
        %v3107 = vor.u32 4788187, %v3106
        %v3108 = vand.u32 2147483647, %v3107
        %v3110 = vcvt.s32.f32 %v3103
        %v3111 = vmul.f32 %v3110, %v3108
        %v3112 = vxor.u32 %v3111, 2147483648
        %v3113 = vsel %vm3030, %v3112, %v3111
        %v3114 = vsub.s32 4, %v3090
        %v3115 = vsel %vm3030, %v3114, %v3090
        %v3116 = vsel %vm3029, %v627, %v3113
        %v3117 = vsel %vm3029, 0, %v3115
        %v3118 = vcosq.f32.pop %v3116
        %v3119 = vsinq.f32.pop %v3116
        %vm3120 = vweird.f32 %v627
        %v3121 = vadd.s32 %v3117, 3
        %v3122 = vand.u32 %v3121, 3
        %vm3123 = vcmp.lt.s32.totalorder %v3122, 2
        %vm3124 = vcmp.eq.s32.totalorder %v3122, 0
        %v3125 = vxor.u32 %v3119, 2147483648
        %v3126 = vsel %vm3124, %v3118, %v3125
        %vm3127 = vcmp.eq.s32.totalorder %v3122, 2
        %v3128 = vxor.u32 %v3118, 2147483648
        %v3129 = vsel %vm3127, %v3128, %v3119
        %v3130 = vsel %vm3123, %v3126, %v3129
        %v3131 = vsel %vm3120, nan, %v3130
        %v3132 = vand.u32 2147483647, %v628
        %vm3133 = vcmp.le.f32.partialorder %v3132, 0.7853982
        %vm3134 = vcmp.lt.s32.totalorder %v628, 0
        %v3135 = vand.u32 %v628, 2139095040
        %v3136 = vshrl.u32 %v3135, 23
        %v3137 = vsub.s32 %v3136, 127
        %v3138 = vand.u32 2147483647, %v628
        %v3139 = vand.u32 %v3138, 8388607
        %v3140 = vor.u32 %v3139, 8388608
        %v3141 = vsub.s32 0, %v3140
        %v3142 = vadd.s32 %v3137, 1
        %vm3143 = vcmp.gt.s32.totalorder %v3142, 0
        %v3144 = vsel %vm3143, %v3142, 0
        %v3145 = vshrl.u32 %v3144, 5
        %v3146 = vand.u32 %v3144, 31
        %v3147 = vsub.s32 32, %v3146
        %v3148 = vshrl.u32 683565275, %v3147
        %v3149 = vshll.u32 683565275, %v3146
        %v3150 = vshrl.u32 2475754826, %v3147
        %v3151 = vor.u32 %v3149, %v3150
        %v3152 = vshll.u32 2475754826, %v3146
        %v3153 = vshrl.u32 2131351028, %v3147
        %v3154 = vor.u32 %v3152, %v3153
        %v3155 = vshll.u32 2131351028, %v3146
        %v3156 = vshrl.u32 2102212464, %v3147
        %v3157 = vor.u32 %v3155, %v3156
        %v3158 = vshll.u32 2102212464, %v3146
        %v3159 = vshrl.u32 920167782, %v3147
        %v3160 = vor.u32 %v3158, %v3159
        %v3161 = vshll.u32 920167782, %v3146
        %v3162 = vshrl.u32 1326507024, %v3147
        %v3163 = vor.u32 %v3161, %v3162
        %vm3164 = vcmp.lt.s32.totalorder %v3145, 1
        %vm3165 = vcmp.lt.s32.totalorder %v3145, 2
        %vm3166 = vcmp.lt.s32.totalorder %v3145, 3
        %vm3167 = vcmp.lt.s32.totalorder %v3145, 4
        %v3168 = vsel %vm3164, %v3148, %v3151
        %v3169 = vsel %vm3167, %v3157, 2102212464
        %v3170 = vsel %vm3166, %v3154, %v3169
        %v3171 = vsel %vm3165, %v3168, %v3170
        %v3172 = vsel %vm3164, %v3151, %v3154
        %v3173 = vsel %vm3167, %v3160, 920167782
        %v3174 = vsel %vm3166, %v3157, %v3173
        %v3175 = vsel %vm3165, %v3172, %v3174
        %v3176 = vsel %vm3164, %v3154, %v3157
        %v3177 = vsel %vm3167, %v3163, 1326507024
        %v3178 = vsel %vm3166, %v3160, %v3177
        %v3179 = vsel %vm3165, %v3176, %v3178
        %v3180 = vshll.u32 %v3140, 8
        %v3181 = vmul.u32.u64.compose %v3180, %v3179
        %v3182 = vextract.low.u32 %v3181
        %v3183 = vextract.high.u32 %v3181
        %v3184 = vmul.u32.u64.compose %v3180, %v3175
        %v3185 = vextract.low.u32 %v3184
        %v3186 = vextract.high.u32 %v3184
        %v3187 = vmul.u32 %v3180, %v3171
        %v3188 = vadd.s32 %v3183, %v3185
        %vm3189 = vc.u32 %v3183, %v3185
        %v3190 = vadd.s32 %v3186, 1
        %v3191 = vsel %vm3189, %v3190, %v3186
        %v3192 = vadd.s32 %v3187, %v3191
        %v3193 = vadd.s32 %v3192, 536870912
        %v3194 = vshrl.u32 %v3193, 30
        %v3195 = vshll.u32 %v3194, 30
        %v3196 = vsub.s32 %v3192, %v3195
        %vm3197 = vcmp.lt.s32.totalorder %v3196, 0
        %v3198 = vsub.s32 0, %v3196
        %v3199 = vsel %vm3197, %v3198, %v3196
        %v3200 = vclz %v3199
        %v3201 = vsub.s32 %v3200, 2
        %vm3202 = vcmp.gt.s32.totalorder 0, %v3201
        %v3203 = vsel %vm3202, 0, %v3201
        %v3204 = vsub.s32 32, %v3203
        %v3205 = vshll.u32 %v3196, %v3203
        %v3206 = vshrl.u32 %v3188, %v3204
        %v3207 = vor.u32 %v3205, %v3206
        %v3208 = vsub.s32 4294967266, %v3203
        %v3209 = vadd.s32 %v3208, 127
        %v3210 = vshll.u32 %v3209, 23
        %v3211 = vor.u32 4788187, %v3210
        %v3212 = vand.u32 2147483647, %v3211
        %v3214 = vcvt.s32.f32 %v3207
        %v3215 = vmul.f32 %v3214, %v3212
        %v3216 = vxor.u32 %v3215, 2147483648
        %v3217 = vsel %vm3134, %v3216, %v3215
        %v3218 = vsub.s32 4, %v3194
        %v3219 = vsel %vm3134, %v3218, %v3194
        %v3220 = vsel %vm3133, %v628, %v3217
        %v3221 = vsel %vm3133, 0, %v3219
        %v3222 = vcosq.f32.pop %v3220
        %v3223 = vsinq.f32.pop %v3220
        %vm3224 = vweird.f32 %v628
        %v3225 = vadd.s32 %v3221, 3
        %v3226 = vand.u32 %v3225, 3
        %vm3227 = vcmp.lt.s32.totalorder %v3226, 2
        %vm3228 = vcmp.eq.s32.totalorder %v3226, 0
        %v3229 = vxor.u32 %v3223, 2147483648
        %v3230 = vsel %vm3228, %v3222, %v3229
        %vm3231 = vcmp.eq.s32.totalorder %v3226, 2
        %v3232 = vxor.u32 %v3222, 2147483648
        %v3233 = vsel %vm3231, %v3232, %v3223
        %v3234 = vsel %vm3227, %v3230, %v3233
        %v3235 = vsel %vm3224, nan, %v3234
        %v3236 = vand.u32 2147483647, %v629
        %vm3237 = vcmp.le.f32.partialorder %v3236, 0.7853982
        %vm3238 = vcmp.lt.s32.totalorder %v629, 0
        %v3239 = vand.u32 %v629, 2139095040
        %v3240 = vshrl.u32 %v3239, 23
        %v3241 = vsub.s32 %v3240, 127
        %v3242 = vand.u32 2147483647, %v629
        %v3243 = vand.u32 %v3242, 8388607
        %v3244 = vor.u32 %v3243, 8388608
        %v3245 = vsub.s32 0, %v3244
        %v3246 = vadd.s32 %v3241, 1
        %vm3247 = vcmp.gt.s32.totalorder %v3246, 0
        %v3248 = vsel %vm3247, %v3246, 0
        %v3249 = vshrl.u32 %v3248, 5
        %v3250 = vand.u32 %v3248, 31
        %v3251 = vsub.s32 32, %v3250
        %v3252 = vshrl.u32 683565275, %v3251
        %v3253 = vshll.u32 683565275, %v3250
        %v3254 = vshrl.u32 2475754826, %v3251
        %v3255 = vor.u32 %v3253, %v3254
        %v3256 = vshll.u32 2475754826, %v3250
        %v3257 = vshrl.u32 2131351028, %v3251
        %v3258 = vor.u32 %v3256, %v3257
        %v3259 = vshll.u32 2131351028, %v3250
        %v3260 = vshrl.u32 2102212464, %v3251
        %v3261 = vor.u32 %v3259, %v3260
        %v3262 = vshll.u32 2102212464, %v3250
        %v3263 = vshrl.u32 920167782, %v3251
        %v3264 = vor.u32 %v3262, %v3263
        %v3265 = vshll.u32 920167782, %v3250
        %v3266 = vshrl.u32 1326507024, %v3251
        %v3267 = vor.u32 %v3265, %v3266
        %vm3268 = vcmp.lt.s32.totalorder %v3249, 1
        %vm3269 = vcmp.lt.s32.totalorder %v3249, 2
        %vm3270 = vcmp.lt.s32.totalorder %v3249, 3
        %vm3271 = vcmp.lt.s32.totalorder %v3249, 4
        %v3272 = vsel %vm3268, %v3252, %v3255
        %v3273 = vsel %vm3271, %v3261, 2102212464
        %v3274 = vsel %vm3270, %v3258, %v3273
        %v3275 = vsel %vm3269, %v3272, %v3274
        %v3276 = vsel %vm3268, %v3255, %v3258
        %v3277 = vsel %vm3271, %v3264, 920167782
        %v3278 = vsel %vm3270, %v3261, %v3277
        %v3279 = vsel %vm3269, %v3276, %v3278
        %v3280 = vsel %vm3268, %v3258, %v3261
        %v3281 = vsel %vm3271, %v3267, 1326507024
        %v3282 = vsel %vm3270, %v3264, %v3281
        %v3283 = vsel %vm3269, %v3280, %v3282
        %v3284 = vshll.u32 %v3244, 8
        %v3285 = vmul.u32.u64.compose %v3284, %v3283
        %v3286 = vextract.low.u32 %v3285
        %v3287 = vextract.high.u32 %v3285
        %v3288 = vmul.u32.u64.compose %v3284, %v3279
        %v3289 = vextract.low.u32 %v3288
        %v3290 = vextract.high.u32 %v3288
        %v3291 = vmul.u32 %v3284, %v3275
        %v3292 = vadd.s32 %v3287, %v3289
        %vm3293 = vc.u32 %v3287, %v3289
        %v3294 = vadd.s32 %v3290, 1
        %v3295 = vsel %vm3293, %v3294, %v3290
        %v3296 = vadd.s32 %v3291, %v3295
        %v3297 = vadd.s32 %v3296, 536870912
        %v3298 = vshrl.u32 %v3297, 30
        %v3299 = vshll.u32 %v3298, 30
        %v3300 = vsub.s32 %v3296, %v3299
        %vm3301 = vcmp.lt.s32.totalorder %v3300, 0
        %v3302 = vsub.s32 0, %v3300
        %v3303 = vsel %vm3301, %v3302, %v3300
        %v3304 = vclz %v3303
        %v3305 = vsub.s32 %v3304, 2
        %vm3306 = vcmp.gt.s32.totalorder 0, %v3305
        %v3307 = vsel %vm3306, 0, %v3305
        %v3308 = vsub.s32 32, %v3307
        %v3309 = vshll.u32 %v3300, %v3307
        %v3310 = vshrl.u32 %v3292, %v3308
        %v3311 = vor.u32 %v3309, %v3310
        %v3312 = vsub.s32 4294967266, %v3307
        %v3313 = vadd.s32 %v3312, 127
        %v3314 = vshll.u32 %v3313, 23
        %v3315 = vor.u32 4788187, %v3314
        %v3316 = vand.u32 2147483647, %v3315
        %v3318 = vcvt.s32.f32 %v3311
        %v3319 = vmul.f32 %v3318, %v3316
        %v3320 = vxor.u32 %v3319, 2147483648
        %v3321 = vsel %vm3238, %v3320, %v3319
        %v3322 = vsub.s32 4, %v3298
        %v3323 = vsel %vm3238, %v3322, %v3298
        %v3324 = vsel %vm3237, %v629, %v3321
        %v3325 = vsel %vm3237, 0, %v3323
        %v3326 = vcosq.f32.pop %v3324
        %v3327 = vsinq.f32.pop %v3324
        %vm3328 = vweird.f32 %v629
        %v3329 = vadd.s32 %v3325, 3
        %v3330 = vand.u32 %v3329, 3
        %vm3331 = vcmp.lt.s32.totalorder %v3330, 2
        %vm3332 = vcmp.eq.s32.totalorder %v3330, 0
        %v3333 = vxor.u32 %v3327, 2147483648
        %v3334 = vsel %vm3332, %v3326, %v3333
        %vm3335 = vcmp.eq.s32.totalorder %v3330, 2
        %v3336 = vxor.u32 %v3326, 2147483648
        %v3337 = vsel %vm3335, %v3336, %v3327
        %v3338 = vsel %vm3331, %v3334, %v3337
        %v3339 = vsel %vm3328, nan, %v3338
        %v3340 = vand.u32 2147483647, %v630
        %vm3341 = vcmp.le.f32.partialorder %v3340, 0.7853982
        %vm3342 = vcmp.lt.s32.totalorder %v630, 0
        %v3343 = vand.u32 %v630, 2139095040
        %v3344 = vshrl.u32 %v3343, 23
        %v3345 = vsub.s32 %v3344, 127
        %v3346 = vand.u32 2147483647, %v630
        %v3347 = vand.u32 %v3346, 8388607
        %v3348 = vor.u32 %v3347, 8388608
        %v3349 = vsub.s32 0, %v3348
        %v3350 = vadd.s32 %v3345, 1
        %vm3351 = vcmp.gt.s32.totalorder %v3350, 0
        %v3352 = vsel %vm3351, %v3350, 0
        %v3353 = vshrl.u32 %v3352, 5
        %v3354 = vand.u32 %v3352, 31
        %v3355 = vsub.s32 32, %v3354
        %v3356 = vshrl.u32 683565275, %v3355
        %v3357 = vshll.u32 683565275, %v3354
        %v3358 = vshrl.u32 2475754826, %v3355
        %v3359 = vor.u32 %v3357, %v3358
        %v3360 = vshll.u32 2475754826, %v3354
        %v3361 = vshrl.u32 2131351028, %v3355
        %v3362 = vor.u32 %v3360, %v3361
        %v3363 = vshll.u32 2131351028, %v3354
        %v3364 = vshrl.u32 2102212464, %v3355
        %v3365 = vor.u32 %v3363, %v3364
        %v3366 = vshll.u32 2102212464, %v3354
        %v3367 = vshrl.u32 920167782, %v3355
        %v3368 = vor.u32 %v3366, %v3367
        %v3369 = vshll.u32 920167782, %v3354
        %v3370 = vshrl.u32 1326507024, %v3355
        %v3371 = vor.u32 %v3369, %v3370
        %vm3372 = vcmp.lt.s32.totalorder %v3353, 1
        %vm3373 = vcmp.lt.s32.totalorder %v3353, 2
        %vm3374 = vcmp.lt.s32.totalorder %v3353, 3
        %vm3375 = vcmp.lt.s32.totalorder %v3353, 4
        %v3376 = vsel %vm3372, %v3356, %v3359
        %v3377 = vsel %vm3375, %v3365, 2102212464
        %v3378 = vsel %vm3374, %v3362, %v3377
        %v3379 = vsel %vm3373, %v3376, %v3378
        %v3380 = vsel %vm3372, %v3359, %v3362
        %v3381 = vsel %vm3375, %v3368, 920167782
        %v3382 = vsel %vm3374, %v3365, %v3381
        %v3383 = vsel %vm3373, %v3380, %v3382
        %v3384 = vsel %vm3372, %v3362, %v3365
        %v3385 = vsel %vm3375, %v3371, 1326507024
        %v3386 = vsel %vm3374, %v3368, %v3385
        %v3387 = vsel %vm3373, %v3384, %v3386
        %v3388 = vshll.u32 %v3348, 8
        %v3389 = vmul.u32.u64.compose %v3388, %v3387
        %v3390 = vextract.low.u32 %v3389
        %v3391 = vextract.high.u32 %v3389
        %v3392 = vmul.u32.u64.compose %v3388, %v3383
        %v3393 = vextract.low.u32 %v3392
        %v3394 = vextract.high.u32 %v3392
        %v3395 = vmul.u32 %v3388, %v3379
        %v3396 = vadd.s32 %v3391, %v3393
        %vm3397 = vc.u32 %v3391, %v3393
        %v3398 = vadd.s32 %v3394, 1
        %v3399 = vsel %vm3397, %v3398, %v3394
        %v3400 = vadd.s32 %v3395, %v3399
        %v3401 = vadd.s32 %v3400, 536870912
        %v3402 = vshrl.u32 %v3401, 30
        %v3403 = vshll.u32 %v3402, 30
        %v3404 = vsub.s32 %v3400, %v3403
        %vm3405 = vcmp.lt.s32.totalorder %v3404, 0
        %v3406 = vsub.s32 0, %v3404
        %v3407 = vsel %vm3405, %v3406, %v3404
        %v3408 = vclz %v3407
        %v3409 = vsub.s32 %v3408, 2
        %vm3410 = vcmp.gt.s32.totalorder 0, %v3409
        %v3411 = vsel %vm3410, 0, %v3409
        %v3412 = vsub.s32 32, %v3411
        %v3413 = vshll.u32 %v3404, %v3411
        %v3414 = vshrl.u32 %v3396, %v3412
        %v3415 = vor.u32 %v3413, %v3414
        %v3416 = vsub.s32 4294967266, %v3411
        %v3417 = vadd.s32 %v3416, 127
        %v3418 = vshll.u32 %v3417, 23
        %v3419 = vor.u32 4788187, %v3418
        %v3420 = vand.u32 2147483647, %v3419
        %v3422 = vcvt.s32.f32 %v3415
        %v3423 = vmul.f32 %v3422, %v3420
        %v3424 = vxor.u32 %v3423, 2147483648
        %v3425 = vsel %vm3342, %v3424, %v3423
        %v3426 = vsub.s32 4, %v3402
        %v3427 = vsel %vm3342, %v3426, %v3402
        %v3428 = vsel %vm3341, %v630, %v3425
        %v3429 = vsel %vm3341, 0, %v3427
        %v3430 = vcosq.f32.pop %v3428
        %v3431 = vsinq.f32.pop %v3428
        %vm3432 = vweird.f32 %v630
        %v3433 = vadd.s32 %v3429, 3
        %v3434 = vand.u32 %v3433, 3
        %vm3435 = vcmp.lt.s32.totalorder %v3434, 2
        %vm3436 = vcmp.eq.s32.totalorder %v3434, 0
        %v3437 = vxor.u32 %v3431, 2147483648
        %v3438 = vsel %vm3436, %v3430, %v3437
        %vm3439 = vcmp.eq.s32.totalorder %v3434, 2
        %v3440 = vxor.u32 %v3430, 2147483648
        %v3441 = vsel %vm3439, %v3440, %v3431
        %v3442 = vsel %vm3435, %v3438, %v3441
        %v3443 = vsel %vm3432, nan, %v3442
        %v3444 = vand.u32 2147483647, %v631
        %vm3445 = vcmp.le.f32.partialorder %v3444, 0.7853982
        %vm3446 = vcmp.lt.s32.totalorder %v631, 0
        %v3447 = vand.u32 %v631, 2139095040
        %v3448 = vshrl.u32 %v3447, 23
        %v3449 = vsub.s32 %v3448, 127
        %v3450 = vand.u32 2147483647, %v631
        %v3451 = vand.u32 %v3450, 8388607
        %v3452 = vor.u32 %v3451, 8388608
        %v3453 = vsub.s32 0, %v3452
        %v3454 = vadd.s32 %v3449, 1
        %vm3455 = vcmp.gt.s32.totalorder %v3454, 0
        %v3456 = vsel %vm3455, %v3454, 0
        %v3457 = vshrl.u32 %v3456, 5
        %v3458 = vand.u32 %v3456, 31
        %v3459 = vsub.s32 32, %v3458
        %v3460 = vshrl.u32 683565275, %v3459
        %v3461 = vshll.u32 683565275, %v3458
        %v3462 = vshrl.u32 2475754826, %v3459
        %v3463 = vor.u32 %v3461, %v3462
        %v3464 = vshll.u32 2475754826, %v3458
        %v3465 = vshrl.u32 2131351028, %v3459
        %v3466 = vor.u32 %v3464, %v3465
        %v3467 = vshll.u32 2131351028, %v3458
        %v3468 = vshrl.u32 2102212464, %v3459
        %v3469 = vor.u32 %v3467, %v3468
        %v3470 = vshll.u32 2102212464, %v3458
        %v3471 = vshrl.u32 920167782, %v3459
        %v3472 = vor.u32 %v3470, %v3471
        %v3473 = vshll.u32 920167782, %v3458
        %v3474 = vshrl.u32 1326507024, %v3459
        %v3475 = vor.u32 %v3473, %v3474
        %vm3476 = vcmp.lt.s32.totalorder %v3457, 1
        %vm3477 = vcmp.lt.s32.totalorder %v3457, 2
        %vm3478 = vcmp.lt.s32.totalorder %v3457, 3
        %vm3479 = vcmp.lt.s32.totalorder %v3457, 4
        %v3480 = vsel %vm3476, %v3460, %v3463
        %v3481 = vsel %vm3479, %v3469, 2102212464
        %v3482 = vsel %vm3478, %v3466, %v3481
        %v3483 = vsel %vm3477, %v3480, %v3482
        %v3484 = vsel %vm3476, %v3463, %v3466
        %v3485 = vsel %vm3479, %v3472, 920167782
        %v3486 = vsel %vm3478, %v3469, %v3485
        %v3487 = vsel %vm3477, %v3484, %v3486
        %v3488 = vsel %vm3476, %v3466, %v3469
        %v3489 = vsel %vm3479, %v3475, 1326507024
        %v3490 = vsel %vm3478, %v3472, %v3489
        %v3491 = vsel %vm3477, %v3488, %v3490
        %v3492 = vshll.u32 %v3452, 8
        %v3493 = vmul.u32.u64.compose %v3492, %v3491
        %v3494 = vextract.low.u32 %v3493
        %v3495 = vextract.high.u32 %v3493
        %v3496 = vmul.u32.u64.compose %v3492, %v3487
        %v3497 = vextract.low.u32 %v3496
        %v3498 = vextract.high.u32 %v3496
        %v3499 = vmul.u32 %v3492, %v3483
        %v3500 = vadd.s32 %v3495, %v3497
        %vm3501 = vc.u32 %v3495, %v3497
        %v3502 = vadd.s32 %v3498, 1
        %v3503 = vsel %vm3501, %v3502, %v3498
        %v3504 = vadd.s32 %v3499, %v3503
        %v3505 = vadd.s32 %v3504, 536870912
        %v3506 = vshrl.u32 %v3505, 30
        %v3507 = vshll.u32 %v3506, 30
        %v3508 = vsub.s32 %v3504, %v3507
        %vm3509 = vcmp.lt.s32.totalorder %v3508, 0
        %v3510 = vsub.s32 0, %v3508
        %v3511 = vsel %vm3509, %v3510, %v3508
        %v3512 = vclz %v3511
        %v3513 = vsub.s32 %v3512, 2
        %vm3514 = vcmp.gt.s32.totalorder 0, %v3513
        %v3515 = vsel %vm3514, 0, %v3513
        %v3516 = vsub.s32 32, %v3515
        %v3517 = vshll.u32 %v3508, %v3515
        %v3518 = vshrl.u32 %v3500, %v3516
        %v3519 = vor.u32 %v3517, %v3518
        %v3520 = vsub.s32 4294967266, %v3515
        %v3521 = vadd.s32 %v3520, 127
        %v3522 = vshll.u32 %v3521, 23
        %v3523 = vor.u32 4788187, %v3522
        %v3524 = vand.u32 2147483647, %v3523
        %v3526 = vcvt.s32.f32 %v3519
        %v3527 = vmul.f32 %v3526, %v3524
        %v3528 = vxor.u32 %v3527, 2147483648
        %v3529 = vsel %vm3446, %v3528, %v3527
        %v3530 = vsub.s32 4, %v3506
        %v3531 = vsel %vm3446, %v3530, %v3506
        %v3532 = vsel %vm3445, %v631, %v3529
        %v3533 = vsel %vm3445, 0, %v3531
        %v3534 = vcosq.f32.pop %v3532
        %v3535 = vsinq.f32.pop %v3532
        %vm3536 = vweird.f32 %v631
        %v3537 = vadd.s32 %v3533, 3
        %v3538 = vand.u32 %v3537, 3
        %vm3539 = vcmp.lt.s32.totalorder %v3538, 2
        %vm3540 = vcmp.eq.s32.totalorder %v3538, 0
        %v3541 = vxor.u32 %v3535, 2147483648
        %v3542 = vsel %vm3540, %v3534, %v3541
        %vm3543 = vcmp.eq.s32.totalorder %v3538, 2
        %v3544 = vxor.u32 %v3534, 2147483648
        %v3545 = vsel %vm3543, %v3544, %v3535
        %v3546 = vsel %vm3539, %v3542, %v3545
        %v3547 = vsel %vm3536, nan, %v3546
        %v3548 = vand.u32 2147483647, %v632
        %vm3549 = vcmp.le.f32.partialorder %v3548, 0.7853982
        %vm3550 = vcmp.lt.s32.totalorder %v632, 0
        %v3551 = vand.u32 %v632, 2139095040
        %v3552 = vshrl.u32 %v3551, 23
        %v3553 = vsub.s32 %v3552, 127
        %v3554 = vand.u32 2147483647, %v632
        %v3555 = vand.u32 %v3554, 8388607
        %v3556 = vor.u32 %v3555, 8388608
        %v3557 = vsub.s32 0, %v3556
        %v3558 = vadd.s32 %v3553, 1
        %vm3559 = vcmp.gt.s32.totalorder %v3558, 0
        %v3560 = vsel %vm3559, %v3558, 0
        %v3561 = vshrl.u32 %v3560, 5
        %v3562 = vand.u32 %v3560, 31
        %v3563 = vsub.s32 32, %v3562
        %v3564 = vshrl.u32 683565275, %v3563
        %v3565 = vshll.u32 683565275, %v3562
        %v3566 = vshrl.u32 2475754826, %v3563
        %v3567 = vor.u32 %v3565, %v3566
        %v3568 = vshll.u32 2475754826, %v3562
        %v3569 = vshrl.u32 2131351028, %v3563
        %v3570 = vor.u32 %v3568, %v3569
        %v3571 = vshll.u32 2131351028, %v3562
        %v3572 = vshrl.u32 2102212464, %v3563
        %v3573 = vor.u32 %v3571, %v3572
        %v3574 = vshll.u32 2102212464, %v3562
        %v3575 = vshrl.u32 920167782, %v3563
        %v3576 = vor.u32 %v3574, %v3575
        %v3577 = vshll.u32 920167782, %v3562
        %v3578 = vshrl.u32 1326507024, %v3563
        %v3579 = vor.u32 %v3577, %v3578
        %vm3580 = vcmp.lt.s32.totalorder %v3561, 1
        %vm3581 = vcmp.lt.s32.totalorder %v3561, 2
        %vm3582 = vcmp.lt.s32.totalorder %v3561, 3
        %vm3583 = vcmp.lt.s32.totalorder %v3561, 4
        %v3584 = vsel %vm3580, %v3564, %v3567
        %v3585 = vsel %vm3583, %v3573, 2102212464
        %v3586 = vsel %vm3582, %v3570, %v3585
        %v3587 = vsel %vm3581, %v3584, %v3586
        %v3588 = vsel %vm3580, %v3567, %v3570
        %v3589 = vsel %vm3583, %v3576, 920167782
        %v3590 = vsel %vm3582, %v3573, %v3589
        %v3591 = vsel %vm3581, %v3588, %v3590
        %v3592 = vsel %vm3580, %v3570, %v3573
        %v3593 = vsel %vm3583, %v3579, 1326507024
        %v3594 = vsel %vm3582, %v3576, %v3593
        %v3595 = vsel %vm3581, %v3592, %v3594
        %v3596 = vshll.u32 %v3556, 8
        %v3597 = vmul.u32.u64.compose %v3596, %v3595
        %v3598 = vextract.low.u32 %v3597
        %v3599 = vextract.high.u32 %v3597
        %v3600 = vmul.u32.u64.compose %v3596, %v3591
        %v3601 = vextract.low.u32 %v3600
        %v3602 = vextract.high.u32 %v3600
        %v3603 = vmul.u32 %v3596, %v3587
        %v3604 = vadd.s32 %v3599, %v3601
        %vm3605 = vc.u32 %v3599, %v3601
        %v3606 = vadd.s32 %v3602, 1
        %v3607 = vsel %vm3605, %v3606, %v3602
        %v3608 = vadd.s32 %v3603, %v3607
        %v3609 = vadd.s32 %v3608, 536870912
        %v3610 = vshrl.u32 %v3609, 30
        %v3611 = vshll.u32 %v3610, 30
        %v3612 = vsub.s32 %v3608, %v3611
        %vm3613 = vcmp.lt.s32.totalorder %v3612, 0
        %v3614 = vsub.s32 0, %v3612
        %v3615 = vsel %vm3613, %v3614, %v3612
        %v3616 = vclz %v3615
        %v3617 = vsub.s32 %v3616, 2
        %vm3618 = vcmp.gt.s32.totalorder 0, %v3617
        %v3619 = vsel %vm3618, 0, %v3617
        %v3620 = vsub.s32 32, %v3619
        %v3621 = vshll.u32 %v3612, %v3619
        %v3622 = vshrl.u32 %v3604, %v3620
        %v3623 = vor.u32 %v3621, %v3622
        %v3624 = vsub.s32 4294967266, %v3619
        %v3625 = vadd.s32 %v3624, 127
        %v3626 = vshll.u32 %v3625, 23
        %v3627 = vor.u32 4788187, %v3626
        %v3628 = vand.u32 2147483647, %v3627
        %v3630 = vcvt.s32.f32 %v3623
        %v3631 = vmul.f32 %v3630, %v3628
        %v3632 = vxor.u32 %v3631, 2147483648
        %v3633 = vsel %vm3550, %v3632, %v3631
        %v3634 = vsub.s32 4, %v3610
        %v3635 = vsel %vm3550, %v3634, %v3610
        %v3636 = vsel %vm3549, %v632, %v3633
        %v3637 = vsel %vm3549, 0, %v3635
        %v3638 = vcosq.f32.pop %v3636
        %v3639 = vsinq.f32.pop %v3636
        %vm3640 = vweird.f32 %v632
        %v3641 = vadd.s32 %v3637, 3
        %v3642 = vand.u32 %v3641, 3
        %vm3643 = vcmp.lt.s32.totalorder %v3642, 2
        %vm3644 = vcmp.eq.s32.totalorder %v3642, 0
        %v3645 = vxor.u32 %v3639, 2147483648
        %v3646 = vsel %vm3644, %v3638, %v3645
        %vm3647 = vcmp.eq.s32.totalorder %v3642, 2
        %v3648 = vxor.u32 %v3638, 2147483648
        %v3649 = vsel %vm3647, %v3648, %v3639
        %v3650 = vsel %vm3643, %v3646, %v3649
        %v3651 = vsel %vm3640, nan, %v3650
        %v3652 = vand.u32 2147483647, %v633
        %vm3653 = vcmp.le.f32.partialorder %v3652, 0.7853982
        %vm3654 = vcmp.lt.s32.totalorder %v633, 0
        %v3655 = vand.u32 %v633, 2139095040
        %v3656 = vshrl.u32 %v3655, 23
        %v3657 = vsub.s32 %v3656, 127
        %v3658 = vand.u32 2147483647, %v633
        %v3659 = vand.u32 %v3658, 8388607
        %v3660 = vor.u32 %v3659, 8388608
        %v3661 = vsub.s32 0, %v3660
        %v3662 = vadd.s32 %v3657, 1
        %vm3663 = vcmp.gt.s32.totalorder %v3662, 0
        %v3664 = vsel %vm3663, %v3662, 0
        %v3665 = vshrl.u32 %v3664, 5
        %v3666 = vand.u32 %v3664, 31
        %v3667 = vsub.s32 32, %v3666
        %v3668 = vshrl.u32 683565275, %v3667
        %v3669 = vshll.u32 683565275, %v3666
        %v3670 = vshrl.u32 2475754826, %v3667
        %v3671 = vor.u32 %v3669, %v3670
        %v3672 = vshll.u32 2475754826, %v3666
        %v3673 = vshrl.u32 2131351028, %v3667
        %v3674 = vor.u32 %v3672, %v3673
        %v3675 = vshll.u32 2131351028, %v3666
        %v3676 = vshrl.u32 2102212464, %v3667
        %v3677 = vor.u32 %v3675, %v3676
        %v3678 = vshll.u32 2102212464, %v3666
        %v3679 = vshrl.u32 920167782, %v3667
        %v3680 = vor.u32 %v3678, %v3679
        %v3681 = vshll.u32 920167782, %v3666
        %v3682 = vshrl.u32 1326507024, %v3667
        %v3683 = vor.u32 %v3681, %v3682
        %vm3684 = vcmp.lt.s32.totalorder %v3665, 1
        %vm3685 = vcmp.lt.s32.totalorder %v3665, 2
        %vm3686 = vcmp.lt.s32.totalorder %v3665, 3
        %vm3687 = vcmp.lt.s32.totalorder %v3665, 4
        %v3688 = vsel %vm3684, %v3668, %v3671
        %v3689 = vsel %vm3687, %v3677, 2102212464
        %v3690 = vsel %vm3686, %v3674, %v3689
        %v3691 = vsel %vm3685, %v3688, %v3690
        %v3692 = vsel %vm3684, %v3671, %v3674
        %v3693 = vsel %vm3687, %v3680, 920167782
        %v3694 = vsel %vm3686, %v3677, %v3693
        %v3695 = vsel %vm3685, %v3692, %v3694
        %v3696 = vsel %vm3684, %v3674, %v3677
        %v3697 = vsel %vm3687, %v3683, 1326507024
        %v3698 = vsel %vm3686, %v3680, %v3697
        %v3699 = vsel %vm3685, %v3696, %v3698
        %v3700 = vshll.u32 %v3660, 8
        %v3701 = vmul.u32.u64.compose %v3700, %v3699
        %v3702 = vextract.low.u32 %v3701
        %v3703 = vextract.high.u32 %v3701
        %v3704 = vmul.u32.u64.compose %v3700, %v3695
        %v3705 = vextract.low.u32 %v3704
        %v3706 = vextract.high.u32 %v3704
        %v3707 = vmul.u32 %v3700, %v3691
        %v3708 = vadd.s32 %v3703, %v3705
        %vm3709 = vc.u32 %v3703, %v3705
        %v3710 = vadd.s32 %v3706, 1
        %v3711 = vsel %vm3709, %v3710, %v3706
        %v3712 = vadd.s32 %v3707, %v3711
        %v3713 = vadd.s32 %v3712, 536870912
        %v3714 = vshrl.u32 %v3713, 30
        %v3715 = vshll.u32 %v3714, 30
        %v3716 = vsub.s32 %v3712, %v3715
        %vm3717 = vcmp.lt.s32.totalorder %v3716, 0
        %v3718 = vsub.s32 0, %v3716
        %v3719 = vsel %vm3717, %v3718, %v3716
        %v3720 = vclz %v3719
        %v3721 = vsub.s32 %v3720, 2
        %vm3722 = vcmp.gt.s32.totalorder 0, %v3721
        %v3723 = vsel %vm3722, 0, %v3721
        %v3724 = vsub.s32 32, %v3723
        %v3725 = vshll.u32 %v3716, %v3723
        %v3726 = vshrl.u32 %v3708, %v3724
        %v3727 = vor.u32 %v3725, %v3726
        %v3728 = vsub.s32 4294967266, %v3723
        %v3729 = vadd.s32 %v3728, 127
        %v3730 = vshll.u32 %v3729, 23
        %v3731 = vor.u32 4788187, %v3730
        %v3732 = vand.u32 2147483647, %v3731
        %v3734 = vcvt.s32.f32 %v3727
        %v3735 = vmul.f32 %v3734, %v3732
        %v3736 = vxor.u32 %v3735, 2147483648
        %v3737 = vsel %vm3654, %v3736, %v3735
        %v3738 = vsub.s32 4, %v3714
        %v3739 = vsel %vm3654, %v3738, %v3714
        %v3740 = vsel %vm3653, %v633, %v3737
        %v3741 = vsel %vm3653, 0, %v3739
        %v3742 = vcosq.f32.pop %v3740
        %v3743 = vsinq.f32.pop %v3740
        %vm3744 = vweird.f32 %v633
        %v3745 = vadd.s32 %v3741, 3
        %v3746 = vand.u32 %v3745, 3
        %vm3747 = vcmp.lt.s32.totalorder %v3746, 2
        %vm3748 = vcmp.eq.s32.totalorder %v3746, 0
        %v3749 = vxor.u32 %v3743, 2147483648
        %v3750 = vsel %vm3748, %v3742, %v3749
        %vm3751 = vcmp.eq.s32.totalorder %v3746, 2
        %v3752 = vxor.u32 %v3742, 2147483648
        %v3753 = vsel %vm3751, %v3752, %v3743
        %v3754 = vsel %vm3747, %v3750, %v3753
        %v3755 = vsel %vm3744, nan, %v3754
        %v3756 = vand.u32 2147483647, %v634
        %vm3757 = vcmp.le.f32.partialorder %v3756, 0.7853982
        %vm3758 = vcmp.lt.s32.totalorder %v634, 0
        %v3759 = vand.u32 %v634, 2139095040
        %v3760 = vshrl.u32 %v3759, 23
        %v3761 = vsub.s32 %v3760, 127
        %v3762 = vand.u32 2147483647, %v634
        %v3763 = vand.u32 %v3762, 8388607
        %v3764 = vor.u32 %v3763, 8388608
        %v3765 = vsub.s32 0, %v3764
        %v3766 = vadd.s32 %v3761, 1
        %vm3767 = vcmp.gt.s32.totalorder %v3766, 0
        %v3768 = vsel %vm3767, %v3766, 0
        %v3769 = vshrl.u32 %v3768, 5
        %v3770 = vand.u32 %v3768, 31
        %v3771 = vsub.s32 32, %v3770
        %v3772 = vshrl.u32 683565275, %v3771
        %v3773 = vshll.u32 683565275, %v3770
        %v3774 = vshrl.u32 2475754826, %v3771
        %v3775 = vor.u32 %v3773, %v3774
        %v3776 = vshll.u32 2475754826, %v3770
        %v3777 = vshrl.u32 2131351028, %v3771
        %v3778 = vor.u32 %v3776, %v3777
        %v3779 = vshll.u32 2131351028, %v3770
        %v3780 = vshrl.u32 2102212464, %v3771
        %v3781 = vor.u32 %v3779, %v3780
        %v3782 = vshll.u32 2102212464, %v3770
        %v3783 = vshrl.u32 920167782, %v3771
        %v3784 = vor.u32 %v3782, %v3783
        %v3785 = vshll.u32 920167782, %v3770
        %v3786 = vshrl.u32 1326507024, %v3771
        %v3787 = vor.u32 %v3785, %v3786
        %vm3788 = vcmp.lt.s32.totalorder %v3769, 1
        %vm3789 = vcmp.lt.s32.totalorder %v3769, 2
        %vm3790 = vcmp.lt.s32.totalorder %v3769, 3
        %vm3791 = vcmp.lt.s32.totalorder %v3769, 4
        %v3792 = vsel %vm3788, %v3772, %v3775
        %v3793 = vsel %vm3791, %v3781, 2102212464
        %v3794 = vsel %vm3790, %v3778, %v3793
        %v3795 = vsel %vm3789, %v3792, %v3794
        %v3796 = vsel %vm3788, %v3775, %v3778
        %v3797 = vsel %vm3791, %v3784, 920167782
        %v3798 = vsel %vm3790, %v3781, %v3797
        %v3799 = vsel %vm3789, %v3796, %v3798
        %v3800 = vsel %vm3788, %v3778, %v3781
        %v3801 = vsel %vm3791, %v3787, 1326507024
        %v3802 = vsel %vm3790, %v3784, %v3801
        %v3803 = vsel %vm3789, %v3800, %v3802
        %v3804 = vshll.u32 %v3764, 8
        %v3805 = vmul.u32.u64.compose %v3804, %v3803
        %v3806 = vextract.low.u32 %v3805
        %v3807 = vextract.high.u32 %v3805
        %v3808 = vmul.u32.u64.compose %v3804, %v3799
        %v3809 = vextract.low.u32 %v3808
        %v3810 = vextract.high.u32 %v3808
        %v3811 = vmul.u32 %v3804, %v3795
        %v3812 = vadd.s32 %v3807, %v3809
        %vm3813 = vc.u32 %v3807, %v3809
        %v3814 = vadd.s32 %v3810, 1
        %v3815 = vsel %vm3813, %v3814, %v3810
        %v3816 = vadd.s32 %v3811, %v3815
        %v3817 = vadd.s32 %v3816, 536870912
        %v3818 = vshrl.u32 %v3817, 30
        %v3819 = vshll.u32 %v3818, 30
        %v3820 = vsub.s32 %v3816, %v3819
        %vm3821 = vcmp.lt.s32.totalorder %v3820, 0
        %v3822 = vsub.s32 0, %v3820
        %v3823 = vsel %vm3821, %v3822, %v3820
        %v3824 = vclz %v3823
        %v3825 = vsub.s32 %v3824, 2
        %vm3826 = vcmp.gt.s32.totalorder 0, %v3825
        %v3827 = vsel %vm3826, 0, %v3825
        %v3828 = vsub.s32 32, %v3827
        %v3829 = vshll.u32 %v3820, %v3827
        %v3830 = vshrl.u32 %v3812, %v3828
        %v3831 = vor.u32 %v3829, %v3830
        %v3832 = vsub.s32 4294967266, %v3827
        %v3833 = vadd.s32 %v3832, 127
        %v3834 = vshll.u32 %v3833, 23
        %v3835 = vor.u32 4788187, %v3834
        %v3836 = vand.u32 2147483647, %v3835
        %v3838 = vcvt.s32.f32 %v3831
        %v3839 = vmul.f32 %v3838, %v3836
        %v3840 = vxor.u32 %v3839, 2147483648
        %v3841 = vsel %vm3758, %v3840, %v3839
        %v3842 = vsub.s32 4, %v3818
        %v3843 = vsel %vm3758, %v3842, %v3818
        %v3844 = vsel %vm3757, %v634, %v3841
        %v3845 = vsel %vm3757, 0, %v3843
        %v3846 = vcosq.f32.pop %v3844
        %v3847 = vsinq.f32.pop %v3844
        %vm3848 = vweird.f32 %v634
        %v3849 = vadd.s32 %v3845, 3
        %v3850 = vand.u32 %v3849, 3
        %vm3851 = vcmp.lt.s32.totalorder %v3850, 2
        %vm3852 = vcmp.eq.s32.totalorder %v3850, 0
        %v3853 = vxor.u32 %v3847, 2147483648
        %v3854 = vsel %vm3852, %v3846, %v3853
        %vm3855 = vcmp.eq.s32.totalorder %v3850, 2
        %v3856 = vxor.u32 %v3846, 2147483648
        %v3857 = vsel %vm3855, %v3856, %v3847
        %v3858 = vsel %vm3851, %v3854, %v3857
        %v3859 = vsel %vm3848, nan, %v3858
        %v3860 = vand.u32 2147483647, %v635
        %vm3861 = vcmp.le.f32.partialorder %v3860, 0.7853982
        %vm3862 = vcmp.lt.s32.totalorder %v635, 0
        %v3863 = vand.u32 %v635, 2139095040
        %v3864 = vshrl.u32 %v3863, 23
        %v3865 = vsub.s32 %v3864, 127
        %v3866 = vand.u32 2147483647, %v635
        %v3867 = vand.u32 %v3866, 8388607
        %v3868 = vor.u32 %v3867, 8388608
        %v3869 = vsub.s32 0, %v3868
        %v3870 = vadd.s32 %v3865, 1
        %vm3871 = vcmp.gt.s32.totalorder %v3870, 0
        %v3872 = vsel %vm3871, %v3870, 0
        %v3873 = vshrl.u32 %v3872, 5
        %v3874 = vand.u32 %v3872, 31
        %v3875 = vsub.s32 32, %v3874
        %v3876 = vshrl.u32 683565275, %v3875
        %v3877 = vshll.u32 683565275, %v3874
        %v3878 = vshrl.u32 2475754826, %v3875
        %v3879 = vor.u32 %v3877, %v3878
        %v3880 = vshll.u32 2475754826, %v3874
        %v3881 = vshrl.u32 2131351028, %v3875
        %v3882 = vor.u32 %v3880, %v3881
        %v3883 = vshll.u32 2131351028, %v3874
        %v3884 = vshrl.u32 2102212464, %v3875
        %v3885 = vor.u32 %v3883, %v3884
        %v3886 = vshll.u32 2102212464, %v3874
        %v3887 = vshrl.u32 920167782, %v3875
        %v3888 = vor.u32 %v3886, %v3887
        %v3889 = vshll.u32 920167782, %v3874
        %v3890 = vshrl.u32 1326507024, %v3875
        %v3891 = vor.u32 %v3889, %v3890
        %vm3892 = vcmp.lt.s32.totalorder %v3873, 1
        %vm3893 = vcmp.lt.s32.totalorder %v3873, 2
        %vm3894 = vcmp.lt.s32.totalorder %v3873, 3
        %vm3895 = vcmp.lt.s32.totalorder %v3873, 4
        %v3896 = vsel %vm3892, %v3876, %v3879
        %v3897 = vsel %vm3895, %v3885, 2102212464
        %v3898 = vsel %vm3894, %v3882, %v3897
        %v3899 = vsel %vm3893, %v3896, %v3898
        %v3900 = vsel %vm3892, %v3879, %v3882
        %v3901 = vsel %vm3895, %v3888, 920167782
        %v3902 = vsel %vm3894, %v3885, %v3901
        %v3903 = vsel %vm3893, %v3900, %v3902
        %v3904 = vsel %vm3892, %v3882, %v3885
        %v3905 = vsel %vm3895, %v3891, 1326507024
        %v3906 = vsel %vm3894, %v3888, %v3905
        %v3907 = vsel %vm3893, %v3904, %v3906
        %v3908 = vshll.u32 %v3868, 8
        %v3909 = vmul.u32.u64.compose %v3908, %v3907
        %v3910 = vextract.low.u32 %v3909
        %v3911 = vextract.high.u32 %v3909
        %v3912 = vmul.u32.u64.compose %v3908, %v3903
        %v3913 = vextract.low.u32 %v3912
        %v3914 = vextract.high.u32 %v3912
        %v3915 = vmul.u32 %v3908, %v3899
        %v3916 = vadd.s32 %v3911, %v3913
        %vm3917 = vc.u32 %v3911, %v3913
        %v3918 = vadd.s32 %v3914, 1
        %v3919 = vsel %vm3917, %v3918, %v3914
        %v3920 = vadd.s32 %v3915, %v3919
        %v3921 = vadd.s32 %v3920, 536870912
        %v3922 = vshrl.u32 %v3921, 30
        %v3923 = vshll.u32 %v3922, 30
        %v3924 = vsub.s32 %v3920, %v3923
        %vm3925 = vcmp.lt.s32.totalorder %v3924, 0
        %v3926 = vsub.s32 0, %v3924
        %v3927 = vsel %vm3925, %v3926, %v3924
        %v3928 = vclz %v3927
        %v3929 = vsub.s32 %v3928, 2
        %vm3930 = vcmp.gt.s32.totalorder 0, %v3929
        %v3931 = vsel %vm3930, 0, %v3929
        %v3932 = vsub.s32 32, %v3931
        %v3933 = vshll.u32 %v3924, %v3931
        %v3934 = vshrl.u32 %v3916, %v3932
        %v3935 = vor.u32 %v3933, %v3934
        %v3936 = vsub.s32 4294967266, %v3931
        %v3937 = vadd.s32 %v3936, 127
        %v3938 = vshll.u32 %v3937, 23
        %v3939 = vor.u32 4788187, %v3938
        %v3940 = vand.u32 2147483647, %v3939
        %v3942 = vcvt.s32.f32 %v3935
        %v3943 = vmul.f32 %v3942, %v3940
        %v3944 = vxor.u32 %v3943, 2147483648
        %v3945 = vsel %vm3862, %v3944, %v3943
        %v3946 = vsub.s32 4, %v3922
        %v3947 = vsel %vm3862, %v3946, %v3922
        %v3948 = vsel %vm3861, %v635, %v3945
        %v3949 = vsel %vm3861, 0, %v3947
        %v3950 = vcosq.f32.pop %v3948
        %v3951 = vsinq.f32.pop %v3948
        %vm3952 = vweird.f32 %v635
        %v3953 = vadd.s32 %v3949, 3
        %v3954 = vand.u32 %v3953, 3
        %vm3955 = vcmp.lt.s32.totalorder %v3954, 2
        %vm3956 = vcmp.eq.s32.totalorder %v3954, 0
        %v3957 = vxor.u32 %v3951, 2147483648
        %v3958 = vsel %vm3956, %v3950, %v3957
        %vm3959 = vcmp.eq.s32.totalorder %v3954, 2
        %v3960 = vxor.u32 %v3950, 2147483648
        %v3961 = vsel %vm3959, %v3960, %v3951
        %v3962 = vsel %vm3955, %v3958, %v3961
        %v3963 = vsel %vm3952, nan, %v3962
        %3964 = vst [vmem:[%s161] sm:$0xff] %v739
        %3965 = vst [vmem:[%s161 + $0x8] sm:$0xff] %v843
        %3966 = vst [vmem:[%s161 + $0x10] sm:$0xff] %v947
        %3967 = vst [vmem:[%s161 + $0x18] sm:$0xff] %v1051
        %3968 = vst [vmem:[%s161 + $0x20] sm:$0xff] %v1155
        %3969 = vst [vmem:[%s161 + $0x28] sm:$0xff] %v1259
        %3970 = vst [vmem:[%s161 + $0x30] sm:$0xff] %v1363
        %3971 = vst [vmem:[%s161 + $0x38] sm:$0xff] %v1467
        %3972 = vst [vmem:[%s161 + $0x40] sm:$0xff] %v1571
        %3973 = vst [vmem:[%s161 + $0x48] sm:$0xff] %v1675
        %3974 = vst [vmem:[%s161 + $0x50] sm:$0xff] %v1779
        %3975 = vst [vmem:[%s161 + $0x58] sm:$0xff] %v1883
        %3976 = vst [vmem:[%s161 + $0x60] sm:$0xff] %v1987
        %3977 = vst [vmem:[%s161 + $0x68] sm:$0xff] %v2091
        %3978 = vst [vmem:[%s161 + $0x70] sm:$0xff] %v2195
        %3979 = vst [vmem:[%s161 + $0x78] sm:$0xff] %v2299
        %3980 = vst [vmem:[%s161 + $0x80] sm:$0xff] %v2403
        %3981 = vst [vmem:[%s161 + $0x88] sm:$0xff] %v2507
        %3982 = vst [vmem:[%s161 + $0x90] sm:$0xff] %v2611
        %3983 = vst [vmem:[%s161 + $0x98] sm:$0xff] %v2715
        %3984 = vst [vmem:[%s161 + $0xa0] sm:$0xff] %v2819
        %3985 = vst [vmem:[%s161 + $0xa8] sm:$0xff] %v2923
        %3986 = vst [vmem:[%s161 + $0xb0] sm:$0xff] %v3027
        %3987 = vst [vmem:[%s161 + $0xb8] sm:$0xff] %v3131
        %3988 = vst [vmem:[%s161 + $0xc0] sm:$0xff] %v3235
        %3989 = vst [vmem:[%s161 + $0xc8] sm:$0xff] %v3339
        %3990 = vst [vmem:[%s161 + $0xd0] sm:$0xff] %v3443
        %3991 = vst [vmem:[%s161 + $0xd8] sm:$0xff] %v3547
        %3992 = vst [vmem:[%s161 + $0xe0] sm:$0xff] %v3651
        %3993 = vst [vmem:[%s161 + $0xe8] sm:$0xff] %v3755
        %3994 = vst [vmem:[%s161 + $0xf0] sm:$0xff] %v3859
        %3995 = vst [vmem:[%s161 + $0xf8] sm:$0xff] %v3963
        %s3996 = sand.u32 %s87, 1
        %s3997 = scalar_lea.sflag [#allocation3], %s3996
        %s3998 = sand.u32 %s87, 1
        %s3999 = smul.addr %s3998, 256
        %s4000 = scalar_lea.vmem [#allocation2], %s3999
        // Predicated region
        $region29: #{tpu_custom_call.1} parent=27 // pred_check
          %p4001 = pneg %p97
        $region30: #{tpu_custom_call.1} parent=27 // pred_check_branch
          %4003 = sbr.rel (%p4001) target = $region32
        $region31: #{tpu_custom_call.1} parent=27 // pred_region
          %s4004 = smul.u32 32, %s21
          %s4006 = ssub.s32 4096, 4096
          %4007 = vsyncadd %s3997, %s4006
          %s4008 = smul.addr %s20, 32
          %s4009 = sadd.s32 %s4004, %s4008
          %s4010 = smul.addr %s4009, 128
          %s4011 = scalar_lea.hbm %s2, %s4010
          %s4012 = sshll.u32 %s4000, 4
          %s4013 = int_to_ptr.vmem [resolvable:$true] %s4012
          %4018 = dma.vmem_to_hbm [thread:$0]  %s4013, 4096, %s4011, %s3997, 128, 128, 8
        $region32: #{tpu_custom_call.1} parent=27 // pred_fallthru
          _
      $region28: #{tpu_custom_call.1} parent=5 // pred_fallthru
        _
      %p4019 = scmp.le.s32.totalorder 2, %s11
      // Predicated region
      $region33: #{tpu_custom_call.1} parent=5 // pred_check
        %p4020 = pneg %p4019
      $region34: #{tpu_custom_call.1} parent=5 // pred_check_branch
        %4022 = sbr.rel (%p4020) target = $region36
      $region35: #{tpu_custom_call.1} parent=5 // pred_region
        %s4023 = ssub.s32 %s11, 2
        // Predicated region
        $region37: #{tpu_custom_call.1} parent=35 // pred_check
          %p4024 = pneg %p103
        $region38: #{tpu_custom_call.1} parent=35 // pred_check_branch
          %4026 = sbr.rel (%p4024) target = $region40
        $region39: #{tpu_custom_call.1} parent=35 // pred_region
          %s4027 = sand.u32 %s88, 1
          %s4028 = scalar_lea.sflag [#allocation3], %s4027
          %s4029 = sand.u32 %s88, 1
          %s4030 = smul.addr %s4029, 256
          %s4031 = scalar_lea.vmem [#allocation2], %s4030
          %4032 = dma.done %s4028, 4096
        $region40: #{tpu_custom_call.1} parent=35 // pred_fallthru
          _
      $region36: #{tpu_custom_call.1} parent=5 // pred_fallthru
        _
    $region6: #{tpu_custom_call.1} parent=1 // loop_footer
      %s15 = sadd.s32 1, %s11
    $region7: #{tpu_custom_call.1} parent=1 // loop_footer_branch
      %10 = sbr.rel target = $region3
    $region8: #{tpu_custom_call.1} parent=1 // loop_exit
      _
    %4033 = vsyncpa [#allocation3], 1
    %s4034 = scalar_lea.sflag [#allocation3], 1
    %4035 = vsyncpa %s4034, 1

</llo_original>
